<compile_context>
chip_gen: v7x
topology: tpu7x:2x2x1
jax: 0.10.0
libtpu: 0.0.40
codegen_flags: <defaults>
</compile_context>

<pallas_src>
import jax
import jax.numpy as jnp
from jax.experimental import pallas as pl
from jax.experimental.pallas import tpu as pltpu

NUM_CLASSES = 7
EMBED = 768
HIDDEN = 512
FC1 = 128
FC2 = 64
PAD = 128                          # lane-dense padded class dimension
BN_EPS = 1e-5
ALPHA = 0.5                        # fusion alpha
FUSION_METHOD = "self_attention"   # fusion branch exercised here

_VMEM = pl.BlockSpec(memory_space=pltpu.MemorySpace.VMEM)


# ----------------------------------------------------------------------------
# In-kernel helpers
# ----------------------------------------------------------------------------
def _select_idx(x):
    """select_fuzzy_type as a traced int32 (global scalar statistics, in-kernel).

    0=sigmoid, 1=tanh, 2=linear, 3=gaussian, 4=piecewise
    """
    n = x.shape[0] * x.shape[1]
    mean = jnp.mean(x)
    d = x - mean
    var = jnp.sum(d * d) / jnp.float32(n - 1)       # unbiased, torch.std semantics
    std = jnp.sqrt(var)
    skew = jnp.mean(d * d * d) / (std * std * std + 1e-5)
    mn = jnp.min(x)
    mx = jnp.max(x)
    cond1 = (skew > -0.5) & (skew < 0.5) & (mn >= 0.0) & (mn < mx) & (mx <= 1.0)
    cond2 = (skew < -0.5) | (skew > 0.5)
    cond3 = (mean > 0.7) | (mx > 1.5)
    inner = jnp.where(std < 0.1, 2, 3)
    return jnp.where(cond1, inner,
                     jnp.where(cond2, 1,
                               jnp.where(cond3, 0, 4))).astype(jnp.int32)


def _membership(x, idx, out_ref):
    """Row-standardize x, then apply ONLY the membership fn selected by idx."""
    n = x.shape[1]
    mean = jnp.mean(x, axis=1, keepdims=True)
    d = x - mean
    var = jnp.sum(d * d, axis=1, keepdims=True) / jnp.float32(n - 1)  # torch.std
    z = d / (jnp.sqrt(var) + 1e-5)

    @pl.when(idx == 0)
    def _():  # sigmoid
        out_ref[...] = 1.0 / (1.0 + jnp.exp(-jnp.clip(z, -4.0, 4.0)))

    @pl.when(idx == 1)
    def _():  # tanh
        out_ref[...] = jnp.tanh(jnp.clip(z, -2.0, 2.0))

    @pl.when(idx == 2)
    def _():  # linear: softplus then clamp(0,1); arg clip keeps exp finite only
        out_ref[...] = jnp.clip(jnp.log(1.0 + jnp.exp(jnp.clip(z, -30.0, 30.0))),
                                0.0, 1.0)

    @pl.when(idx == 3)
    def _():  # gaussian
        zc = jnp.clip(z, 0.0, 1.0)
        out_ref[...] = jnp.exp(-jnp.square(zc - 0.5) / (2.0 * 0.15 ** 2))

    @pl.when(idx == 4)
    def _():  # piecewise
        zc = jnp.clip(z, 0.0, 1.0)
        out_ref[...] = jnp.where(zc < 0.3, 0.2 * zc,
                                 jnp.where(zc < 0.7, 0.5 + 0.5 * zc, 0.9))


# ----------------------------------------------------------------------------
# Fused kernel: projections + fuzzy select/membership + fusion + classifier
# ----------------------------------------------------------------------------
def _mmser_kernel(text_ref, audio_ref,
                  wt_ref, st_ref, tt_ref,
                  wa_ref, sa_ref, ta_ref,
                  watt_ref, batt_ref,
                  w1_ref, s1_ref, t1_ref,
                  w2_ref, b2_ref,
                  w3_ref, b3_ref,
                  logits_ref, probs_ref,
                  tfuz_ref, afuz_ref):
    f32 = jnp.float32
    bf16 = jnp.bfloat16

    # projection heads: Linear (bias folded into BN shift) -> BN(eval) -> ReLU
    tproj = jnp.maximum(
        jnp.dot(text_ref[...].astype(bf16), wt_ref[...], preferred_element_type=f32)
        * st_ref[...] + tt_ref[...], 0.0)
    aproj = jnp.maximum(
        jnp.dot(audio_ref[...].astype(bf16), wa_ref[...], preferred_element_type=f32)
        * sa_ref[...] + ta_ref[...], 0.0)

    # select_fuzzy_type (in-kernel scalar stats) + branched fuzzy_membership
    _membership(tproj, _select_idx(tproj), tfuz_ref)
    _membership(aproj, _select_idx(aproj), afuz_ref)

    # fuzzy_fusion('self_attention'): seq_len==1 => softmax(qk^T)==1 identically,
    # so MHA output == out_proj(v_proj(x)); both linears pre-folded offline into
    # (watt, batt).  mean over a length-1 sequence is the identity.
    weighted = ALPHA * afuz_ref[...] + (1.0 - ALPHA) * tfuz_ref[...]
    attn = (jnp.dot(weighted.astype(bf16), watt_ref[...], preferred_element_type=f32)
            + batt_ref[...])

    # classifier: Linear->BN(eval)->ReLU->[Drop]->Linear->ReLU->[Drop]->Linear
    h1 = jnp.maximum(
        jnp.dot(attn.astype(bf16), w1_ref[...], preferred_element_type=f32)
        * s1_ref[...] + t1_ref[...], 0.0)
    h2 = jnp.maximum(
        jnp.dot(h1.astype(bf16), w2_ref[...], preferred_element_type=f32)
        + b2_ref[...], 0.0)
    logits = (jnp.dot(h2.astype(bf16), w3_ref[...], preferred_element_type=f32)
              + b3_ref[...])                       # [B, 128] lane-dense (7 real cols)
    logits_ref[...] = logits

    # Softmax(dim=1) over the first NUM_CLASSES lanes of the padded slab
    col = jax.lax.broadcasted_iota(jnp.int32, logits.shape, 1)
    valid = col < NUM_CLASSES
    m = jnp.max(jnp.where(valid, logits, -1e30), axis=1, keepdims=True)
    e = jnp.where(valid, jnp.exp(logits - m), 0.0)
    probs_ref[...] = e / jnp.sum(e, axis=1, keepdims=True)


def forward(params, text_embed, audio_embed):
    B = text_embed.shape[0]
    logits_pad, probs_pad = pl.pallas_call(
        _mmser_kernel,
        out_shape=(jax.ShapeDtypeStruct((B, PAD), jnp.float32),
                   jax.ShapeDtypeStruct((B, PAD), jnp.float32)),
        in_specs=[_VMEM] * 17,
        out_specs=(_VMEM, _VMEM),
        scratch_shapes=[pltpu.VMEM((B, HIDDEN), jnp.float32),   # text membership
                        pltpu.VMEM((B, HIDDEN), jnp.float32)],  # audio membership
    )(text_embed, audio_embed,
      params["wt"], params["st"], params["tt"],
      params["wa"], params["sa"], params["ta"],
      params["watt"], params["batt"],
      params["w1"], params["s1"], params["t1"],
      params["w2"], params["b2"],
      params["w3"], params["b3"])
    return logits_pad[:, :NUM_CLASSES], probs_pad[:, :NUM_CLASSES]


# ----------------------------------------------------------------------------
# Deterministic parameter construction (synthetic init; folds done offline)
# ----------------------------------------------------------------------------
def init_params(key):
    ks = iter(jax.random.split(key, 32))

    def linear(fan_in, fan_out):
        w = jax.random.normal(next(ks), (fan_out, fan_in), jnp.float32) / jnp.sqrt(
            jnp.float32(fan_in))
        b = 0.01 * jax.random.normal(next(ks), (fan_out,), jnp.float32)
        return w, b

    def bn_fold(n):
        gamma = 1.0 + 0.1 * jax.random.normal(next(ks), (n,), jnp.float32)
        beta = 0.1 * jax.random.normal(next(ks), (n,), jnp.float32)
        rmean = 0.05 * jax.random.normal(next(ks), (n,), jnp.float32)
        rvar = 0.9 + 0.2 * jax.random.uniform(next(ks), (n,), jnp.float32)
        scale = gamma / jnp.sqrt(rvar + BN_EPS)
        shift = beta - rmean * scale
        return scale, shift

    p = {}
    # text / audio projections: Linear(768,512)+BN(512); bias folded into shift
    for tag in ("t", "a"):
        w, b = linear(EMBED, HIDDEN)
        s, t = bn_fold(HIDDEN)
        p[f"w{tag}"] = w.T.astype(jnp.bfloat16)                  # [768,512] bf16
        p[f"s{tag}"] = s.reshape(1, HIDDEN)                      # f32
        p[f"t{tag}"] = (b * s + t).reshape(1, HIDDEN)            # (b*s + t), f32

    # MultiheadAttention(512, 4 heads), q=k=v, seq_len==1: out == out_proj(v_proj(x))
    in_proj_w = jax.random.normal(next(ks), (3 * HIDDEN, HIDDEN), jnp.float32) / jnp.sqrt(
        jnp.float32(HIDDEN))
    in_proj_b = 0.01 * jax.random.normal(next(ks), (3 * HIDDEN,), jnp.float32)
    wv = in_proj_w[2 * HIDDEN:3 * HIDDEN]          # V projection slice [512,512]
    bv = in_proj_b[2 * HIDDEN:3 * HIDDEN]
    wo, bo = linear(HIDDEN, HIDDEN)
    p["watt"] = (wv.T @ wo.T).astype(jnp.bfloat16)               # Wv^T · Wo^T
    p["batt"] = bv.reshape(1, HIDDEN) @ wo.T + bo.reshape(1, HIDDEN)

    # classifier: Linear(512,128)+BN(128), Linear(128,64), Linear(64,7 -> pad 128)
    w1, b1 = linear(HIDDEN, FC1)
    s1, t1 = bn_fold(FC1)
    p["w1"] = w1.T.astype(jnp.bfloat16)
    p["s1"] = s1.reshape(1, FC1)
    p["t1"] = (b1 * s1 + t1).reshape(1, FC1)

    w2, b2 = linear(FC1, FC2)
    p["w2"] = w2.T.astype(jnp.bfloat16)
    p["b2"] = b2.reshape(1, FC2)

    w3, b3 = linear(FC2, NUM_CLASSES)
    w3p = jnp.zeros((FC2, PAD), jnp.float32).at[:, :NUM_CLASSES].set(w3.T)
    b3p = jnp.zeros((1, PAD), jnp.float32).at[:, :NUM_CLASSES].set(
        b3.reshape(1, NUM_CLASSES))
    p["w3"] = w3p.astype(jnp.bfloat16)
    p["b3"] = b3p
    return p


if __name__ == "__main__":
    B = 8
    root = jax.random.PRNGKey(0)
    k_text, k_audio, k_params = jax.random.split(root, 3)

    text_embed = jax.random.normal(k_text, (B, EMBED), jnp.float32)
    audio_embed = jax.random.normal(k_audio, (B, EMBED), jnp.float32)
    params = init_params(k_params)

    fwd = jax.jit(forward)
    logits, probs = fwd(params, text_embed, audio_embed)
    jax.block_until_ready((logits, probs))

    assert logits.shape == (B, NUM_CLASSES)
    assert probs.shape == (B, NUM_CLASSES)
    assert bool(jnp.all(jnp.isfinite(logits)))
    assert bool(jnp.all(probs >= 0.0))
    assert bool(jnp.allclose(jnp.sum(probs, axis=1), 1.0, atol=1e-5))
    print("KERNEL_OK")
</pallas_src>

<mosaic_0001>
module attributes {stable_mosaic.version = 11 : i64} {
  func.func @_mmser_kernel(%arg0: memref<8x768xf32, #tpu.memory_space<vmem>>, %arg1: memref<8x768xf32, #tpu.memory_space<vmem>>, %arg2: memref<768x512xbf16, #tpu.memory_space<vmem>>, %arg3: memref<1x512xf32, #tpu.memory_space<vmem>>, %arg4: memref<1x512xf32, #tpu.memory_space<vmem>>, %arg5: memref<768x512xbf16, #tpu.memory_space<vmem>>, %arg6: memref<1x512xf32, #tpu.memory_space<vmem>>, %arg7: memref<1x512xf32, #tpu.memory_space<vmem>>, %arg8: memref<512x512xbf16, #tpu.memory_space<vmem>>, %arg9: memref<1x512xf32, #tpu.memory_space<vmem>>, %arg10: memref<512x128xbf16, #tpu.memory_space<vmem>>, %arg11: memref<1x128xf32, #tpu.memory_space<vmem>>, %arg12: memref<1x128xf32, #tpu.memory_space<vmem>>, %arg13: memref<128x64xbf16, #tpu.memory_space<vmem>>, %arg14: memref<1x64xf32, #tpu.memory_space<vmem>>, %arg15: memref<64x128xbf16, #tpu.memory_space<vmem>>, %arg16: memref<1x128xf32, #tpu.memory_space<vmem>>, %arg17: memref<8x128xf32, #tpu.memory_space<vmem>>, %arg18: memref<8x128xf32, #tpu.memory_space<vmem>>, %arg19: memref<8x512xf32, #tpu.memory_space<vmem>>, %arg20: memref<8x512xf32, #tpu.memory_space<vmem>>) attributes {dimension_semantics = [], scalar_prefetch = 0 : i64, scratch_operands = 2 : i64, tpu.core_type = #tpu.core_type<tc>} {
    %c0 = arith.constant 0 : index
    %c0_0 = arith.constant 0 : index
    %0 = vector.load %arg0[%c0, %c0_0] : memref<8x768xf32, #tpu.memory_space<vmem>>, vector<8x768xf32>
    %1 = arith.truncf %0 : vector<8x768xf32> to vector<8x768xbf16>
    %c0_1 = arith.constant 0 : index
    %c0_2 = arith.constant 0 : index
    %2 = vector.load %arg2[%c0_1, %c0_2] : memref<768x512xbf16, #tpu.memory_space<vmem>>, vector<768x512xbf16>
    %cst = arith.constant dense<0.000000e+00> : vector<8x512xf32>
    %3 = tpu.matmul %1, %2, %cst {dimension_numbers = #tpu.dot_dimension_numbers<[1], [0], [0], [1], [0, 0, 1, 1], [], []>} : vector<8x768xbf16>, vector<768x512xbf16>, vector<8x512xf32> -> vector<8x512xf32>
    %c0_3 = arith.constant 0 : index
    %c0_4 = arith.constant 0 : index
    %4 = vector.load %arg3[%c0_3, %c0_4] : memref<1x512xf32, #tpu.memory_space<vmem>>, vector<1x512xf32>
    %5 = vector.broadcast %4 : vector<1x512xf32> to vector<8x512xf32>
    %6 = arith.mulf %3, %5 : vector<8x512xf32>
    %c0_5 = arith.constant 0 : index
    %c0_6 = arith.constant 0 : index
    %7 = vector.load %arg4[%c0_5, %c0_6] : memref<1x512xf32, #tpu.memory_space<vmem>>, vector<1x512xf32>
    %8 = vector.broadcast %7 : vector<1x512xf32> to vector<8x512xf32>
    %9 = arith.addf %6, %8 : vector<8x512xf32>
    %cst_7 = arith.constant 0.000000e+00 : f32
    %10 = vector.broadcast %cst_7 : f32 to vector<8x512xf32>
    %11 = arith.maximumf %9, %10 : vector<8x512xf32>
    %c0_8 = arith.constant 0 : index
    %c0_9 = arith.constant 0 : index
    %12 = vector.load %arg1[%c0_8, %c0_9] : memref<8x768xf32, #tpu.memory_space<vmem>>, vector<8x768xf32>
    %13 = arith.truncf %12 : vector<8x768xf32> to vector<8x768xbf16>
    %c0_10 = arith.constant 0 : index
    %c0_11 = arith.constant 0 : index
    %14 = vector.load %arg5[%c0_10, %c0_11] : memref<768x512xbf16, #tpu.memory_space<vmem>>, vector<768x512xbf16>
    %cst_12 = arith.constant dense<0.000000e+00> : vector<8x512xf32>
    %15 = tpu.matmul %13, %14, %cst_12 {dimension_numbers = #tpu.dot_dimension_numbers<[1], [0], [0], [1], [0, 0, 1, 1], [], []>} : vector<8x768xbf16>, vector<768x512xbf16>, vector<8x512xf32> -> vector<8x512xf32>
    %c0_13 = arith.constant 0 : index
    %c0_14 = arith.constant 0 : index
    %16 = vector.load %arg6[%c0_13, %c0_14] : memref<1x512xf32, #tpu.memory_space<vmem>>, vector<1x512xf32>
    %17 = vector.broadcast %16 : vector<1x512xf32> to vector<8x512xf32>
    %18 = arith.mulf %15, %17 : vector<8x512xf32>
    %c0_15 = arith.constant 0 : index
    %c0_16 = arith.constant 0 : index
    %19 = vector.load %arg7[%c0_15, %c0_16] : memref<1x512xf32, #tpu.memory_space<vmem>>, vector<1x512xf32>
    %20 = vector.broadcast %19 : vector<1x512xf32> to vector<8x512xf32>
    %21 = arith.addf %18, %20 : vector<8x512xf32>
    %cst_17 = arith.constant 0.000000e+00 : f32
    %22 = vector.broadcast %cst_17 : f32 to vector<8x512xf32>
    %23 = arith.maximumf %21, %22 : vector<8x512xf32>
    %24 = vector.shape_cast %11 : vector<8x512xf32> to vector<1x8x512xf32>
    %cst_18 = arith.constant dense<0.000000e+00> : vector<1xf32>
    %25 = vector.multi_reduction <add>, %24, %cst_18 [1, 2] : vector<1x8x512xf32> to vector<1xf32>
    %26 = vector.shape_cast %25 : vector<1xf32> to vector<1x1x1xf32>
    %27 = vector.extract %26[0, 0, 0] : f32 from vector<1x1x1xf32>
    %cst_19 = arith.constant 4.096000e+03 : f32
    %28 = arith.divf %27, %cst_19 : f32
    %29 = vector.broadcast %28 : f32 to vector<8x512xf32>
    %30 = arith.subf %11, %29 : vector<8x512xf32>
    %31 = arith.mulf %30, %30 : vector<8x512xf32>
    %32 = vector.shape_cast %31 : vector<8x512xf32> to vector<1x8x512xf32>
    %cst_20 = arith.constant dense<0.000000e+00> : vector<1xf32>
    %33 = vector.multi_reduction <add>, %32, %cst_20 [1, 2] : vector<1x8x512xf32> to vector<1xf32>
    %34 = vector.shape_cast %33 : vector<1xf32> to vector<1x1x1xf32>
    %35 = vector.extract %34[0, 0, 0] : f32 from vector<1x1x1xf32>
    %cst_21 = arith.constant 4.095000e+03 : f32
    %36 = arith.divf %35, %cst_21 : f32
    %37 = math.sqrt %36 : f32
    %38 = arith.mulf %30, %30 : vector<8x512xf32>
    %39 = arith.mulf %38, %30 : vector<8x512xf32>
    %40 = vector.shape_cast %39 : vector<8x512xf32> to vector<1x8x512xf32>
    %cst_22 = arith.constant dense<0.000000e+00> : vector<1xf32>
    %41 = vector.multi_reduction <add>, %40, %cst_22 [1, 2] : vector<1x8x512xf32> to vector<1xf32>
    %42 = vector.shape_cast %41 : vector<1xf32> to vector<1x1x1xf32>
    %43 = vector.extract %42[0, 0, 0] : f32 from vector<1x1x1xf32>
    %cst_23 = arith.constant 4.096000e+03 : f32
    %44 = arith.divf %43, %cst_23 : f32
    %45 = arith.mulf %37, %37 : f32
    %46 = arith.mulf %45, %37 : f32
    %cst_24 = arith.constant 9.99999974E-6 : f32
    %47 = arith.addf %46, %cst_24 : f32
    %48 = arith.divf %44, %47 : f32
    %49 = vector.shape_cast %11 : vector<8x512xf32> to vector<1x8x512xf32>
    %cst_25 = arith.constant dense<0x7F800000> : vector<1xf32>
    %50 = vector.multi_reduction <minimumf>, %49, %cst_25 [1, 2] : vector<1x8x512xf32> to vector<1xf32>
    %51 = vector.shape_cast %50 : vector<1xf32> to vector<1x1x1xf32>
    %52 = vector.extract %51[0, 0, 0] : f32 from vector<1x1x1xf32>
    %53 = vector.shape_cast %11 : vector<8x512xf32> to vector<1x8x512xf32>
    %cst_26 = arith.constant dense<0xFF800000> : vector<1xf32>
    %54 = vector.multi_reduction <maximumf>, %53, %cst_26 [1, 2] : vector<1x8x512xf32> to vector<1xf32>
    %55 = vector.shape_cast %54 : vector<1xf32> to vector<1x1x1xf32>
    %56 = vector.extract %55[0, 0, 0] : f32 from vector<1x1x1xf32>
    %cst_27 = arith.constant -5.000000e-01 : f32
    %57 = arith.cmpf ogt, %48, %cst_27 : f32
    %cst_28 = arith.constant 5.000000e-01 : f32
    %58 = arith.cmpf olt, %48, %cst_28 : f32
    %59 = arith.andi %57, %58 : i1
    %cst_29 = arith.constant 0.000000e+00 : f32
    %60 = arith.cmpf oge, %52, %cst_29 : f32
    %61 = arith.andi %59, %60 : i1
    %62 = arith.cmpf olt, %52, %56 : f32
    %63 = arith.andi %61, %62 : i1
    %cst_30 = arith.constant 1.000000e+00 : f32
    %64 = arith.cmpf ole, %56, %cst_30 : f32
    %65 = arith.andi %63, %64 : i1
    %cst_31 = arith.constant -5.000000e-01 : f32
    %66 = arith.cmpf olt, %48, %cst_31 : f32
    %cst_32 = arith.constant 5.000000e-01 : f32
    %67 = arith.cmpf ogt, %48, %cst_32 : f32
    %68 = arith.ori %66, %67 : i1
    %cst_33 = arith.constant 0.699999988 : f32
    %69 = arith.cmpf ogt, %28, %cst_33 : f32
    %cst_34 = arith.constant 1.500000e+00 : f32
    %70 = arith.cmpf ogt, %56, %cst_34 : f32
    %71 = arith.ori %69, %70 : i1
    %cst_35 = arith.constant 1.000000e-01 : f32
    %72 = arith.cmpf olt, %37, %cst_35 : f32
    %c2_i32 = arith.constant 2 : i32
    %c3_i32 = arith.constant 3 : i32
    %73 = arith.select %72, %c2_i32, %c3_i32 : i32
    %c0_i32 = arith.constant 0 : i32
    %c4_i32 = arith.constant 4 : i32
    %74 = arith.select %71, %c0_i32, %c4_i32 : i32
    %c1_i32 = arith.constant 1 : i32
    %75 = arith.select %68, %c1_i32, %74 : i32
    %76 = arith.select %65, %73, %75 : i32
    %cst_36 = arith.constant dense<0.000000e+00> : vector<8xf32>
    %77 = vector.multi_reduction <add>, %11, %cst_36 [1] : vector<8x512xf32> to vector<8xf32>
    %78 = vector.shape_cast %77 : vector<8xf32> to vector<8x1xf32>
    %cst_37 = arith.constant 5.120000e+02 : f32
    %79 = vector.broadcast %cst_37 : f32 to vector<8x1xf32>
    %80 = arith.divf %78, %79 : vector<8x1xf32>
    %81 = vector.broadcast %80 : vector<8x1xf32> to vector<8x512xf32>
    %82 = arith.subf %11, %81 : vector<8x512xf32>
    %83 = arith.mulf %82, %82 : vector<8x512xf32>
    %cst_38 = arith.constant dense<0.000000e+00> : vector<8xf32>
    %84 = vector.multi_reduction <add>, %83, %cst_38 [1] : vector<8x512xf32> to vector<8xf32>
    %85 = vector.shape_cast %84 : vector<8xf32> to vector<8x1xf32>
    %cst_39 = arith.constant 5.110000e+02 : f32
    %86 = vector.broadcast %cst_39 : f32 to vector<8x1xf32>
    %87 = arith.divf %85, %86 : vector<8x1xf32>
    %88 = math.sqrt %87 : vector<8x1xf32>
    %cst_40 = arith.constant 9.99999974E-6 : f32
    %89 = vector.broadcast %cst_40 : f32 to vector<8x1xf32>
    %90 = arith.addf %88, %89 : vector<8x1xf32>
    %91 = vector.broadcast %90 : vector<8x1xf32> to vector<8x512xf32>
    %92 = arith.divf %82, %91 : vector<8x512xf32>
    %c0_i32_41 = arith.constant 0 : i32
    %93 = arith.cmpi eq, %76, %c0_i32_41 : i32
    %94 = arith.extui %93 : i1 to i32
    %c0_i32_42 = arith.constant 0 : i32
    %95 = arith.cmpi ne, %94, %c0_i32_42 : i32
    scf.if %95 {
      %cst_127 = arith.constant -4.000000e+00 : f32
      %cst_128 = arith.constant 4.000000e+00 : f32
      %248 = vector.broadcast %cst_127 : f32 to vector<8x512xf32>
      %249 = arith.maximumf %248, %92 : vector<8x512xf32>
      %250 = vector.broadcast %cst_128 : f32 to vector<8x512xf32>
      %251 = arith.minimumf %250, %249 : vector<8x512xf32>
      %cst_129 = arith.constant 0.000000e+00 : f32
      %252 = vector.broadcast %cst_129 : f32 to vector<8x512xf32>
      %253 = arith.subf %252, %251 : vector<8x512xf32>
      %254 = math.exp %253 : vector<8x512xf32>
      %cst_130 = arith.constant 1.000000e+00 : f32
      %255 = vector.broadcast %cst_130 : f32 to vector<8x512xf32>
      %256 = arith.addf %255, %254 : vector<8x512xf32>
      %cst_131 = arith.constant 1.000000e+00 : f32
      %257 = vector.broadcast %cst_131 : f32 to vector<8x512xf32>
      %258 = arith.divf %257, %256 : vector<8x512xf32>
      %c0_132 = arith.constant 0 : index
      %c0_133 = arith.constant 0 : index
      %259 = vector.load %arg19[%c0_132, %c0_133] : memref<8x512xf32, #tpu.memory_space<vmem>>, vector<8x512xf32>
      tpu.vector_store %arg19[%c0_132, %c0_133], %258 {strides = array<i32>} : memref<8x512xf32, #tpu.memory_space<vmem>>, vector<8x512xf32>,
    } else {
    }
    %c1_i32_43 = arith.constant 1 : i32
    %96 = arith.cmpi eq, %76, %c1_i32_43 : i32
    %97 = arith.extui %96 : i1 to i32
    %c0_i32_44 = arith.constant 0 : i32
    %98 = arith.cmpi ne, %97, %c0_i32_44 : i32
    scf.if %98 {
      %cst_127 = arith.constant -2.000000e+00 : f32
      %cst_128 = arith.constant 2.000000e+00 : f32
      %248 = vector.broadcast %cst_127 : f32 to vector<8x512xf32>
      %249 = arith.maximumf %248, %92 : vector<8x512xf32>
      %250 = vector.broadcast %cst_128 : f32 to vector<8x512xf32>
      %251 = arith.minimumf %250, %249 : vector<8x512xf32>
      %252 = math.tanh %251 : vector<8x512xf32>
      %c0_129 = arith.constant 0 : index
      %c0_130 = arith.constant 0 : index
      %253 = vector.load %arg19[%c0_129, %c0_130] : memref<8x512xf32, #tpu.memory_space<vmem>>, vector<8x512xf32>
      tpu.vector_store %arg19[%c0_129, %c0_130], %252 {strides = array<i32>} : memref<8x512xf32, #tpu.memory_space<vmem>>, vector<8x512xf32>,
    } else {
    }
    %c2_i32_45 = arith.constant 2 : i32
    %99 = arith.cmpi eq, %76, %c2_i32_45 : i32
    %100 = arith.extui %99 : i1 to i32
    %c0_i32_46 = arith.constant 0 : i32
    %101 = arith.cmpi ne, %100, %c0_i32_46 : i32
    scf.if %101 {
      %cst_127 = arith.constant -3.000000e+01 : f32
      %cst_128 = arith.constant 3.000000e+01 : f32
      %248 = vector.broadcast %cst_127 : f32 to vector<8x512xf32>
      %249 = arith.maximumf %248, %92 : vector<8x512xf32>
      %250 = vector.broadcast %cst_128 : f32 to vector<8x512xf32>
      %251 = arith.minimumf %250, %249 : vector<8x512xf32>
      %252 = math.exp %251 : vector<8x512xf32>
      %cst_129 = arith.constant 1.000000e+00 : f32
      %253 = vector.broadcast %cst_129 : f32 to vector<8x512xf32>
      %254 = arith.addf %253, %252 : vector<8x512xf32>
      %255 = math.log %254 : vector<8x512xf32>
      %cst_130 = arith.constant 0.000000e+00 : f32
      %cst_131 = arith.constant 1.000000e+00 : f32
      %256 = vector.broadcast %cst_130 : f32 to vector<8x512xf32>
      %257 = arith.maximumf %256, %255 : vector<8x512xf32>
      %258 = vector.broadcast %cst_131 : f32 to vector<8x512xf32>
      %259 = arith.minimumf %258, %257 : vector<8x512xf32>
      %c0_132 = arith.constant 0 : index
      %c0_133 = arith.constant 0 : index
      %260 = vector.load %arg19[%c0_132, %c0_133] : memref<8x512xf32, #tpu.memory_space<vmem>>, vector<8x512xf32>
      tpu.vector_store %arg19[%c0_132, %c0_133], %259 {strides = array<i32>} : memref<8x512xf32, #tpu.memory_space<vmem>>, vector<8x512xf32>,
    } else {
    }
    %c3_i32_47 = arith.constant 3 : i32
    %102 = arith.cmpi eq, %76, %c3_i32_47 : i32
    %103 = arith.extui %102 : i1 to i32
    %c0_i32_48 = arith.constant 0 : i32
    %104 = arith.cmpi ne, %103, %c0_i32_48 : i32
    scf.if %104 {
      %cst_127 = arith.constant 0.000000e+00 : f32
      %cst_128 = arith.constant 1.000000e+00 : f32
      %248 = vector.broadcast %cst_127 : f32 to vector<8x512xf32>
      %249 = arith.maximumf %248, %92 : vector<8x512xf32>
      %250 = vector.broadcast %cst_128 : f32 to vector<8x512xf32>
      %251 = arith.minimumf %250, %249 : vector<8x512xf32>
      %cst_129 = arith.constant 5.000000e-01 : f32
      %252 = vector.broadcast %cst_129 : f32 to vector<8x512xf32>
      %253 = arith.subf %251, %252 : vector<8x512xf32>
      %254 = arith.mulf %253, %253 : vector<8x512xf32>
      %cst_130 = arith.constant 0.000000e+00 : f32
      %255 = vector.broadcast %cst_130 : f32 to vector<8x512xf32>
      %256 = arith.subf %255, %254 : vector<8x512xf32>
      %cst_131 = arith.constant 4.500000e-02 : f32
      %257 = vector.broadcast %cst_131 : f32 to vector<8x512xf32>
      %258 = arith.divf %256, %257 : vector<8x512xf32>
      %259 = math.exp %258 : vector<8x512xf32>
      %c0_132 = arith.constant 0 : index
      %c0_133 = arith.constant 0 : index
      %260 = vector.load %arg19[%c0_132, %c0_133] : memref<8x512xf32, #tpu.memory_space<vmem>>, vector<8x512xf32>
      tpu.vector_store %arg19[%c0_132, %c0_133], %259 {strides = array<i32>} : memref<8x512xf32, #tpu.memory_space<vmem>>, vector<8x512xf32>,
    } else {
    }
    %c4_i32_49 = arith.constant 4 : i32
    %105 = arith.cmpi eq, %76, %c4_i32_49 : i32
    %106 = arith.extui %105 : i1 to i32
    %c0_i32_50 = arith.constant 0 : i32
    %107 = arith.cmpi ne, %106, %c0_i32_50 : i32
    scf.if %107 {
      %cst_127 = arith.constant 0.000000e+00 : f32
      %cst_128 = arith.constant 1.000000e+00 : f32
      %248 = vector.broadcast %cst_127 : f32 to vector<8x512xf32>
      %249 = arith.maximumf %248, %92 : vector<8x512xf32>
      %250 = vector.broadcast %cst_128 : f32 to vector<8x512xf32>
      %251 = arith.minimumf %250, %249 : vector<8x512xf32>
      %cst_129 = arith.constant 3.000000e-01 : f32
      %252 = vector.broadcast %cst_129 : f32 to vector<8x512xf32>
      %253 = arith.cmpf olt, %251, %252 : vector<8x512xf32>
      %cst_130 = arith.constant 2.000000e-01 : f32
      %254 = vector.broadcast %cst_130 : f32 to vector<8x512xf32>
      %255 = arith.mulf %254, %251 : vector<8x512xf32>
      %cst_131 = arith.constant 0.699999988 : f32
      %256 = vector.broadcast %cst_131 : f32 to vector<8x512xf32>
      %257 = arith.cmpf olt, %251, %256 : vector<8x512xf32>
      %cst_132 = arith.constant 5.000000e-01 : f32
      %258 = vector.broadcast %cst_132 : f32 to vector<8x512xf32>
      %259 = arith.mulf %258, %251 : vector<8x512xf32>
      %cst_133 = arith.constant 5.000000e-01 : f32
      %260 = vector.broadcast %cst_133 : f32 to vector<8x512xf32>
      %261 = arith.addf %260, %259 : vector<8x512xf32>
      %cst_134 = arith.constant 0.899999976 : f32
      %262 = vector.broadcast %cst_134 : f32 to vector<8x512xf32>
      %263 = arith.select %257, %261, %262 : vector<8x512xi1>, vector<8x512xf32>
      %264 = arith.select %253, %255, %263 : vector<8x512xi1>, vector<8x512xf32>
      %c0_135 = arith.constant 0 : index
      %c0_136 = arith.constant 0 : index
      %265 = vector.load %arg19[%c0_135, %c0_136] : memref<8x512xf32, #tpu.memory_space<vmem>>, vector<8x512xf32>
      tpu.vector_store %arg19[%c0_135, %c0_136], %264 {strides = array<i32>} : memref<8x512xf32, #tpu.memory_space<vmem>>, vector<8x512xf32>,
    } else {
    }
    %108 = vector.shape_cast %23 : vector<8x512xf32> to vector<1x8x512xf32>
    %cst_51 = arith.constant dense<0.000000e+00> : vector<1xf32>
    %109 = vector.multi_reduction <add>, %108, %cst_51 [1, 2] : vector<1x8x512xf32> to vector<1xf32>
    %110 = vector.shape_cast %109 : vector<1xf32> to vector<1x1x1xf32>
    %111 = vector.extract %110[0, 0, 0] : f32 from vector<1x1x1xf32>
    %cst_52 = arith.constant 4.096000e+03 : f32
    %112 = arith.divf %111, %cst_52 : f32
    %113 = vector.broadcast %112 : f32 to vector<8x512xf32>
    %114 = arith.subf %23, %113 : vector<8x512xf32>
    %115 = arith.mulf %114, %114 : vector<8x512xf32>
    %116 = vector.shape_cast %115 : vector<8x512xf32> to vector<1x8x512xf32>
    %cst_53 = arith.constant dense<0.000000e+00> : vector<1xf32>
    %117 = vector.multi_reduction <add>, %116, %cst_53 [1, 2] : vector<1x8x512xf32> to vector<1xf32>
    %118 = vector.shape_cast %117 : vector<1xf32> to vector<1x1x1xf32>
    %119 = vector.extract %118[0, 0, 0] : f32 from vector<1x1x1xf32>
    %cst_54 = arith.constant 4.095000e+03 : f32
    %120 = arith.divf %119, %cst_54 : f32
    %121 = math.sqrt %120 : f32
    %122 = arith.mulf %114, %114 : vector<8x512xf32>
    %123 = arith.mulf %122, %114 : vector<8x512xf32>
    %124 = vector.shape_cast %123 : vector<8x512xf32> to vector<1x8x512xf32>
    %cst_55 = arith.constant dense<0.000000e+00> : vector<1xf32>
    %125 = vector.multi_reduction <add>, %124, %cst_55 [1, 2] : vector<1x8x512xf32> to vector<1xf32>
    %126 = vector.shape_cast %125 : vector<1xf32> to vector<1x1x1xf32>
    %127 = vector.extract %126[0, 0, 0] : f32 from vector<1x1x1xf32>
    %cst_56 = arith.constant 4.096000e+03 : f32
    %128 = arith.divf %127, %cst_56 : f32
    %129 = arith.mulf %121, %121 : f32
    %130 = arith.mulf %129, %121 : f32
    %cst_57 = arith.constant 9.99999974E-6 : f32
    %131 = arith.addf %130, %cst_57 : f32
    %132 = arith.divf %128, %131 : f32
    %133 = vector.shape_cast %23 : vector<8x512xf32> to vector<1x8x512xf32>
    %cst_58 = arith.constant dense<0x7F800000> : vector<1xf32>
    %134 = vector.multi_reduction <minimumf>, %133, %cst_58 [1, 2] : vector<1x8x512xf32> to vector<1xf32>
    %135 = vector.shape_cast %134 : vector<1xf32> to vector<1x1x1xf32>
    %136 = vector.extract %135[0, 0, 0] : f32 from vector<1x1x1xf32>
    %137 = vector.shape_cast %23 : vector<8x512xf32> to vector<1x8x512xf32>
    %cst_59 = arith.constant dense<0xFF800000> : vector<1xf32>
    %138 = vector.multi_reduction <maximumf>, %137, %cst_59 [1, 2] : vector<1x8x512xf32> to vector<1xf32>
    %139 = vector.shape_cast %138 : vector<1xf32> to vector<1x1x1xf32>
    %140 = vector.extract %139[0, 0, 0] : f32 from vector<1x1x1xf32>
    %cst_60 = arith.constant -5.000000e-01 : f32
    %141 = arith.cmpf ogt, %132, %cst_60 : f32
    %cst_61 = arith.constant 5.000000e-01 : f32
    %142 = arith.cmpf olt, %132, %cst_61 : f32
    %143 = arith.andi %141, %142 : i1
    %cst_62 = arith.constant 0.000000e+00 : f32
    %144 = arith.cmpf oge, %136, %cst_62 : f32
    %145 = arith.andi %143, %144 : i1
    %146 = arith.cmpf olt, %136, %140 : f32
    %147 = arith.andi %145, %146 : i1
    %cst_63 = arith.constant 1.000000e+00 : f32
    %148 = arith.cmpf ole, %140, %cst_63 : f32
    %149 = arith.andi %147, %148 : i1
    %cst_64 = arith.constant -5.000000e-01 : f32
    %150 = arith.cmpf olt, %132, %cst_64 : f32
    %cst_65 = arith.constant 5.000000e-01 : f32
    %151 = arith.cmpf ogt, %132, %cst_65 : f32
    %152 = arith.ori %150, %151 : i1
    %cst_66 = arith.constant 0.699999988 : f32
    %153 = arith.cmpf ogt, %112, %cst_66 : f32
    %cst_67 = arith.constant 1.500000e+00 : f32
    %154 = arith.cmpf ogt, %140, %cst_67 : f32
    %155 = arith.ori %153, %154 : i1
    %cst_68 = arith.constant 1.000000e-01 : f32
    %156 = arith.cmpf olt, %121, %cst_68 : f32
    %c2_i32_69 = arith.constant 2 : i32
    %c3_i32_70 = arith.constant 3 : i32
    %157 = arith.select %156, %c2_i32_69, %c3_i32_70 : i32
    %c0_i32_71 = arith.constant 0 : i32
    %c4_i32_72 = arith.constant 4 : i32
    %158 = arith.select %155, %c0_i32_71, %c4_i32_72 : i32
    %c1_i32_73 = arith.constant 1 : i32
    %159 = arith.select %152, %c1_i32_73, %158 : i32
    %160 = arith.select %149, %157, %159 : i32
    %cst_74 = arith.constant dense<0.000000e+00> : vector<8xf32>
    %161 = vector.multi_reduction <add>, %23, %cst_74 [1] : vector<8x512xf32> to vector<8xf32>
    %162 = vector.shape_cast %161 : vector<8xf32> to vector<8x1xf32>
    %cst_75 = arith.constant 5.120000e+02 : f32
    %163 = vector.broadcast %cst_75 : f32 to vector<8x1xf32>
    %164 = arith.divf %162, %163 : vector<8x1xf32>
    %165 = vector.broadcast %164 : vector<8x1xf32> to vector<8x512xf32>
    %166 = arith.subf %23, %165 : vector<8x512xf32>
    %167 = arith.mulf %166, %166 : vector<8x512xf32>
    %cst_76 = arith.constant dense<0.000000e+00> : vector<8xf32>
    %168 = vector.multi_reduction <add>, %167, %cst_76 [1] : vector<8x512xf32> to vector<8xf32>
    %169 = vector.shape_cast %168 : vector<8xf32> to vector<8x1xf32>
    %cst_77 = arith.constant 5.110000e+02 : f32
    %170 = vector.broadcast %cst_77 : f32 to vector<8x1xf32>
    %171 = arith.divf %169, %170 : vector<8x1xf32>
    %172 = math.sqrt %171 : vector<8x1xf32>
    %cst_78 = arith.constant 9.99999974E-6 : f32
    %173 = vector.broadcast %cst_78 : f32 to vector<8x1xf32>
    %174 = arith.addf %172, %173 : vector<8x1xf32>
    %175 = vector.broadcast %174 : vector<8x1xf32> to vector<8x512xf32>
    %176 = arith.divf %166, %175 : vector<8x512xf32>
    %c0_i32_79 = arith.constant 0 : i32
    %177 = arith.cmpi eq, %160, %c0_i32_79 : i32
    %178 = arith.extui %177 : i1 to i32
    %c0_i32_80 = arith.constant 0 : i32
    %179 = arith.cmpi ne, %178, %c0_i32_80 : i32
    scf.if %179 {
      %cst_127 = arith.constant -4.000000e+00 : f32
      %cst_128 = arith.constant 4.000000e+00 : f32
      %248 = vector.broadcast %cst_127 : f32 to vector<8x512xf32>
      %249 = arith.maximumf %248, %176 : vector<8x512xf32>
      %250 = vector.broadcast %cst_128 : f32 to vector<8x512xf32>
      %251 = arith.minimumf %250, %249 : vector<8x512xf32>
      %cst_129 = arith.constant 0.000000e+00 : f32
      %252 = vector.broadcast %cst_129 : f32 to vector<8x512xf32>
      %253 = arith.subf %252, %251 : vector<8x512xf32>
      %254 = math.exp %253 : vector<8x512xf32>
      %cst_130 = arith.constant 1.000000e+00 : f32
      %255 = vector.broadcast %cst_130 : f32 to vector<8x512xf32>
      %256 = arith.addf %255, %254 : vector<8x512xf32>
      %cst_131 = arith.constant 1.000000e+00 : f32
      %257 = vector.broadcast %cst_131 : f32 to vector<8x512xf32>
      %258 = arith.divf %257, %256 : vector<8x512xf32>
      %c0_132 = arith.constant 0 : index
      %c0_133 = arith.constant 0 : index
      %259 = vector.load %arg20[%c0_132, %c0_133] : memref<8x512xf32, #tpu.memory_space<vmem>>, vector<8x512xf32>
      tpu.vector_store %arg20[%c0_132, %c0_133], %258 {strides = array<i32>} : memref<8x512xf32, #tpu.memory_space<vmem>>, vector<8x512xf32>,
    } else {
    }
    %c1_i32_81 = arith.constant 1 : i32
    %180 = arith.cmpi eq, %160, %c1_i32_81 : i32
    %181 = arith.extui %180 : i1 to i32
    %c0_i32_82 = arith.constant 0 : i32
    %182 = arith.cmpi ne, %181, %c0_i32_82 : i32
    scf.if %182 {
      %cst_127 = arith.constant -2.000000e+00 : f32
      %cst_128 = arith.constant 2.000000e+00 : f32
      %248 = vector.broadcast %cst_127 : f32 to vector<8x512xf32>
      %249 = arith.maximumf %248, %176 : vector<8x512xf32>
      %250 = vector.broadcast %cst_128 : f32 to vector<8x512xf32>
      %251 = arith.minimumf %250, %249 : vector<8x512xf32>
      %252 = math.tanh %251 : vector<8x512xf32>
      %c0_129 = arith.constant 0 : index
      %c0_130 = arith.constant 0 : index
      %253 = vector.load %arg20[%c0_129, %c0_130] : memref<8x512xf32, #tpu.memory_space<vmem>>, vector<8x512xf32>
      tpu.vector_store %arg20[%c0_129, %c0_130], %252 {strides = array<i32>} : memref<8x512xf32, #tpu.memory_space<vmem>>, vector<8x512xf32>,
    } else {
    }
    %c2_i32_83 = arith.constant 2 : i32
    %183 = arith.cmpi eq, %160, %c2_i32_83 : i32
    %184 = arith.extui %183 : i1 to i32
    %c0_i32_84 = arith.constant 0 : i32
    %185 = arith.cmpi ne, %184, %c0_i32_84 : i32
    scf.if %185 {
      %cst_127 = arith.constant -3.000000e+01 : f32
      %cst_128 = arith.constant 3.000000e+01 : f32
      %248 = vector.broadcast %cst_127 : f32 to vector<8x512xf32>
      %249 = arith.maximumf %248, %176 : vector<8x512xf32>
      %250 = vector.broadcast %cst_128 : f32 to vector<8x512xf32>
      %251 = arith.minimumf %250, %249 : vector<8x512xf32>
      %252 = math.exp %251 : vector<8x512xf32>
      %cst_129 = arith.constant 1.000000e+00 : f32
      %253 = vector.broadcast %cst_129 : f32 to vector<8x512xf32>
      %254 = arith.addf %253, %252 : vector<8x512xf32>
      %255 = math.log %254 : vector<8x512xf32>
      %cst_130 = arith.constant 0.000000e+00 : f32
      %cst_131 = arith.constant 1.000000e+00 : f32
      %256 = vector.broadcast %cst_130 : f32 to vector<8x512xf32>
      %257 = arith.maximumf %256, %255 : vector<8x512xf32>
      %258 = vector.broadcast %cst_131 : f32 to vector<8x512xf32>
      %259 = arith.minimumf %258, %257 : vector<8x512xf32>
      %c0_132 = arith.constant 0 : index
      %c0_133 = arith.constant 0 : index
      %260 = vector.load %arg20[%c0_132, %c0_133] : memref<8x512xf32, #tpu.memory_space<vmem>>, vector<8x512xf32>
      tpu.vector_store %arg20[%c0_132, %c0_133], %259 {strides = array<i32>} : memref<8x512xf32, #tpu.memory_space<vmem>>, vector<8x512xf32>,
    } else {
    }
    %c3_i32_85 = arith.constant 3 : i32
    %186 = arith.cmpi eq, %160, %c3_i32_85 : i32
    %187 = arith.extui %186 : i1 to i32
    %c0_i32_86 = arith.constant 0 : i32
    %188 = arith.cmpi ne, %187, %c0_i32_86 : i32
    scf.if %188 {
      %cst_127 = arith.constant 0.000000e+00 : f32
      %cst_128 = arith.constant 1.000000e+00 : f32
      %248 = vector.broadcast %cst_127 : f32 to vector<8x512xf32>
      %249 = arith.maximumf %248, %176 : vector<8x512xf32>
      %250 = vector.broadcast %cst_128 : f32 to vector<8x512xf32>
      %251 = arith.minimumf %250, %249 : vector<8x512xf32>
      %cst_129 = arith.constant 5.000000e-01 : f32
      %252 = vector.broadcast %cst_129 : f32 to vector<8x512xf32>
      %253 = arith.subf %251, %252 : vector<8x512xf32>
      %254 = arith.mulf %253, %253 : vector<8x512xf32>
      %cst_130 = arith.constant 0.000000e+00 : f32
      %255 = vector.broadcast %cst_130 : f32 to vector<8x512xf32>
      %256 = arith.subf %255, %254 : vector<8x512xf32>
      %cst_131 = arith.constant 4.500000e-02 : f32
      %257 = vector.broadcast %cst_131 : f32 to vector<8x512xf32>
      %258 = arith.divf %256, %257 : vector<8x512xf32>
      %259 = math.exp %258 : vector<8x512xf32>
      %c0_132 = arith.constant 0 : index
      %c0_133 = arith.constant 0 : index
      %260 = vector.load %arg20[%c0_132, %c0_133] : memref<8x512xf32, #tpu.memory_space<vmem>>, vector<8x512xf32>
      tpu.vector_store %arg20[%c0_132, %c0_133], %259 {strides = array<i32>} : memref<8x512xf32, #tpu.memory_space<vmem>>, vector<8x512xf32>,
    } else {
    }
    %c4_i32_87 = arith.constant 4 : i32
    %189 = arith.cmpi eq, %160, %c4_i32_87 : i32
    %190 = arith.extui %189 : i1 to i32
    %c0_i32_88 = arith.constant 0 : i32
    %191 = arith.cmpi ne, %190, %c0_i32_88 : i32
    scf.if %191 {
      %cst_127 = arith.constant 0.000000e+00 : f32
      %cst_128 = arith.constant 1.000000e+00 : f32
      %248 = vector.broadcast %cst_127 : f32 to vector<8x512xf32>
      %249 = arith.maximumf %248, %176 : vector<8x512xf32>
      %250 = vector.broadcast %cst_128 : f32 to vector<8x512xf32>
      %251 = arith.minimumf %250, %249 : vector<8x512xf32>
      %cst_129 = arith.constant 3.000000e-01 : f32
      %252 = vector.broadcast %cst_129 : f32 to vector<8x512xf32>
      %253 = arith.cmpf olt, %251, %252 : vector<8x512xf32>
      %cst_130 = arith.constant 2.000000e-01 : f32
      %254 = vector.broadcast %cst_130 : f32 to vector<8x512xf32>
      %255 = arith.mulf %254, %251 : vector<8x512xf32>
      %cst_131 = arith.constant 0.699999988 : f32
      %256 = vector.broadcast %cst_131 : f32 to vector<8x512xf32>
      %257 = arith.cmpf olt, %251, %256 : vector<8x512xf32>
      %cst_132 = arith.constant 5.000000e-01 : f32
      %258 = vector.broadcast %cst_132 : f32 to vector<8x512xf32>
      %259 = arith.mulf %258, %251 : vector<8x512xf32>
      %cst_133 = arith.constant 5.000000e-01 : f32
      %260 = vector.broadcast %cst_133 : f32 to vector<8x512xf32>
      %261 = arith.addf %260, %259 : vector<8x512xf32>
      %cst_134 = arith.constant 0.899999976 : f32
      %262 = vector.broadcast %cst_134 : f32 to vector<8x512xf32>
      %263 = arith.select %257, %261, %262 : vector<8x512xi1>, vector<8x512xf32>
      %264 = arith.select %253, %255, %263 : vector<8x512xi1>, vector<8x512xf32>
      %c0_135 = arith.constant 0 : index
      %c0_136 = arith.constant 0 : index
      %265 = vector.load %arg20[%c0_135, %c0_136] : memref<8x512xf32, #tpu.memory_space<vmem>>, vector<8x512xf32>
      tpu.vector_store %arg20[%c0_135, %c0_136], %264 {strides = array<i32>} : memref<8x512xf32, #tpu.memory_space<vmem>>, vector<8x512xf32>,
    } else {
    }
    %c0_89 = arith.constant 0 : index
    %c0_90 = arith.constant 0 : index
    %192 = vector.load %arg20[%c0_89, %c0_90] : memref<8x512xf32, #tpu.memory_space<vmem>>, vector<8x512xf32>
    %cst_91 = arith.constant 5.000000e-01 : f32
    %193 = vector.broadcast %cst_91 : f32 to vector<8x512xf32>
    %194 = arith.mulf %193, %192 : vector<8x512xf32>
    %c0_92 = arith.constant 0 : index
    %c0_93 = arith.constant 0 : index
    %195 = vector.load %arg19[%c0_92, %c0_93] : memref<8x512xf32, #tpu.memory_space<vmem>>, vector<8x512xf32>
    %cst_94 = arith.constant 5.000000e-01 : f32
    %196 = vector.broadcast %cst_94 : f32 to vector<8x512xf32>
    %197 = arith.mulf %196, %195 : vector<8x512xf32>
    %198 = arith.addf %194, %197 : vector<8x512xf32>
    %199 = arith.truncf %198 : vector<8x512xf32> to vector<8x512xbf16>
    %c0_95 = arith.constant 0 : index
    %c0_96 = arith.constant 0 : index
    %200 = vector.load %arg8[%c0_95, %c0_96] : memref<512x512xbf16, #tpu.memory_space<vmem>>, vector<512x512xbf16>
    %cst_97 = arith.constant dense<0.000000e+00> : vector<8x512xf32>
    %201 = tpu.matmul %199, %200, %cst_97 {dimension_numbers = #tpu.dot_dimension_numbers<[1], [0], [0], [1], [0, 0, 1, 1], [], []>} : vector<8x512xbf16>, vector<512x512xbf16>, vector<8x512xf32> -> vector<8x512xf32>
    %c0_98 = arith.constant 0 : index
    %c0_99 = arith.constant 0 : index
    %202 = vector.load %arg9[%c0_98, %c0_99] : memref<1x512xf32, #tpu.memory_space<vmem>>, vector<1x512xf32>
    %203 = vector.broadcast %202 : vector<1x512xf32> to vector<8x512xf32>
    %204 = arith.addf %201, %203 : vector<8x512xf32>
    %205 = arith.truncf %204 : vector<8x512xf32> to vector<8x512xbf16>
    %c0_100 = arith.constant 0 : index
    %c0_101 = arith.constant 0 : index
    %206 = vector.load %arg10[%c0_100, %c0_101] : memref<512x128xbf16, #tpu.memory_space<vmem>>, vector<512x128xbf16>
    %cst_102 = arith.constant dense<0.000000e+00> : vector<8x128xf32>
    %207 = tpu.matmul %205, %206, %cst_102 {dimension_numbers = #tpu.dot_dimension_numbers<[1], [0], [0], [1], [0, 0, 1, 1], [], []>} : vector<8x512xbf16>, vector<512x128xbf16>, vector<8x128xf32> -> vector<8x128xf32>
    %c0_103 = arith.constant 0 : index
    %c0_104 = arith.constant 0 : index
    %208 = vector.load %arg11[%c0_103, %c0_104] : memref<1x128xf32, #tpu.memory_space<vmem>>, vector<1x128xf32>
    %209 = vector.broadcast %208 : vector<1x128xf32> to vector<8x128xf32>
    %210 = arith.mulf %207, %209 : vector<8x128xf32>
    %c0_105 = arith.constant 0 : index
    %c0_106 = arith.constant 0 : index
    %211 = vector.load %arg12[%c0_105, %c0_106] : memref<1x128xf32, #tpu.memory_space<vmem>>, vector<1x128xf32>
    %212 = vector.broadcast %211 : vector<1x128xf32> to vector<8x128xf32>
    %213 = arith.addf %210, %212 : vector<8x128xf32>
    %cst_107 = arith.constant 0.000000e+00 : f32
    %214 = vector.broadcast %cst_107 : f32 to vector<8x128xf32>
    %215 = arith.maximumf %213, %214 : vector<8x128xf32>
    %216 = arith.truncf %215 : vector<8x128xf32> to vector<8x128xbf16>
    %c0_108 = arith.constant 0 : index
    %c0_109 = arith.constant 0 : index
    %217 = vector.load %arg13[%c0_108, %c0_109] : memref<128x64xbf16, #tpu.memory_space<vmem>>, vector<128x64xbf16>
    %cst_110 = arith.constant dense<0.000000e+00> : vector<8x64xf32>
    %218 = tpu.matmul %216, %217, %cst_110 {dimension_numbers = #tpu.dot_dimension_numbers<[1], [0], [0], [1], [0, 0, 1, 1], [], []>} : vector<8x128xbf16>, vector<128x64xbf16>, vector<8x64xf32> -> vector<8x64xf32>
    %c0_111 = arith.constant 0 : index
    %c0_112 = arith.constant 0 : index
    %219 = vector.load %arg14[%c0_111, %c0_112] : memref<1x64xf32, #tpu.memory_space<vmem>>, vector<1x64xf32>
    %220 = vector.broadcast %219 : vector<1x64xf32> to vector<8x64xf32>
    %221 = arith.addf %218, %220 : vector<8x64xf32>
    %cst_113 = arith.constant 0.000000e+00 : f32
    %222 = vector.broadcast %cst_113 : f32 to vector<8x64xf32>
    %223 = arith.maximumf %221, %222 : vector<8x64xf32>
    %224 = arith.truncf %223 : vector<8x64xf32> to vector<8x64xbf16>
    %c0_114 = arith.constant 0 : index
    %c0_115 = arith.constant 0 : index
    %225 = vector.load %arg15[%c0_114, %c0_115] : memref<64x128xbf16, #tpu.memory_space<vmem>>, vector<64x128xbf16>
    %cst_116 = arith.constant dense<0.000000e+00> : vector<8x128xf32>
    %226 = tpu.matmul %224, %225, %cst_116 {dimension_numbers = #tpu.dot_dimension_numbers<[1], [0], [0], [1], [0, 0, 1, 1], [], []>} : vector<8x64xbf16>, vector<64x128xbf16>, vector<8x128xf32> -> vector<8x128xf32>
    %c0_117 = arith.constant 0 : index
    %c0_118 = arith.constant 0 : index
    %227 = vector.load %arg16[%c0_117, %c0_118] : memref<1x128xf32, #tpu.memory_space<vmem>>, vector<1x128xf32>
    %228 = vector.broadcast %227 : vector<1x128xf32> to vector<8x128xf32>
    %229 = arith.addf %226, %228 : vector<8x128xf32>
    %c0_119 = arith.constant 0 : index
    %c0_120 = arith.constant 0 : index
    %230 = vector.load %arg17[%c0_119, %c0_120] : memref<8x128xf32, #tpu.memory_space<vmem>>, vector<8x128xf32>
    tpu.vector_store %arg17[%c0_119, %c0_120], %229 {strides = array<i32>} : memref<8x128xf32, #tpu.memory_space<vmem>>, vector<8x128xf32>,
    %231 = tpu.iota {dimensions = array<i32: 1>} : vector<8x128xi32>
    %c7_i32 = arith.constant 7 : i32
    %232 = vector.broadcast %c7_i32 : i32 to vector<8x128xi32>
    %233 = arith.cmpi slt, %231, %232 : vector<8x128xi32>
    %cst_121 = arith.constant -1.000000e+30 : f32
    %234 = vector.broadcast %cst_121 : f32 to vector<8x128xf32>
    %235 = arith.select %233, %229, %234 : vector<8x128xi1>, vector<8x128xf32>
    %cst_122 = arith.constant dense<0xFF800000> : vector<8xf32>
    %236 = vector.multi_reduction <maximumf>, %235, %cst_122 [1] : vector<8x128xf32> to vector<8xf32>
    %237 = vector.shape_cast %236 : vector<8xf32> to vector<8x1xf32>
    %238 = vector.broadcast %237 : vector<8x1xf32> to vector<8x128xf32>
    %239 = arith.subf %229, %238 : vector<8x128xf32>
    %240 = math.exp %239 : vector<8x128xf32>
    %cst_123 = arith.constant 0.000000e+00 : f32
    %241 = vector.broadcast %cst_123 : f32 to vector<8x128xf32>
    %242 = arith.select %233, %240, %241 : vector<8x128xi1>, vector<8x128xf32>
    %cst_124 = arith.constant dense<0.000000e+00> : vector<8xf32>
    %243 = vector.multi_reduction <add>, %242, %cst_124 [1] : vector<8x128xf32> to vector<8xf32>
    %244 = vector.shape_cast %243 : vector<8xf32> to vector<8x1xf32>
    %245 = vector.broadcast %244 : vector<8x1xf32> to vector<8x128xf32>
    %246 = arith.divf %242, %245 : vector<8x128xf32>
    %c0_125 = arith.constant 0 : index
    %c0_126 = arith.constant 0 : index
    %247 = vector.load %arg18[%c0_125, %c0_126] : memref<8x128xf32, #tpu.memory_space<vmem>>, vector<8x128xf32>
    tpu.vector_store %arg18[%c0_125, %c0_126], %246 {strides = array<i32>} : memref<8x128xf32, #tpu.memory_space<vmem>>, vector<8x128xf32>,
    return
  }
}

</mosaic_0001>

<llo_original>
// kernel: forward.1
$region0: #{forward.1}
  #allocation0 [shape = 'u32[]', space=smem, size = 0x4, offset = 0x4, fixed_abs, tag = 'smem constant byte address 0x4 - core index']
  #allocation1 [shape = 'u32[144,128]{1,0:T(1,128)}', space=vmem, size = 0x12000, scoped, tag = 'internal scratch']
  #allocation2 [shape = 'f32[8,512]{1,0:T(8,128)}', space=vmem, size = 0x4000, scoped, tag = 'scratch operand']
  #allocation3 [shape = 'f32[8,512]{1,0:T(8,128)}', space=vmem, size = 0x4000, scoped, tag = 'scratch operand']
  %s0 = inlined_call_operand.vmem [shape: f32[8,768], index: 0, kind: input, shape index: {}]
  %s1 = inlined_call_operand.vmem [shape: f32[8,768], index: 1, kind: input, shape index: {}]
  %s2 = inlined_call_operand.hbm [shape: bf16[768,512], index: 2, kind: input, shape index: {}]
  %s3 = inlined_call_operand.hbm [shape: f32[1,512], index: 3, kind: input, shape index: {}]
  %s4 = inlined_call_operand.hbm [shape: f32[1,512], index: 4, kind: input, shape index: {}]
  %s5 = inlined_call_operand.hbm [shape: bf16[768,512], index: 5, kind: input, shape index: {}]
  %s6 = inlined_call_operand.hbm [shape: f32[1,512], index: 6, kind: input, shape index: {}]
  %s7 = inlined_call_operand.hbm [shape: f32[1,512], index: 7, kind: input, shape index: {}]
  %s8 = inlined_call_operand.hbm [shape: bf16[512,512], index: 8, kind: input, shape index: {}]
  %s9 = inlined_call_operand.hbm [shape: f32[1,512], index: 9, kind: input, shape index: {}]
  %s10 = inlined_call_operand.hbm [shape: bf16[512,128], index: 10, kind: input, shape index: {}]
  %s11 = inlined_call_operand.vmem [shape: f32[1,128], index: 11, kind: input, shape index: {}]
  %s12 = inlined_call_operand.vmem [shape: f32[1,128], index: 12, kind: input, shape index: {}]
  %s13 = inlined_call_operand.vmem [shape: bf16[128,64], index: 13, kind: input, shape index: {}]
  %s14 = inlined_call_operand.hbm [shape: f32[1,64], index: 14, kind: input, shape index: {}]
  %s15 = inlined_call_operand.vmem [shape: bf16[64,128], index: 15, kind: input, shape index: {}]
  %s16 = inlined_call_operand.hbm [shape: f32[1,128], index: 16, kind: input, shape index: {}]
  %s17 = inlined_call_operand.hbm [shape: f32[8,128], index: 17, kind: output, shape index: {0}]
  %s18 = inlined_call_operand.hbm [shape: f32[8,128], index: 18, kind: output, shape index: {1}]
  %19 = xla_tuple %s17, %s18
  %s20 = sld [smem:[#allocation0]]
  $region170: #{forward.1} parent=0
    _
  %s22 = ssub.s32 1, %s20
  %s23 = scalar_select 0, %s22, %s20
  $region1: #{forward.1} parent=0
    #allocation4 [shape = 'u8[786432]{0}', space=vmem, size = 0xc0000, scoped, tag = 'input window, operand 2, single buffered']
    #allocation5 [shape = 's32[1]{0}', space=sflag, size = 0x4, scoped, tag = 'scoped memory for forward.1']
    #allocation6 [shape = 's32[1]{0}', space=sflag, size = 0x4, scoped, tag = 'scoped memory for forward.1']
    #allocation7 [shape = 'u8[2048]{0}', space=vmem, size = 0x800, scoped, tag = 'input window, operand 3, single buffered']
    #allocation8 [shape = 's32[1]{0}', space=sflag, size = 0x4, scoped, tag = 'scoped memory for forward.1']
    #allocation9 [shape = 'u8[2048]{0}', space=vmem, size = 0x800, scoped, tag = 'input window, operand 4, single buffered']
    #allocation10 [shape = 'u8[786432]{0}', space=vmem, size = 0xc0000, scoped, tag = 'input window, operand 5, single buffered']
    #allocation11 [shape = 's32[1]{0}', space=sflag, size = 0x4, scoped, tag = 'scoped memory for forward.1']
    #allocation12 [shape = 'u8[2048]{0}', space=vmem, size = 0x800, scoped, tag = 'input window, operand 6, single buffered']
    #allocation13 [shape = 'u8[2048]{0}', space=vmem, size = 0x800, scoped, tag = 'input window, operand 7, single buffered']
    #allocation14 [shape = 's32[1]{0}', space=sflag, size = 0x4, scoped, tag = 'scoped memory for forward.1']
    #allocation15 [shape = 'u8[524288]{0}', space=vmem, size = 0x80000, scoped, tag = 'input window, operand 8, single buffered']
    #allocation16 [shape = 'u8[2048]{0}', space=vmem, size = 0x800, scoped, tag = 'input window, operand 9, single buffered']
    #allocation17 [shape = 's32[1]{0}', space=sflag, size = 0x4, scoped, tag = 'scoped memory for forward.1']
    #allocation18 [shape = 'u8[131072]{0}', space=vmem, size = 0x20000, scoped, tag = 'input window, operand 10, single buffered']
    #allocation19 [shape = 'u8[512]{0}', space=vmem, size = 0x400, scoped, tag = 'input window, operand 14, single buffered']
    #allocation20 [shape = 's32[1]{0}', space=sflag, size = 0x4, scoped, tag = 'scoped memory for forward.1']
    #allocation21 [shape = 'u8[512]{0}', space=vmem, size = 0x400, scoped, tag = 'input window, operand 16, single buffered']
    #allocation22 [shape = 'u8[4096]{0}', space=vmem, size = 0x1000, scoped, tag = 'output window, operand 0, single buffered']
    #allocation23 [shape = 'u8[4096]{0}', space=vmem, size = 0x1000, scoped, tag = 'output window, operand 1, single buffered']
    #allocation24 [shape = 's32[1]{0}', space=sflag, size = 0x4, scoped, tag = 'scoped memory for forward.1']
    %24 = vsyncpa [#allocation5], 0
    %25 = vsyncpa [#allocation8], 0
    %26 = vsyncpa [#allocation11], 0
    %27 = vsyncpa [#allocation14], 0
    %28 = vsyncpa [#allocation17], 0
    %29 = vsyncpa [#allocation20], 0
    %30 = vsyncpa [#allocation6], 0
    %31 = vsyncpa [#allocation24], 0
    // Predicated region
    $region2: #{forward.1} parent=1 // pred_check
      _
    $region3: #{forward.1} parent=1 // pred_check_branch
      %33 = sbr.rel (0) target = $region5
    $region4: #{forward.1} parent=1 // pred_region
      _
    $region5: #{forward.1} parent=1 // pred_fallthru
      _
    // Predicated region
    $region6: #{forward.1} parent=1 // pred_check
      _
    $region7: #{forward.1} parent=1 // pred_check_branch
      %35 = sbr.rel (0) target = $region9
    $region8: #{forward.1} parent=1 // pred_region
      _
    $region9: #{forward.1} parent=1 // pred_fallthru
      _
    // Predicated region
    $region10: #{forward.1} parent=1 // pred_check
      _
    $region11: #{forward.1} parent=1 // pred_check_branch
      %37 = sbr.rel (0) target = $region13
    $region12: #{forward.1} parent=1 // pred_region
      %s39 = ssub.s32 24576, 24576
      %40 = vsyncadd [#allocation5], %s39
      %s41 = sshll.u32 [#allocation4], 4
      %s42 = int_to_ptr.vmem [resolvable:$true] %s41
      %47 = dma.hbm_to_vmem [thread:$0]  %s2, 24576, %s42, [#allocation5], 256, 256, 16
    $region13: #{forward.1} parent=1 // pred_fallthru
      _
    // Predicated region
    $region14: #{forward.1} parent=1 // pred_check
      _
    $region15: #{forward.1} parent=1 // pred_check_branch
      %49 = sbr.rel (0) target = $region17
    $region16: #{forward.1} parent=1 // pred_region
      %s51 = ssub.s32 64, 64
      %52 = vsyncadd [#allocation8], %s51
      %s54 = sshll.u32 [#allocation7], 4
      %s55 = int_to_ptr.vmem [resolvable:$true] %s54
      %57 = dma.hbm_to_vmem [thread:$0]  %s3, 64, %s55, [#allocation8]
    $region17: #{forward.1} parent=1 // pred_fallthru
      _
    // Predicated region
    $region18: #{forward.1} parent=1 // pred_check
      _
    $region19: #{forward.1} parent=1 // pred_check_branch
      %59 = sbr.rel (0) target = $region21
    $region20: #{forward.1} parent=1 // pred_region
      %s61 = ssub.s32 64, 64
      %62 = vsyncadd [#allocation8], %s61
      %s64 = sshll.u32 [#allocation9], 4
      %s65 = int_to_ptr.vmem [resolvable:$true] %s64
      %67 = dma.hbm_to_vmem [thread:$0]  %s4, 64, %s65, [#allocation8]
    $region21: #{forward.1} parent=1 // pred_fallthru
      _
    // Predicated region
    $region22: #{forward.1} parent=1 // pred_check
      _
    $region23: #{forward.1} parent=1 // pred_check_branch
      %69 = sbr.rel (0) target = $region25
    $region24: #{forward.1} parent=1 // pred_region
      %s71 = ssub.s32 24576, 24576
      %72 = vsyncadd [#allocation11], %s71
      %s73 = sshll.u32 [#allocation10], 4
      %s74 = int_to_ptr.vmem [resolvable:$true] %s73
      %79 = dma.hbm_to_vmem [thread:$0]  %s5, 24576, %s74, [#allocation11], 256, 256, 16
    $region25: #{forward.1} parent=1 // pred_fallthru
      _
    // Predicated region
    $region26: #{forward.1} parent=1 // pred_check
      _
    $region27: #{forward.1} parent=1 // pred_check_branch
      %81 = sbr.rel (0) target = $region29
    $region28: #{forward.1} parent=1 // pred_region
      %s83 = ssub.s32 64, 64
      %84 = vsyncadd [#allocation11], %s83
      %s86 = sshll.u32 [#allocation12], 4
      %s87 = int_to_ptr.vmem [resolvable:$true] %s86
      %89 = dma.hbm_to_vmem [thread:$0]  %s6, 64, %s87, [#allocation11]
    $region29: #{forward.1} parent=1 // pred_fallthru
      _
    // Predicated region
    $region30: #{forward.1} parent=1 // pred_check
      _
    $region31: #{forward.1} parent=1 // pred_check_branch
      %91 = sbr.rel (0) target = $region33
    $region32: #{forward.1} parent=1 // pred_region
      %s93 = ssub.s32 64, 64
      %94 = vsyncadd [#allocation14], %s93
      %s96 = sshll.u32 [#allocation13], 4
      %s97 = int_to_ptr.vmem [resolvable:$true] %s96
      %99 = dma.hbm_to_vmem [thread:$0]  %s7, 64, %s97, [#allocation14]
    $region33: #{forward.1} parent=1 // pred_fallthru
      _
    // Predicated region
    $region34: #{forward.1} parent=1 // pred_check
      _
    $region35: #{forward.1} parent=1 // pred_check_branch
      %101 = sbr.rel (0) target = $region37
    $region36: #{forward.1} parent=1 // pred_region
      %s103 = ssub.s32 16384, 16384
      %104 = vsyncadd [#allocation14], %s103
      %s105 = sshll.u32 [#allocation15], 4
      %s106 = int_to_ptr.vmem [resolvable:$true] %s105
      %111 = dma.hbm_to_vmem [thread:$0]  %s8, 16384, %s106, [#allocation14], 256, 256, 16
    $region37: #{forward.1} parent=1 // pred_fallthru
      _
    // Predicated region
    $region38: #{forward.1} parent=1 // pred_check
      _
    $region39: #{forward.1} parent=1 // pred_check_branch
      %113 = sbr.rel (0) target = $region41
    $region40: #{forward.1} parent=1 // pred_region
      %s115 = ssub.s32 64, 64
      %116 = vsyncadd [#allocation17], %s115
      %s118 = sshll.u32 [#allocation16], 4
      %s119 = int_to_ptr.vmem [resolvable:$true] %s118
      %121 = dma.hbm_to_vmem [thread:$0]  %s9, 64, %s119, [#allocation17]
    $region41: #{forward.1} parent=1 // pred_fallthru
      _
    // Predicated region
    $region42: #{forward.1} parent=1 // pred_check
      _
    $region43: #{forward.1} parent=1 // pred_check_branch
      %123 = sbr.rel (0) target = $region45
    $region44: #{forward.1} parent=1 // pred_region
      %s125 = ssub.s32 4096, 4096
      %126 = vsyncadd [#allocation17], %s125
      %s127 = sshll.u32 [#allocation18], 4
      %s128 = int_to_ptr.vmem [resolvable:$true] %s127
      %133 = dma.hbm_to_vmem [thread:$0]  %s10, 4096, %s128, [#allocation17], 64, 64, 4
    $region45: #{forward.1} parent=1 // pred_fallthru
      _
    // Predicated region
    $region46: #{forward.1} parent=1 // pred_check
      _
    $region47: #{forward.1} parent=1 // pred_check_branch
      %135 = sbr.rel (0) target = $region49
    $region48: #{forward.1} parent=1 // pred_region
      _
    $region49: #{forward.1} parent=1 // pred_fallthru
      _
    // Predicated region
    $region50: #{forward.1} parent=1 // pred_check
      _
    $region51: #{forward.1} parent=1 // pred_check_branch
      %137 = sbr.rel (0) target = $region53
    $region52: #{forward.1} parent=1 // pred_region
      _
    $region53: #{forward.1} parent=1 // pred_fallthru
      _
    // Predicated region
    $region54: #{forward.1} parent=1 // pred_check
      _
    $region55: #{forward.1} parent=1 // pred_check_branch
      %139 = sbr.rel (0) target = $region57
    $region56: #{forward.1} parent=1 // pred_region
      _
    $region57: #{forward.1} parent=1 // pred_fallthru
      _
    // Predicated region
    $region58: #{forward.1} parent=1 // pred_check
      _
    $region59: #{forward.1} parent=1 // pred_check_branch
      %141 = sbr.rel (0) target = $region61
    $region60: #{forward.1} parent=1 // pred_region
      %s143 = ssub.s32 16, 16
      %144 = vsyncadd [#allocation20], %s143
      %s146 = sshll.u32 [#allocation19], 4
      %s147 = int_to_ptr.vmem [resolvable:$true] %s146
      %149 = dma.hbm_to_vmem [thread:$0]  %s14, 16, %s147, [#allocation20]
    $region61: #{forward.1} parent=1 // pred_fallthru
      _
    // Predicated region
    $region62: #{forward.1} parent=1 // pred_check
      _
    $region63: #{forward.1} parent=1 // pred_check_branch
      %151 = sbr.rel (0) target = $region65
    $region64: #{forward.1} parent=1 // pred_region
      _
    $region65: #{forward.1} parent=1 // pred_fallthru
      _
    // Predicated region
    $region66: #{forward.1} parent=1 // pred_check
      _
    $region67: #{forward.1} parent=1 // pred_check_branch
      %153 = sbr.rel (0) target = $region69
    $region68: #{forward.1} parent=1 // pred_region
      %s155 = ssub.s32 16, 16
      %156 = vsyncadd [#allocation20], %s155
      %s158 = sshll.u32 [#allocation21], 4
      %s159 = int_to_ptr.vmem [resolvable:$true] %s158
      %161 = dma.hbm_to_vmem [thread:$0]  %s16, 16, %s159, [#allocation20]
    $region69: #{forward.1} parent=1 // pred_fallthru
      _
    // Predicated region
    $region70: #{forward.1} parent=1 // pred_check
      _
    $region71: #{forward.1} parent=1 // pred_check_branch
      %163 = sbr.rel (0) target = $region73
    $region72: #{forward.1} parent=1 // pred_region
      %164 = dma.done [#allocation5], 24576
    $region73: #{forward.1} parent=1 // pred_fallthru
      _
    // Predicated region
    $region74: #{forward.1} parent=1 // pred_check
      _
    $region75: #{forward.1} parent=1 // pred_check_branch
      %166 = sbr.rel (0) target = $region77
    $region76: #{forward.1} parent=1 // pred_region
      %167 = dma.done [#allocation8], 64
    $region77: #{forward.1} parent=1 // pred_fallthru
      _
    // Predicated region
    $region78: #{forward.1} parent=1 // pred_check
      _
    $region79: #{forward.1} parent=1 // pred_check_branch
      %169 = sbr.rel (0) target = $region81
    $region80: #{forward.1} parent=1 // pred_region
      %170 = dma.done [#allocation8], 64
    $region81: #{forward.1} parent=1 // pred_fallthru
      _
    // Predicated region
    $region82: #{forward.1} parent=1 // pred_check
      _
    $region83: #{forward.1} parent=1 // pred_check_branch
      %172 = sbr.rel (0) target = $region85
    $region84: #{forward.1} parent=1 // pred_region
      %173 = dma.done [#allocation11], 24576
    $region85: #{forward.1} parent=1 // pred_fallthru
      _
    // Predicated region
    $region86: #{forward.1} parent=1 // pred_check
      _
    $region87: #{forward.1} parent=1 // pred_check_branch
      %175 = sbr.rel (0) target = $region89
    $region88: #{forward.1} parent=1 // pred_region
      %176 = dma.done [#allocation11], 64
    $region89: #{forward.1} parent=1 // pred_fallthru
      _
    // Predicated region
    $region90: #{forward.1} parent=1 // pred_check
      _
    $region91: #{forward.1} parent=1 // pred_check_branch
      %178 = sbr.rel (0) target = $region93
    $region92: #{forward.1} parent=1 // pred_region
      %179 = dma.done [#allocation14], 64
    $region93: #{forward.1} parent=1 // pred_fallthru
      _
    // Predicated region
    $region94: #{forward.1} parent=1 // pred_check
      _
    $region95: #{forward.1} parent=1 // pred_check_branch
      %181 = sbr.rel (0) target = $region97
    $region96: #{forward.1} parent=1 // pred_region
      %182 = dma.done [#allocation14], 16384
    $region97: #{forward.1} parent=1 // pred_fallthru
      _
    // Predicated region
    $region98: #{forward.1} parent=1 // pred_check
      _
    $region99: #{forward.1} parent=1 // pred_check_branch
      %184 = sbr.rel (0) target = $region101
    $region100: #{forward.1} parent=1 // pred_region
      %185 = dma.done [#allocation17], 64
    $region101: #{forward.1} parent=1 // pred_fallthru
      _
    // Predicated region
    $region102: #{forward.1} parent=1 // pred_check
      _
    $region103: #{forward.1} parent=1 // pred_check_branch
      %187 = sbr.rel (0) target = $region105
    $region104: #{forward.1} parent=1 // pred_region
      %188 = dma.done [#allocation17], 4096
    $region105: #{forward.1} parent=1 // pred_fallthru
      _
    // Predicated region
    $region106: #{forward.1} parent=1 // pred_check
      _
    $region107: #{forward.1} parent=1 // pred_check_branch
      %190 = sbr.rel (0) target = $region109
    $region108: #{forward.1} parent=1 // pred_region
      %191 = dma.done [#allocation20], 16
    $region109: #{forward.1} parent=1 // pred_fallthru
      _
    // Predicated region
    $region110: #{forward.1} parent=1 // pred_check
      _
    $region111: #{forward.1} parent=1 // pred_check_branch
      %193 = sbr.rel (0) target = $region113
    $region112: #{forward.1} parent=1 // pred_region
      %194 = dma.done [#allocation20], 16
    $region113: #{forward.1} parent=1 // pred_fallthru
      _
    %v196 = vld [vmem:[%s0] sm:$0xff]
    %v197 = vld [vmem:[%s0 + $0x8] sm:$0xff]
    %v198 = vld [vmem:[%s0 + $0x10] sm:$0xff]
    %v199 = vld [vmem:[%s0 + $0x18] sm:$0xff]
    %v200 = vld [vmem:[%s0 + $0x20] sm:$0xff]
    %v201 = vld [vmem:[%s0 + $0x28] sm:$0xff]
    %v202 = vpack.c.bf16 %v196, %v196
    %v203 = vpack.c.bf16 %v197, %v197
    %v204 = vpack.c.bf16 %v198, %v198
    %v205 = vpack.c.bf16 %v199, %v199
    %v206 = vpack.c.bf16 %v200, %v200
    %v207 = vpack.c.bf16 %v201, %v201
    %v208 = vld [vmem:[#allocation4] sm:$0xff]
    %v209 = vld [vmem:[#allocation4 + $0x8] sm:$0xff]
    %v210 = vld [vmem:[#allocation4 + $0x10] sm:$0xff]
    %v211 = vld [vmem:[#allocation4 + $0x18] sm:$0xff]
    %v212 = vld [vmem:[#allocation4 + $0x20] sm:$0xff]
    %v213 = vld [vmem:[#allocation4 + $0x28] sm:$0xff]
    %v214 = vld [vmem:[#allocation4 + $0x30] sm:$0xff]
    %v215 = vld [vmem:[#allocation4 + $0x38] sm:$0xff]
    %v216 = vld [vmem:[#allocation4 + $0x40] sm:$0xff]
    %v217 = vld [vmem:[#allocation4 + $0x48] sm:$0xff]
    %v218 = vld [vmem:[#allocation4 + $0x50] sm:$0xff]
    %v219 = vld [vmem:[#allocation4 + $0x58] sm:$0xff]
    %v220 = vld [vmem:[#allocation4 + $0x60] sm:$0xff]
    %v221 = vld [vmem:[#allocation4 + $0x68] sm:$0xff]
    %v222 = vld [vmem:[#allocation4 + $0x70] sm:$0xff]
    %v223 = vld [vmem:[#allocation4 + $0x78] sm:$0xff]
    %v224 = vld [vmem:[#allocation4 + $0x80] sm:$0xff]
    %v225 = vld [vmem:[#allocation4 + $0x88] sm:$0xff]
    %v226 = vld [vmem:[#allocation4 + $0x90] sm:$0xff]
    %v227 = vld [vmem:[#allocation4 + $0x98] sm:$0xff]
    %v228 = vld [vmem:[#allocation4 + $0xa0] sm:$0xff]
    %v229 = vld [vmem:[#allocation4 + $0xa8] sm:$0xff]
    %v230 = vld [vmem:[#allocation4 + $0xb0] sm:$0xff]
    %v231 = vld [vmem:[#allocation4 + $0xb8] sm:$0xff]
    %v232 = vld [vmem:[#allocation4 + $0xc0] sm:$0xff]
    %v233 = vld [vmem:[#allocation4 + $0xc8] sm:$0xff]
    %v234 = vld [vmem:[#allocation4 + $0xd0] sm:$0xff]
    %v235 = vld [vmem:[#allocation4 + $0xd8] sm:$0xff]
    %v236 = vld [vmem:[#allocation4 + $0xe0] sm:$0xff]
    %v237 = vld [vmem:[#allocation4 + $0xe8] sm:$0xff]
    %v238 = vld [vmem:[#allocation4 + $0xf0] sm:$0xff]
    %v239 = vld [vmem:[#allocation4 + $0xf8] sm:$0xff]
    %v240 = vld [vmem:[#allocation4 + $0x100] sm:$0xff]
    %v241 = vld [vmem:[#allocation4 + $0x108] sm:$0xff]
    %v242 = vld [vmem:[#allocation4 + $0x110] sm:$0xff]
    %v243 = vld [vmem:[#allocation4 + $0x118] sm:$0xff]
    %v244 = vld [vmem:[#allocation4 + $0x120] sm:$0xff]
    %v245 = vld [vmem:[#allocation4 + $0x128] sm:$0xff]
    %v246 = vld [vmem:[#allocation4 + $0x130] sm:$0xff]
    %v247 = vld [vmem:[#allocation4 + $0x138] sm:$0xff]
    %v248 = vld [vmem:[#allocation4 + $0x140] sm:$0xff]
    %v249 = vld [vmem:[#allocation4 + $0x148] sm:$0xff]
    %v250 = vld [vmem:[#allocation4 + $0x150] sm:$0xff]
    %v251 = vld [vmem:[#allocation4 + $0x158] sm:$0xff]
    %v252 = vld [vmem:[#allocation4 + $0x160] sm:$0xff]
    %v253 = vld [vmem:[#allocation4 + $0x168] sm:$0xff]
    %v254 = vld [vmem:[#allocation4 + $0x170] sm:$0xff]
    %v255 = vld [vmem:[#allocation4 + $0x178] sm:$0xff]
    %v256 = vld [vmem:[#allocation4 + $0x180] sm:$0xff]
    %v257 = vld [vmem:[#allocation4 + $0x188] sm:$0xff]
    %v258 = vld [vmem:[#allocation4 + $0x190] sm:$0xff]
    %v259 = vld [vmem:[#allocation4 + $0x198] sm:$0xff]
    %v260 = vld [vmem:[#allocation4 + $0x1a0] sm:$0xff]
    %v261 = vld [vmem:[#allocation4 + $0x1a8] sm:$0xff]
    %v262 = vld [vmem:[#allocation4 + $0x1b0] sm:$0xff]
    %v263 = vld [vmem:[#allocation4 + $0x1b8] sm:$0xff]
    %v264 = vld [vmem:[#allocation4 + $0x1c0] sm:$0xff]
    %v265 = vld [vmem:[#allocation4 + $0x1c8] sm:$0xff]
    %v266 = vld [vmem:[#allocation4 + $0x1d0] sm:$0xff]
    %v267 = vld [vmem:[#allocation4 + $0x1d8] sm:$0xff]
    %v268 = vld [vmem:[#allocation4 + $0x1e0] sm:$0xff]
    %v269 = vld [vmem:[#allocation4 + $0x1e8] sm:$0xff]
    %v270 = vld [vmem:[#allocation4 + $0x1f0] sm:$0xff]
    %v271 = vld [vmem:[#allocation4 + $0x1f8] sm:$0xff]
    %v272 = vld [vmem:[#allocation4 + $0x200] sm:$0xff]
    %v273 = vld [vmem:[#allocation4 + $0x208] sm:$0xff]
    %v274 = vld [vmem:[#allocation4 + $0x210] sm:$0xff]
    %v275 = vld [vmem:[#allocation4 + $0x218] sm:$0xff]
    %v276 = vld [vmem:[#allocation4 + $0x220] sm:$0xff]
    %v277 = vld [vmem:[#allocation4 + $0x228] sm:$0xff]
    %v278 = vld [vmem:[#allocation4 + $0x230] sm:$0xff]
    %v279 = vld [vmem:[#allocation4 + $0x238] sm:$0xff]
    %v280 = vld [vmem:[#allocation4 + $0x240] sm:$0xff]
    %v281 = vld [vmem:[#allocation4 + $0x248] sm:$0xff]
    %v282 = vld [vmem:[#allocation4 + $0x250] sm:$0xff]
    %v283 = vld [vmem:[#allocation4 + $0x258] sm:$0xff]
    %v284 = vld [vmem:[#allocation4 + $0x260] sm:$0xff]
    %v285 = vld [vmem:[#allocation4 + $0x268] sm:$0xff]
    %v286 = vld [vmem:[#allocation4 + $0x270] sm:$0xff]
    %v287 = vld [vmem:[#allocation4 + $0x278] sm:$0xff]
    %v288 = vld [vmem:[#allocation4 + $0x280] sm:$0xff]
    %v289 = vld [vmem:[#allocation4 + $0x288] sm:$0xff]
    %v290 = vld [vmem:[#allocation4 + $0x290] sm:$0xff]
    %v291 = vld [vmem:[#allocation4 + $0x298] sm:$0xff]
    %v292 = vld [vmem:[#allocation4 + $0x2a0] sm:$0xff]
    %v293 = vld [vmem:[#allocation4 + $0x2a8] sm:$0xff]
    %v294 = vld [vmem:[#allocation4 + $0x2b0] sm:$0xff]
    %v295 = vld [vmem:[#allocation4 + $0x2b8] sm:$0xff]
    %v296 = vld [vmem:[#allocation4 + $0x2c0] sm:$0xff]
    %v297 = vld [vmem:[#allocation4 + $0x2c8] sm:$0xff]
    %v298 = vld [vmem:[#allocation4 + $0x2d0] sm:$0xff]
    %v299 = vld [vmem:[#allocation4 + $0x2d8] sm:$0xff]
    %v300 = vld [vmem:[#allocation4 + $0x2e0] sm:$0xff]
    %v301 = vld [vmem:[#allocation4 + $0x2e8] sm:$0xff]
    %v302 = vld [vmem:[#allocation4 + $0x2f0] sm:$0xff]
    %v303 = vld [vmem:[#allocation4 + $0x2f8] sm:$0xff]
    %v304 = vld [vmem:[#allocation4 + $0x300] sm:$0xff]
    %v305 = vld [vmem:[#allocation4 + $0x308] sm:$0xff]
    %v306 = vld [vmem:[#allocation4 + $0x310] sm:$0xff]
    %v307 = vld [vmem:[#allocation4 + $0x318] sm:$0xff]
    %v308 = vld [vmem:[#allocation4 + $0x320] sm:$0xff]
    %v309 = vld [vmem:[#allocation4 + $0x328] sm:$0xff]
    %v310 = vld [vmem:[#allocation4 + $0x330] sm:$0xff]
    %v311 = vld [vmem:[#allocation4 + $0x338] sm:$0xff]
    %v312 = vld [vmem:[#allocation4 + $0x340] sm:$0xff]
    %v313 = vld [vmem:[#allocation4 + $0x348] sm:$0xff]
    %v314 = vld [vmem:[#allocation4 + $0x350] sm:$0xff]
    %v315 = vld [vmem:[#allocation4 + $0x358] sm:$0xff]
    %v316 = vld [vmem:[#allocation4 + $0x360] sm:$0xff]
    %v317 = vld [vmem:[#allocation4 + $0x368] sm:$0xff]
    %v318 = vld [vmem:[#allocation4 + $0x370] sm:$0xff]
    %v319 = vld [vmem:[#allocation4 + $0x378] sm:$0xff]
    %v320 = vld [vmem:[#allocation4 + $0x380] sm:$0xff]
    %v321 = vld [vmem:[#allocation4 + $0x388] sm:$0xff]
    %v322 = vld [vmem:[#allocation4 + $0x390] sm:$0xff]
    %v323 = vld [vmem:[#allocation4 + $0x398] sm:$0xff]
    %v324 = vld [vmem:[#allocation4 + $0x3a0] sm:$0xff]
    %v325 = vld [vmem:[#allocation4 + $0x3a8] sm:$0xff]
    %v326 = vld [vmem:[#allocation4 + $0x3b0] sm:$0xff]
    %v327 = vld [vmem:[#allocation4 + $0x3b8] sm:$0xff]
    %v328 = vld [vmem:[#allocation4 + $0x3c0] sm:$0xff]
    %v329 = vld [vmem:[#allocation4 + $0x3c8] sm:$0xff]
    %v330 = vld [vmem:[#allocation4 + $0x3d0] sm:$0xff]
    %v331 = vld [vmem:[#allocation4 + $0x3d8] sm:$0xff]
    %v332 = vld [vmem:[#allocation4 + $0x3e0] sm:$0xff]
    %v333 = vld [vmem:[#allocation4 + $0x3e8] sm:$0xff]
    %v334 = vld [vmem:[#allocation4 + $0x3f0] sm:$0xff]
    %v335 = vld [vmem:[#allocation4 + $0x3f8] sm:$0xff]
    %v336 = vld [vmem:[#allocation4 + $0x400] sm:$0xff]
    %v337 = vld [vmem:[#allocation4 + $0x408] sm:$0xff]
    %v338 = vld [vmem:[#allocation4 + $0x410] sm:$0xff]
    %v339 = vld [vmem:[#allocation4 + $0x418] sm:$0xff]
    %v340 = vld [vmem:[#allocation4 + $0x420] sm:$0xff]
    %v341 = vld [vmem:[#allocation4 + $0x428] sm:$0xff]
    %v342 = vld [vmem:[#allocation4 + $0x430] sm:$0xff]
    %v343 = vld [vmem:[#allocation4 + $0x438] sm:$0xff]
    %v344 = vld [vmem:[#allocation4 + $0x440] sm:$0xff]
    %v345 = vld [vmem:[#allocation4 + $0x448] sm:$0xff]
    %v346 = vld [vmem:[#allocation4 + $0x450] sm:$0xff]
    %v347 = vld [vmem:[#allocation4 + $0x458] sm:$0xff]
    %v348 = vld [vmem:[#allocation4 + $0x460] sm:$0xff]
    %v349 = vld [vmem:[#allocation4 + $0x468] sm:$0xff]
    %v350 = vld [vmem:[#allocation4 + $0x470] sm:$0xff]
    %v351 = vld [vmem:[#allocation4 + $0x478] sm:$0xff]
    %v352 = vld [vmem:[#allocation4 + $0x480] sm:$0xff]
    %v353 = vld [vmem:[#allocation4 + $0x488] sm:$0xff]
    %v354 = vld [vmem:[#allocation4 + $0x490] sm:$0xff]
    %v355 = vld [vmem:[#allocation4 + $0x498] sm:$0xff]
    %v356 = vld [vmem:[#allocation4 + $0x4a0] sm:$0xff]
    %v357 = vld [vmem:[#allocation4 + $0x4a8] sm:$0xff]
    %v358 = vld [vmem:[#allocation4 + $0x4b0] sm:$0xff]
    %v359 = vld [vmem:[#allocation4 + $0x4b8] sm:$0xff]
    %v360 = vld [vmem:[#allocation4 + $0x4c0] sm:$0xff]
    %v361 = vld [vmem:[#allocation4 + $0x4c8] sm:$0xff]
    %v362 = vld [vmem:[#allocation4 + $0x4d0] sm:$0xff]
    %v363 = vld [vmem:[#allocation4 + $0x4d8] sm:$0xff]
    %v364 = vld [vmem:[#allocation4 + $0x4e0] sm:$0xff]
    %v365 = vld [vmem:[#allocation4 + $0x4e8] sm:$0xff]
    %v366 = vld [vmem:[#allocation4 + $0x4f0] sm:$0xff]
    %v367 = vld [vmem:[#allocation4 + $0x4f8] sm:$0xff]
    %v368 = vld [vmem:[#allocation4 + $0x500] sm:$0xff]
    %v369 = vld [vmem:[#allocation4 + $0x508] sm:$0xff]
    %v370 = vld [vmem:[#allocation4 + $0x510] sm:$0xff]
    %v371 = vld [vmem:[#allocation4 + $0x518] sm:$0xff]
    %v372 = vld [vmem:[#allocation4 + $0x520] sm:$0xff]
    %v373 = vld [vmem:[#allocation4 + $0x528] sm:$0xff]
    %v374 = vld [vmem:[#allocation4 + $0x530] sm:$0xff]
    %v375 = vld [vmem:[#allocation4 + $0x538] sm:$0xff]
    %v376 = vld [vmem:[#allocation4 + $0x540] sm:$0xff]
    %v377 = vld [vmem:[#allocation4 + $0x548] sm:$0xff]
    %v378 = vld [vmem:[#allocation4 + $0x550] sm:$0xff]
    %v379 = vld [vmem:[#allocation4 + $0x558] sm:$0xff]
    %v380 = vld [vmem:[#allocation4 + $0x560] sm:$0xff]
    %v381 = vld [vmem:[#allocation4 + $0x568] sm:$0xff]
    %v382 = vld [vmem:[#allocation4 + $0x570] sm:$0xff]
    %v383 = vld [vmem:[#allocation4 + $0x578] sm:$0xff]
    %v384 = vld [vmem:[#allocation4 + $0x580] sm:$0xff]
    %v385 = vld [vmem:[#allocation4 + $0x588] sm:$0xff]
    %v386 = vld [vmem:[#allocation4 + $0x590] sm:$0xff]
    %v387 = vld [vmem:[#allocation4 + $0x598] sm:$0xff]
    %v388 = vld [vmem:[#allocation4 + $0x5a0] sm:$0xff]
    %v389 = vld [vmem:[#allocation4 + $0x5a8] sm:$0xff]
    %v390 = vld [vmem:[#allocation4 + $0x5b0] sm:$0xff]
    %v391 = vld [vmem:[#allocation4 + $0x5b8] sm:$0xff]
    %v392 = vld [vmem:[#allocation4 + $0x5c0] sm:$0xff]
    %v393 = vld [vmem:[#allocation4 + $0x5c8] sm:$0xff]
    %v394 = vld [vmem:[#allocation4 + $0x5d0] sm:$0xff]
    %v395 = vld [vmem:[#allocation4 + $0x5d8] sm:$0xff]
    %v396 = vld [vmem:[#allocation4 + $0x5e0] sm:$0xff]
    %v397 = vld [vmem:[#allocation4 + $0x5e8] sm:$0xff]
    %v398 = vld [vmem:[#allocation4 + $0x5f0] sm:$0xff]
    %v399 = vld [vmem:[#allocation4 + $0x5f8] sm:$0xff]
    %v592 = vunpack.c.l.b16 %v208
    %v593 = vunpack.c.h.b16 %v208
    %v594 = vunpack.c.l.b16 %v209
    %v595 = vunpack.c.h.b16 %v209
    %v596 = vunpack.c.l.b16 %v210
    %v597 = vunpack.c.h.b16 %v210
    %v598 = vunpack.c.l.b16 %v211
    %v599 = vunpack.c.h.b16 %v211
    %v600 = vunpack.c.l.b16 %v212
    %v601 = vunpack.c.h.b16 %v212
    %v602 = vunpack.c.l.b16 %v213
    %v603 = vunpack.c.h.b16 %v213
    %v604 = vunpack.c.l.b16 %v214
    %v605 = vunpack.c.h.b16 %v214
    %v606 = vunpack.c.l.b16 %v215
    %v607 = vunpack.c.h.b16 %v215
    %v608 = vunpack.c.l.b16 %v216
    %v609 = vunpack.c.h.b16 %v216
    %v610 = vunpack.c.l.b16 %v217
    %v611 = vunpack.c.h.b16 %v217
    %v612 = vunpack.c.l.b16 %v218
    %v613 = vunpack.c.h.b16 %v218
    %v614 = vunpack.c.l.b16 %v219
    %v615 = vunpack.c.h.b16 %v219
    %v616 = vunpack.c.l.b16 %v220
    %v617 = vunpack.c.h.b16 %v220
    %v618 = vunpack.c.l.b16 %v221
    %v619 = vunpack.c.h.b16 %v221
    %v620 = vunpack.c.l.b16 %v222
    %v621 = vunpack.c.h.b16 %v222
    %v622 = vunpack.c.l.b16 %v223
    %v623 = vunpack.c.h.b16 %v223
    %v624 = vunpack.c.l.b16 %v224
    %v625 = vunpack.c.h.b16 %v224
    %v626 = vunpack.c.l.b16 %v225
    %v627 = vunpack.c.h.b16 %v225
    %v628 = vunpack.c.l.b16 %v226
    %v629 = vunpack.c.h.b16 %v226
    %v630 = vunpack.c.l.b16 %v227
    %v631 = vunpack.c.h.b16 %v227
    %v632 = vunpack.c.l.b16 %v228
    %v633 = vunpack.c.h.b16 %v228
    %v634 = vunpack.c.l.b16 %v229
    %v635 = vunpack.c.h.b16 %v229
    %v636 = vunpack.c.l.b16 %v230
    %v637 = vunpack.c.h.b16 %v230
    %v638 = vunpack.c.l.b16 %v231
    %v639 = vunpack.c.h.b16 %v231
    %v640 = vunpack.c.l.b16 %v232
    %v641 = vunpack.c.h.b16 %v232
    %v642 = vunpack.c.l.b16 %v233
    %v643 = vunpack.c.h.b16 %v233
    %v644 = vunpack.c.l.b16 %v234
    %v645 = vunpack.c.h.b16 %v234
    %v646 = vunpack.c.l.b16 %v235
    %v647 = vunpack.c.h.b16 %v235
    %v648 = vunpack.c.l.b16 %v236
    %v649 = vunpack.c.h.b16 %v236
    %v650 = vunpack.c.l.b16 %v237
    %v651 = vunpack.c.h.b16 %v237
    %v652 = vunpack.c.l.b16 %v238
    %v653 = vunpack.c.h.b16 %v238
    %v654 = vunpack.c.l.b16 %v239
    %v655 = vunpack.c.h.b16 %v239
    %v656 = vunpack.c.l.b16 %v240
    %v657 = vunpack.c.h.b16 %v240
    %v658 = vunpack.c.l.b16 %v241
    %v659 = vunpack.c.h.b16 %v241
    %v660 = vunpack.c.l.b16 %v242
    %v661 = vunpack.c.h.b16 %v242
    %v662 = vunpack.c.l.b16 %v243
    %v663 = vunpack.c.h.b16 %v243
    %v664 = vunpack.c.l.b16 %v244
    %v665 = vunpack.c.h.b16 %v244
    %v666 = vunpack.c.l.b16 %v245
    %v667 = vunpack.c.h.b16 %v245
    %v668 = vunpack.c.l.b16 %v246
    %v669 = vunpack.c.h.b16 %v246
    %v670 = vunpack.c.l.b16 %v247
    %v671 = vunpack.c.h.b16 %v247
    %v672 = vunpack.c.l.b16 %v248
    %v673 = vunpack.c.h.b16 %v248
    %v674 = vunpack.c.l.b16 %v249
    %v675 = vunpack.c.h.b16 %v249
    %v676 = vunpack.c.l.b16 %v250
    %v677 = vunpack.c.h.b16 %v250
    %v678 = vunpack.c.l.b16 %v251
    %v679 = vunpack.c.h.b16 %v251
    %v680 = vunpack.c.l.b16 %v252
    %v681 = vunpack.c.h.b16 %v252
    %v682 = vunpack.c.l.b16 %v253
    %v683 = vunpack.c.h.b16 %v253
    %v684 = vunpack.c.l.b16 %v254
    %v685 = vunpack.c.h.b16 %v254
    %v686 = vunpack.c.l.b16 %v255
    %v687 = vunpack.c.h.b16 %v255
    %v688 = vunpack.c.l.b16 %v256
    %v689 = vunpack.c.h.b16 %v256
    %v690 = vunpack.c.l.b16 %v257
    %v691 = vunpack.c.h.b16 %v257
    %v692 = vunpack.c.l.b16 %v258
    %v693 = vunpack.c.h.b16 %v258
    %v694 = vunpack.c.l.b16 %v259
    %v695 = vunpack.c.h.b16 %v259
    %v696 = vunpack.c.l.b16 %v260
    %v697 = vunpack.c.h.b16 %v260
    %v698 = vunpack.c.l.b16 %v261
    %v699 = vunpack.c.h.b16 %v261
    %v700 = vunpack.c.l.b16 %v262
    %v701 = vunpack.c.h.b16 %v262
    %v702 = vunpack.c.l.b16 %v263
    %v703 = vunpack.c.h.b16 %v263
    %v704 = vunpack.c.l.b16 %v264
    %v705 = vunpack.c.h.b16 %v264
    %v706 = vunpack.c.l.b16 %v265
    %v707 = vunpack.c.h.b16 %v265
    %v708 = vunpack.c.l.b16 %v266
    %v709 = vunpack.c.h.b16 %v266
    %v710 = vunpack.c.l.b16 %v267
    %v711 = vunpack.c.h.b16 %v267
    %v712 = vunpack.c.l.b16 %v268
    %v713 = vunpack.c.h.b16 %v268
    %v714 = vunpack.c.l.b16 %v269
    %v715 = vunpack.c.h.b16 %v269
    %v716 = vunpack.c.l.b16 %v270
    %v717 = vunpack.c.h.b16 %v270
    %v718 = vunpack.c.l.b16 %v271
    %v719 = vunpack.c.h.b16 %v271
    %v720 = vunpack.c.l.b16 %v272
    %v721 = vunpack.c.h.b16 %v272
    %v722 = vunpack.c.l.b16 %v273
    %v723 = vunpack.c.h.b16 %v273
    %v724 = vunpack.c.l.b16 %v274
    %v725 = vunpack.c.h.b16 %v274
    %v726 = vunpack.c.l.b16 %v275
    %v727 = vunpack.c.h.b16 %v275
    %v728 = vunpack.c.l.b16 %v276
    %v729 = vunpack.c.h.b16 %v276
    %v730 = vunpack.c.l.b16 %v277
    %v731 = vunpack.c.h.b16 %v277
    %v732 = vunpack.c.l.b16 %v278
    %v733 = vunpack.c.h.b16 %v278
    %v734 = vunpack.c.l.b16 %v279
    %v735 = vunpack.c.h.b16 %v279
    %v736 = vunpack.c.l.b16 %v280
    %v737 = vunpack.c.h.b16 %v280
    %v738 = vunpack.c.l.b16 %v281
    %v739 = vunpack.c.h.b16 %v281
    %v740 = vunpack.c.l.b16 %v282
    %v741 = vunpack.c.h.b16 %v282
    %v742 = vunpack.c.l.b16 %v283
    %v743 = vunpack.c.h.b16 %v283
    %v744 = vunpack.c.l.b16 %v284
    %v745 = vunpack.c.h.b16 %v284
    %v746 = vunpack.c.l.b16 %v285
    %v747 = vunpack.c.h.b16 %v285
    %v748 = vunpack.c.l.b16 %v286
    %v749 = vunpack.c.h.b16 %v286
    %v750 = vunpack.c.l.b16 %v287
    %v751 = vunpack.c.h.b16 %v287
    %v752 = vunpack.c.l.b16 %v288
    %v753 = vunpack.c.h.b16 %v288
    %v754 = vunpack.c.l.b16 %v289
    %v755 = vunpack.c.h.b16 %v289
    %v756 = vunpack.c.l.b16 %v290
    %v757 = vunpack.c.h.b16 %v290
    %v758 = vunpack.c.l.b16 %v291
    %v759 = vunpack.c.h.b16 %v291
    %v760 = vunpack.c.l.b16 %v292
    %v761 = vunpack.c.h.b16 %v292
    %v762 = vunpack.c.l.b16 %v293
    %v763 = vunpack.c.h.b16 %v293
    %v764 = vunpack.c.l.b16 %v294
    %v765 = vunpack.c.h.b16 %v294
    %v766 = vunpack.c.l.b16 %v295
    %v767 = vunpack.c.h.b16 %v295
    %v768 = vunpack.c.l.b16 %v296
    %v769 = vunpack.c.h.b16 %v296
    %v770 = vunpack.c.l.b16 %v297
    %v771 = vunpack.c.h.b16 %v297
    %v772 = vunpack.c.l.b16 %v298
    %v773 = vunpack.c.h.b16 %v298
    %v774 = vunpack.c.l.b16 %v299
    %v775 = vunpack.c.h.b16 %v299
    %v776 = vunpack.c.l.b16 %v300
    %v777 = vunpack.c.h.b16 %v300
    %v778 = vunpack.c.l.b16 %v301
    %v779 = vunpack.c.h.b16 %v301
    %v780 = vunpack.c.l.b16 %v302
    %v781 = vunpack.c.h.b16 %v302
    %v782 = vunpack.c.l.b16 %v303
    %v783 = vunpack.c.h.b16 %v303
    %v784 = vunpack.c.l.b16 %v304
    %v785 = vunpack.c.h.b16 %v304
    %v786 = vunpack.c.l.b16 %v305
    %v787 = vunpack.c.h.b16 %v305
    %v788 = vunpack.c.l.b16 %v306
    %v789 = vunpack.c.h.b16 %v306
    %v790 = vunpack.c.l.b16 %v307
    %v791 = vunpack.c.h.b16 %v307
    %v792 = vunpack.c.l.b16 %v308
    %v793 = vunpack.c.h.b16 %v308
    %v794 = vunpack.c.l.b16 %v309
    %v795 = vunpack.c.h.b16 %v309
    %v796 = vunpack.c.l.b16 %v310
    %v797 = vunpack.c.h.b16 %v310
    %v798 = vunpack.c.l.b16 %v311
    %v799 = vunpack.c.h.b16 %v311
    %v800 = vunpack.c.l.b16 %v312
    %v801 = vunpack.c.h.b16 %v312
    %v802 = vunpack.c.l.b16 %v313
    %v803 = vunpack.c.h.b16 %v313
    %v804 = vunpack.c.l.b16 %v314
    %v805 = vunpack.c.h.b16 %v314
    %v806 = vunpack.c.l.b16 %v315
    %v807 = vunpack.c.h.b16 %v315
    %v808 = vunpack.c.l.b16 %v316
    %v809 = vunpack.c.h.b16 %v316
    %v810 = vunpack.c.l.b16 %v317
    %v811 = vunpack.c.h.b16 %v317
    %v812 = vunpack.c.l.b16 %v318
    %v813 = vunpack.c.h.b16 %v318
    %v814 = vunpack.c.l.b16 %v319
    %v815 = vunpack.c.h.b16 %v319
    %v816 = vunpack.c.l.b16 %v320
    %v817 = vunpack.c.h.b16 %v320
    %v818 = vunpack.c.l.b16 %v321
    %v819 = vunpack.c.h.b16 %v321
    %v820 = vunpack.c.l.b16 %v322
    %v821 = vunpack.c.h.b16 %v322
    %v822 = vunpack.c.l.b16 %v323
    %v823 = vunpack.c.h.b16 %v323
    %v824 = vunpack.c.l.b16 %v324
    %v825 = vunpack.c.h.b16 %v324
    %v826 = vunpack.c.l.b16 %v325
    %v827 = vunpack.c.h.b16 %v325
    %v828 = vunpack.c.l.b16 %v326
    %v829 = vunpack.c.h.b16 %v326
    %v830 = vunpack.c.l.b16 %v327
    %v831 = vunpack.c.h.b16 %v327
    %v832 = vunpack.c.l.b16 %v328
    %v833 = vunpack.c.h.b16 %v328
    %v834 = vunpack.c.l.b16 %v329
    %v835 = vunpack.c.h.b16 %v329
    %v836 = vunpack.c.l.b16 %v330
    %v837 = vunpack.c.h.b16 %v330
    %v838 = vunpack.c.l.b16 %v331
    %v839 = vunpack.c.h.b16 %v331
    %v840 = vunpack.c.l.b16 %v332
    %v841 = vunpack.c.h.b16 %v332
    %v842 = vunpack.c.l.b16 %v333
    %v843 = vunpack.c.h.b16 %v333
    %v844 = vunpack.c.l.b16 %v334
    %v845 = vunpack.c.h.b16 %v334
    %v846 = vunpack.c.l.b16 %v335
    %v847 = vunpack.c.h.b16 %v335
    %v848 = vunpack.c.l.b16 %v336
    %v849 = vunpack.c.h.b16 %v336
    %v850 = vunpack.c.l.b16 %v337
    %v851 = vunpack.c.h.b16 %v337
    %v852 = vunpack.c.l.b16 %v338
    %v853 = vunpack.c.h.b16 %v338
    %v854 = vunpack.c.l.b16 %v339
    %v855 = vunpack.c.h.b16 %v339
    %v856 = vunpack.c.l.b16 %v340
    %v857 = vunpack.c.h.b16 %v340
    %v858 = vunpack.c.l.b16 %v341
    %v859 = vunpack.c.h.b16 %v341
    %v860 = vunpack.c.l.b16 %v342
    %v861 = vunpack.c.h.b16 %v342
    %v862 = vunpack.c.l.b16 %v343
    %v863 = vunpack.c.h.b16 %v343
    %v864 = vunpack.c.l.b16 %v344
    %v865 = vunpack.c.h.b16 %v344
    %v866 = vunpack.c.l.b16 %v345
    %v867 = vunpack.c.h.b16 %v345
    %v868 = vunpack.c.l.b16 %v346
    %v869 = vunpack.c.h.b16 %v346
    %v870 = vunpack.c.l.b16 %v347
    %v871 = vunpack.c.h.b16 %v347
    %v872 = vunpack.c.l.b16 %v348
    %v873 = vunpack.c.h.b16 %v348
    %v874 = vunpack.c.l.b16 %v349
    %v875 = vunpack.c.h.b16 %v349
    %v876 = vunpack.c.l.b16 %v350
    %v877 = vunpack.c.h.b16 %v350
    %v878 = vunpack.c.l.b16 %v351
    %v879 = vunpack.c.h.b16 %v351
    %v880 = vunpack.c.l.b16 %v352
    %v881 = vunpack.c.h.b16 %v352
    %v882 = vunpack.c.l.b16 %v353
    %v883 = vunpack.c.h.b16 %v353
    %v884 = vunpack.c.l.b16 %v354
    %v885 = vunpack.c.h.b16 %v354
    %v886 = vunpack.c.l.b16 %v355
    %v887 = vunpack.c.h.b16 %v355
    %v888 = vunpack.c.l.b16 %v356
    %v889 = vunpack.c.h.b16 %v356
    %v890 = vunpack.c.l.b16 %v357
    %v891 = vunpack.c.h.b16 %v357
    %v892 = vunpack.c.l.b16 %v358
    %v893 = vunpack.c.h.b16 %v358
    %v894 = vunpack.c.l.b16 %v359
    %v895 = vunpack.c.h.b16 %v359
    %v896 = vunpack.c.l.b16 %v360
    %v897 = vunpack.c.h.b16 %v360
    %v898 = vunpack.c.l.b16 %v361
    %v899 = vunpack.c.h.b16 %v361
    %v900 = vunpack.c.l.b16 %v362
    %v901 = vunpack.c.h.b16 %v362
    %v902 = vunpack.c.l.b16 %v363
    %v903 = vunpack.c.h.b16 %v363
    %v904 = vunpack.c.l.b16 %v364
    %v905 = vunpack.c.h.b16 %v364
    %v906 = vunpack.c.l.b16 %v365
    %v907 = vunpack.c.h.b16 %v365
    %v908 = vunpack.c.l.b16 %v366
    %v909 = vunpack.c.h.b16 %v366
    %v910 = vunpack.c.l.b16 %v367
    %v911 = vunpack.c.h.b16 %v367
    %v912 = vunpack.c.l.b16 %v368
    %v913 = vunpack.c.h.b16 %v368
    %v914 = vunpack.c.l.b16 %v369
    %v915 = vunpack.c.h.b16 %v369
    %v916 = vunpack.c.l.b16 %v370
    %v917 = vunpack.c.h.b16 %v370
    %v918 = vunpack.c.l.b16 %v371
    %v919 = vunpack.c.h.b16 %v371
    %v920 = vunpack.c.l.b16 %v372
    %v921 = vunpack.c.h.b16 %v372
    %v922 = vunpack.c.l.b16 %v373
    %v923 = vunpack.c.h.b16 %v373
    %v924 = vunpack.c.l.b16 %v374
    %v925 = vunpack.c.h.b16 %v374
    %v926 = vunpack.c.l.b16 %v375
    %v927 = vunpack.c.h.b16 %v375
    %v928 = vunpack.c.l.b16 %v376
    %v929 = vunpack.c.h.b16 %v376
    %v930 = vunpack.c.l.b16 %v377
    %v931 = vunpack.c.h.b16 %v377
    %v932 = vunpack.c.l.b16 %v378
    %v933 = vunpack.c.h.b16 %v378
    %v934 = vunpack.c.l.b16 %v379
    %v935 = vunpack.c.h.b16 %v379
    %v936 = vunpack.c.l.b16 %v380
    %v937 = vunpack.c.h.b16 %v380
    %v938 = vunpack.c.l.b16 %v381
    %v939 = vunpack.c.h.b16 %v381
    %v940 = vunpack.c.l.b16 %v382
    %v941 = vunpack.c.h.b16 %v382
    %v942 = vunpack.c.l.b16 %v383
    %v943 = vunpack.c.h.b16 %v383
    %v944 = vunpack.c.l.b16 %v384
    %v945 = vunpack.c.h.b16 %v384
    %v946 = vunpack.c.l.b16 %v385
    %v947 = vunpack.c.h.b16 %v385
    %v948 = vunpack.c.l.b16 %v386
    %v949 = vunpack.c.h.b16 %v386
    %v950 = vunpack.c.l.b16 %v387
    %v951 = vunpack.c.h.b16 %v387
    %v952 = vunpack.c.l.b16 %v388
    %v953 = vunpack.c.h.b16 %v388
    %v954 = vunpack.c.l.b16 %v389
    %v955 = vunpack.c.h.b16 %v389
    %v956 = vunpack.c.l.b16 %v390
    %v957 = vunpack.c.h.b16 %v390
    %v958 = vunpack.c.l.b16 %v391
    %v959 = vunpack.c.h.b16 %v391
    %v960 = vunpack.c.l.b16 %v392
    %v961 = vunpack.c.h.b16 %v392
    %v962 = vunpack.c.l.b16 %v393
    %v963 = vunpack.c.h.b16 %v393
    %v964 = vunpack.c.l.b16 %v394
    %v965 = vunpack.c.h.b16 %v394
    %v966 = vunpack.c.l.b16 %v395
    %v967 = vunpack.c.h.b16 %v395
    %v968 = vunpack.c.l.b16 %v396
    %v969 = vunpack.c.h.b16 %v396
    %v970 = vunpack.c.l.b16 %v397
    %v971 = vunpack.c.h.b16 %v397
    %v972 = vunpack.c.l.b16 %v398
    %v973 = vunpack.c.h.b16 %v398
    %v974 = vunpack.c.l.b16 %v399
    %v975 = vunpack.c.h.b16 %v399
    %v976 = vpack.c.b16 %v596, %v592
    %v977 = vpack.c.b16 %v597, %v593
    %v978 = vpack.c.b16 %v598, %v594
    %v979 = vpack.c.b16 %v599, %v595
    %v980 = vpack.c.b16 %v604, %v600
    %v981 = vpack.c.b16 %v605, %v601
    %v982 = vpack.c.b16 %v606, %v602
    %v983 = vpack.c.b16 %v607, %v603
    %v984 = vpack.c.b16 %v612, %v608
    %v985 = vpack.c.b16 %v613, %v609
    %v986 = vpack.c.b16 %v614, %v610
    %v987 = vpack.c.b16 %v615, %v611
    %v988 = vpack.c.b16 %v620, %v616
    %v989 = vpack.c.b16 %v621, %v617
    %v990 = vpack.c.b16 %v622, %v618
    %v991 = vpack.c.b16 %v623, %v619
    %v992 = vpack.c.b16 %v628, %v624
    %v993 = vpack.c.b16 %v629, %v625
    %v994 = vpack.c.b16 %v630, %v626
    %v995 = vpack.c.b16 %v631, %v627
    %v996 = vpack.c.b16 %v636, %v632
    %v997 = vpack.c.b16 %v637, %v633
    %v998 = vpack.c.b16 %v638, %v634
    %v999 = vpack.c.b16 %v639, %v635
    %v1000 = vpack.c.b16 %v644, %v640
    %v1001 = vpack.c.b16 %v645, %v641
    %v1002 = vpack.c.b16 %v646, %v642
    %v1003 = vpack.c.b16 %v647, %v643
    %v1004 = vpack.c.b16 %v652, %v648
    %v1005 = vpack.c.b16 %v653, %v649
    %v1006 = vpack.c.b16 %v654, %v650
    %v1007 = vpack.c.b16 %v655, %v651
    %v1008 = vpack.c.b16 %v660, %v656
    %v1009 = vpack.c.b16 %v661, %v657
    %v1010 = vpack.c.b16 %v662, %v658
    %v1011 = vpack.c.b16 %v663, %v659
    %v1012 = vpack.c.b16 %v668, %v664
    %v1013 = vpack.c.b16 %v669, %v665
    %v1014 = vpack.c.b16 %v670, %v666
    %v1015 = vpack.c.b16 %v671, %v667
    %v1016 = vpack.c.b16 %v676, %v672
    %v1017 = vpack.c.b16 %v677, %v673
    %v1018 = vpack.c.b16 %v678, %v674
    %v1019 = vpack.c.b16 %v679, %v675
    %v1020 = vpack.c.b16 %v684, %v680
    %v1021 = vpack.c.b16 %v685, %v681
    %v1022 = vpack.c.b16 %v686, %v682
    %v1023 = vpack.c.b16 %v687, %v683
    %v1024 = vpack.c.b16 %v692, %v688
    %v1025 = vpack.c.b16 %v693, %v689
    %v1026 = vpack.c.b16 %v694, %v690
    %v1027 = vpack.c.b16 %v695, %v691
    %v1028 = vpack.c.b16 %v700, %v696
    %v1029 = vpack.c.b16 %v701, %v697
    %v1030 = vpack.c.b16 %v702, %v698
    %v1031 = vpack.c.b16 %v703, %v699
    %v1032 = vpack.c.b16 %v708, %v704
    %v1033 = vpack.c.b16 %v709, %v705
    %v1034 = vpack.c.b16 %v710, %v706
    %v1035 = vpack.c.b16 %v711, %v707
    %v1036 = vpack.c.b16 %v716, %v712
    %v1037 = vpack.c.b16 %v717, %v713
    %v1038 = vpack.c.b16 %v718, %v714
    %v1039 = vpack.c.b16 %v719, %v715
    %v1040 = vpack.c.b16 %v724, %v720
    %v1041 = vpack.c.b16 %v725, %v721
    %v1042 = vpack.c.b16 %v726, %v722
    %v1043 = vpack.c.b16 %v727, %v723
    %v1044 = vpack.c.b16 %v732, %v728
    %v1045 = vpack.c.b16 %v733, %v729
    %v1046 = vpack.c.b16 %v734, %v730
    %v1047 = vpack.c.b16 %v735, %v731
    %v1048 = vpack.c.b16 %v740, %v736
    %v1049 = vpack.c.b16 %v741, %v737
    %v1050 = vpack.c.b16 %v742, %v738
    %v1051 = vpack.c.b16 %v743, %v739
    %v1052 = vpack.c.b16 %v748, %v744
    %v1053 = vpack.c.b16 %v749, %v745
    %v1054 = vpack.c.b16 %v750, %v746
    %v1055 = vpack.c.b16 %v751, %v747
    %v1056 = vpack.c.b16 %v756, %v752
    %v1057 = vpack.c.b16 %v757, %v753
    %v1058 = vpack.c.b16 %v758, %v754
    %v1059 = vpack.c.b16 %v759, %v755
    %v1060 = vpack.c.b16 %v764, %v760
    %v1061 = vpack.c.b16 %v765, %v761
    %v1062 = vpack.c.b16 %v766, %v762
    %v1063 = vpack.c.b16 %v767, %v763
    %v1064 = vpack.c.b16 %v772, %v768
    %v1065 = vpack.c.b16 %v773, %v769
    %v1066 = vpack.c.b16 %v774, %v770
    %v1067 = vpack.c.b16 %v775, %v771
    %v1068 = vpack.c.b16 %v780, %v776
    %v1069 = vpack.c.b16 %v781, %v777
    %v1070 = vpack.c.b16 %v782, %v778
    %v1071 = vpack.c.b16 %v783, %v779
    %v1072 = vpack.c.b16 %v788, %v784
    %v1073 = vpack.c.b16 %v789, %v785
    %v1074 = vpack.c.b16 %v790, %v786
    %v1075 = vpack.c.b16 %v791, %v787
    %v1076 = vpack.c.b16 %v796, %v792
    %v1077 = vpack.c.b16 %v797, %v793
    %v1078 = vpack.c.b16 %v798, %v794
    %v1079 = vpack.c.b16 %v799, %v795
    %v1080 = vpack.c.b16 %v804, %v800
    %v1081 = vpack.c.b16 %v805, %v801
    %v1082 = vpack.c.b16 %v806, %v802
    %v1083 = vpack.c.b16 %v807, %v803
    %v1084 = vpack.c.b16 %v812, %v808
    %v1085 = vpack.c.b16 %v813, %v809
    %v1086 = vpack.c.b16 %v814, %v810
    %v1087 = vpack.c.b16 %v815, %v811
    %v1088 = vpack.c.b16 %v820, %v816
    %v1089 = vpack.c.b16 %v821, %v817
    %v1090 = vpack.c.b16 %v822, %v818
    %v1091 = vpack.c.b16 %v823, %v819
    %v1092 = vpack.c.b16 %v828, %v824
    %v1093 = vpack.c.b16 %v829, %v825
    %v1094 = vpack.c.b16 %v830, %v826
    %v1095 = vpack.c.b16 %v831, %v827
    %v1096 = vpack.c.b16 %v836, %v832
    %v1097 = vpack.c.b16 %v837, %v833
    %v1098 = vpack.c.b16 %v838, %v834
    %v1099 = vpack.c.b16 %v839, %v835
    %v1100 = vpack.c.b16 %v844, %v840
    %v1101 = vpack.c.b16 %v845, %v841
    %v1102 = vpack.c.b16 %v846, %v842
    %v1103 = vpack.c.b16 %v847, %v843
    %v1104 = vpack.c.b16 %v852, %v848
    %v1105 = vpack.c.b16 %v853, %v849
    %v1106 = vpack.c.b16 %v854, %v850
    %v1107 = vpack.c.b16 %v855, %v851
    %v1108 = vpack.c.b16 %v860, %v856
    %v1109 = vpack.c.b16 %v861, %v857
    %v1110 = vpack.c.b16 %v862, %v858
    %v1111 = vpack.c.b16 %v863, %v859
    %v1112 = vpack.c.b16 %v868, %v864
    %v1113 = vpack.c.b16 %v869, %v865
    %v1114 = vpack.c.b16 %v870, %v866
    %v1115 = vpack.c.b16 %v871, %v867
    %v1116 = vpack.c.b16 %v876, %v872
    %v1117 = vpack.c.b16 %v877, %v873
    %v1118 = vpack.c.b16 %v878, %v874
    %v1119 = vpack.c.b16 %v879, %v875
    %v1120 = vpack.c.b16 %v884, %v880
    %v1121 = vpack.c.b16 %v885, %v881
    %v1122 = vpack.c.b16 %v886, %v882
    %v1123 = vpack.c.b16 %v887, %v883
    %v1124 = vpack.c.b16 %v892, %v888
    %v1125 = vpack.c.b16 %v893, %v889
    %v1126 = vpack.c.b16 %v894, %v890
    %v1127 = vpack.c.b16 %v895, %v891
    %v1128 = vpack.c.b16 %v900, %v896
    %v1129 = vpack.c.b16 %v901, %v897
    %v1130 = vpack.c.b16 %v902, %v898
    %v1131 = vpack.c.b16 %v903, %v899
    %v1132 = vpack.c.b16 %v908, %v904
    %v1133 = vpack.c.b16 %v909, %v905
    %v1134 = vpack.c.b16 %v910, %v906
    %v1135 = vpack.c.b16 %v911, %v907
    %v1136 = vpack.c.b16 %v916, %v912
    %v1137 = vpack.c.b16 %v917, %v913
    %v1138 = vpack.c.b16 %v918, %v914
    %v1139 = vpack.c.b16 %v919, %v915
    %v1140 = vpack.c.b16 %v924, %v920
    %v1141 = vpack.c.b16 %v925, %v921
    %v1142 = vpack.c.b16 %v926, %v922
    %v1143 = vpack.c.b16 %v927, %v923
    %v1144 = vpack.c.b16 %v932, %v928
    %v1145 = vpack.c.b16 %v933, %v929
    %v1146 = vpack.c.b16 %v934, %v930
    %v1147 = vpack.c.b16 %v935, %v931
    %v1148 = vpack.c.b16 %v940, %v936
    %v1149 = vpack.c.b16 %v941, %v937
    %v1150 = vpack.c.b16 %v942, %v938
    %v1151 = vpack.c.b16 %v943, %v939
    %v1152 = vpack.c.b16 %v948, %v944
    %v1153 = vpack.c.b16 %v949, %v945
    %v1154 = vpack.c.b16 %v950, %v946
    %v1155 = vpack.c.b16 %v951, %v947
    %v1156 = vpack.c.b16 %v956, %v952
    %v1157 = vpack.c.b16 %v957, %v953
    %v1158 = vpack.c.b16 %v958, %v954
    %v1159 = vpack.c.b16 %v959, %v955
    %v1160 = vpack.c.b16 %v964, %v960
    %v1161 = vpack.c.b16 %v965, %v961
    %v1162 = vpack.c.b16 %v966, %v962
    %v1163 = vpack.c.b16 %v967, %v963
    %v1164 = vpack.c.b16 %v972, %v968
    %v1165 = vpack.c.b16 %v973, %v969
    %v1166 = vpack.c.b16 %v974, %v970
    %v1167 = vpack.c.b16 %v975, %v971
    %1360 = vmatprep.subr.bf16.mxu0 %v977
    %1361 = vmatpush1.bf16.msra.mxu0 %v976
    %1362 = vmatprep.subr.bf16.mxu0 %v981
    %1363 = vmatpush1.bf16.msra.mxu0 %v980
    %1364 = vmatprep.subr.bf16.mxu0 %v985
    %1365 = vmatpush1.bf16.msra.mxu0 %v984
    %1366 = vmatprep.subr.bf16.mxu0 %v989
    %1367 = vmatpush1.bf16.msra.mxu0 %v988
    %1368 = vmatprep.subr.bf16.mxu0 %v993
    %1369 = vmatpush1.bf16.msra.mxu0 %v992
    %1370 = vmatprep.subr.bf16.mxu0 %v997
    %1371 = vmatpush1.bf16.msra.mxu0 %v996
    %1372 = vmatprep.subr.bf16.mxu0 %v1001
    %1373 = vmatpush1.bf16.msra.mxu0 %v1000
    %1374 = vmatprep.subr.bf16.mxu0 %v1005
    %1375 = vmatpush1.bf16.msra.mxu0 %v1004
    %1376 = vmatprep.subr.bf16.mxu0 %v1009
    %1377 = vmatpush1.bf16.msra.mxu0 %v1008
    %1378 = vmatprep.subr.bf16.mxu0 %v1013
    %1379 = vmatpush1.bf16.msra.mxu0 %v1012
    %1380 = vmatprep.subr.bf16.mxu0 %v1017
    %1381 = vmatpush1.bf16.msra.mxu0 %v1016
    %1382 = vmatprep.subr.bf16.mxu0 %v1021
    %1383 = vmatpush1.bf16.msra.mxu0 %v1020
    %1384 = vmatprep.subr.bf16.mxu0 %v1025
    %1385 = vmatpush1.bf16.msra.mxu0 %v1024
    %1386 = vmatprep.subr.bf16.mxu0 %v1029
    %1387 = vmatpush1.bf16.msra.mxu0 %v1028
    %1388 = vmatprep.subr.bf16.mxu0 %v1033
    %1389 = vmatpush1.bf16.msra.mxu0 %v1032
    %1390 = vmatprep.subr.bf16.mxu0 %v1037
    %1391 = vmatpush1.bf16.msra.mxu0 %v1036
    %1392 = vmatprep.mubr.bf16.mxu0 %v203
    %1393 = vmatmul.mubr.bf16.gmra.mrb[0].mxu0 %v202
    %v1394 = vpop.f32.mrb[0].mxu0
    %v1395 = vadd.f32 0.0, %v1394
    %v1396 = vpop.f32.mrb[0].mxu0
    %v1397 = vadd.f32 0.0, %v1396
    %v1398 = vpop.f32.mrb[0].mxu0
    %v1399 = vpop.f32.mrb[0].mxu0
    %1400 = vdwg.mxu0
    %1401 = vmatprep.subr.bf16.mxu0 %v1041
    %1402 = vmatpush1.bf16.msra.mxu0 %v1040
    %1403 = vmatprep.subr.bf16.mxu0 %v1045
    %1404 = vmatpush1.bf16.msra.mxu0 %v1044
    %1405 = vmatprep.subr.bf16.mxu0 %v1049
    %1406 = vmatpush1.bf16.msra.mxu0 %v1048
    %1407 = vmatprep.subr.bf16.mxu0 %v1053
    %1408 = vmatpush1.bf16.msra.mxu0 %v1052
    %1409 = vmatprep.subr.bf16.mxu0 %v1057
    %1410 = vmatpush1.bf16.msra.mxu0 %v1056
    %1411 = vmatprep.subr.bf16.mxu0 %v1061
    %1412 = vmatpush1.bf16.msra.mxu0 %v1060
    %1413 = vmatprep.subr.bf16.mxu0 %v1065
    %1414 = vmatpush1.bf16.msra.mxu0 %v1064
    %1415 = vmatprep.subr.bf16.mxu0 %v1069
    %1416 = vmatpush1.bf16.msra.mxu0 %v1068
    %1417 = vmatprep.subr.bf16.mxu0 %v1073
    %1418 = vmatpush1.bf16.msra.mxu0 %v1072
    %1419 = vmatprep.subr.bf16.mxu0 %v1077
    %1420 = vmatpush1.bf16.msra.mxu0 %v1076
    %1421 = vmatprep.subr.bf16.mxu0 %v1081
    %1422 = vmatpush1.bf16.msra.mxu0 %v1080
    %1423 = vmatprep.subr.bf16.mxu0 %v1085
    %1424 = vmatpush1.bf16.msra.mxu0 %v1084
    %1425 = vmatprep.subr.bf16.mxu0 %v1089
    %1426 = vmatpush1.bf16.msra.mxu0 %v1088
    %1427 = vmatprep.subr.bf16.mxu0 %v1093
    %1428 = vmatpush1.bf16.msra.mxu0 %v1092
    %1429 = vmatprep.subr.bf16.mxu0 %v1097
    %1430 = vmatpush1.bf16.msra.mxu0 %v1096
    %1431 = vmatprep.subr.bf16.mxu0 %v1101
    %1432 = vmatpush1.bf16.msra.mxu0 %v1100
    %1433 = vmatprep.mubr.bf16.mxu0 %v205
    %1434 = vmatmul.mubr.bf16.gmra.mrb[0].mxu0 %v204
    %v1435 = vpop.f32.mrb[0].mxu0
    %v1436 = vadd.f32 %v1395, %v1435
    %v1437 = vpop.f32.mrb[0].mxu0
    %v1438 = vadd.f32 %v1397, %v1437
    %v1439 = vpop.f32.mrb[0].mxu0
    %v1440 = vpop.f32.mrb[0].mxu0
    %1441 = vdwg.mxu0
    %1442 = vmatprep.subr.bf16.mxu0 %v1105
    %1443 = vmatpush1.bf16.msra.mxu0 %v1104
    %1444 = vmatprep.subr.bf16.mxu0 %v1109
    %1445 = vmatpush1.bf16.msra.mxu0 %v1108
    %1446 = vmatprep.subr.bf16.mxu0 %v1113
    %1447 = vmatpush1.bf16.msra.mxu0 %v1112
    %1448 = vmatprep.subr.bf16.mxu0 %v1117
    %1449 = vmatpush1.bf16.msra.mxu0 %v1116
    %1450 = vmatprep.subr.bf16.mxu0 %v1121
    %1451 = vmatpush1.bf16.msra.mxu0 %v1120
    %1452 = vmatprep.subr.bf16.mxu0 %v1125
    %1453 = vmatpush1.bf16.msra.mxu0 %v1124
    %1454 = vmatprep.subr.bf16.mxu0 %v1129
    %1455 = vmatpush1.bf16.msra.mxu0 %v1128
    %1456 = vmatprep.subr.bf16.mxu0 %v1133
    %1457 = vmatpush1.bf16.msra.mxu0 %v1132
    %1458 = vmatprep.subr.bf16.mxu0 %v1137
    %1459 = vmatpush1.bf16.msra.mxu0 %v1136
    %1460 = vmatprep.subr.bf16.mxu0 %v1141
    %1461 = vmatpush1.bf16.msra.mxu0 %v1140
    %1462 = vmatprep.subr.bf16.mxu0 %v1145
    %1463 = vmatpush1.bf16.msra.mxu0 %v1144
    %1464 = vmatprep.subr.bf16.mxu0 %v1149
    %1465 = vmatpush1.bf16.msra.mxu0 %v1148
    %1466 = vmatprep.subr.bf16.mxu0 %v1153
    %1467 = vmatpush1.bf16.msra.mxu0 %v1152
    %1468 = vmatprep.subr.bf16.mxu0 %v1157
    %1469 = vmatpush1.bf16.msra.mxu0 %v1156
    %1470 = vmatprep.subr.bf16.mxu0 %v1161
    %1471 = vmatpush1.bf16.msra.mxu0 %v1160
    %1472 = vmatprep.subr.bf16.mxu0 %v1165
    %1473 = vmatpush1.bf16.msra.mxu0 %v1164
    %1474 = vmatprep.mubr.bf16.mxu0 %v207
    %1475 = vmatmul.mubr.bf16.gmra.mrb[0].mxu0 %v206
    %v1476 = vpop.f32.mrb[0].mxu0
    %v1477 = vadd.f32 %v1436, %v1476
    %v1478 = vpop.f32.mrb[0].mxu0
    %v1479 = vadd.f32 %v1438, %v1478
    %v1480 = vpop.f32.mrb[0].mxu0
    %v1481 = vpop.f32.mrb[0].mxu0
    %1482 = vdwg.mxu0
    %1483 = vmatprep.subr.bf16.mxu0 %v979
    %1484 = vmatpush1.bf16.msra.mxu0 %v978
    %1485 = vmatprep.subr.bf16.mxu0 %v983
    %1486 = vmatpush1.bf16.msra.mxu0 %v982
    %1487 = vmatprep.subr.bf16.mxu0 %v987
    %1488 = vmatpush1.bf16.msra.mxu0 %v986
    %1489 = vmatprep.subr.bf16.mxu0 %v991
    %1490 = vmatpush1.bf16.msra.mxu0 %v990
    %1491 = vmatprep.subr.bf16.mxu0 %v995
    %1492 = vmatpush1.bf16.msra.mxu0 %v994
    %1493 = vmatprep.subr.bf16.mxu0 %v999
    %1494 = vmatpush1.bf16.msra.mxu0 %v998
    %1495 = vmatprep.subr.bf16.mxu0 %v1003
    %1496 = vmatpush1.bf16.msra.mxu0 %v1002
    %1497 = vmatprep.subr.bf16.mxu0 %v1007
    %1498 = vmatpush1.bf16.msra.mxu0 %v1006
    %1499 = vmatprep.subr.bf16.mxu0 %v1011
    %1500 = vmatpush1.bf16.msra.mxu0 %v1010
    %1501 = vmatprep.subr.bf16.mxu0 %v1015
    %1502 = vmatpush1.bf16.msra.mxu0 %v1014
    %1503 = vmatprep.subr.bf16.mxu0 %v1019
    %1504 = vmatpush1.bf16.msra.mxu0 %v1018
    %1505 = vmatprep.subr.bf16.mxu0 %v1023
    %1506 = vmatpush1.bf16.msra.mxu0 %v1022
    %1507 = vmatprep.subr.bf16.mxu0 %v1027
    %1508 = vmatpush1.bf16.msra.mxu0 %v1026
    %1509 = vmatprep.subr.bf16.mxu0 %v1031
    %1510 = vmatpush1.bf16.msra.mxu0 %v1030
    %1511 = vmatprep.subr.bf16.mxu0 %v1035
    %1512 = vmatpush1.bf16.msra.mxu0 %v1034
    %1513 = vmatprep.subr.bf16.mxu0 %v1039
    %1514 = vmatpush1.bf16.msra.mxu0 %v1038
    %1515 = vmatprep.mubr.bf16.mxu0 %v203
    %1516 = vmatmul.mubr.bf16.gmra.mrb[0].mxu0 %v202
    %v1517 = vpop.f32.mrb[0].mxu0
    %v1518 = vadd.f32 0.0, %v1517
    %v1519 = vpop.f32.mrb[0].mxu0
    %v1520 = vadd.f32 0.0, %v1519
    %v1521 = vpop.f32.mrb[0].mxu0
    %v1522 = vpop.f32.mrb[0].mxu0
    %1523 = vdwg.mxu0
    %1524 = vmatprep.subr.bf16.mxu0 %v1043
    %1525 = vmatpush1.bf16.msra.mxu0 %v1042
    %1526 = vmatprep.subr.bf16.mxu0 %v1047
    %1527 = vmatpush1.bf16.msra.mxu0 %v1046
    %1528 = vmatprep.subr.bf16.mxu0 %v1051
    %1529 = vmatpush1.bf16.msra.mxu0 %v1050
    %1530 = vmatprep.subr.bf16.mxu0 %v1055
    %1531 = vmatpush1.bf16.msra.mxu0 %v1054
    %1532 = vmatprep.subr.bf16.mxu0 %v1059
    %1533 = vmatpush1.bf16.msra.mxu0 %v1058
    %1534 = vmatprep.subr.bf16.mxu0 %v1063
    %1535 = vmatpush1.bf16.msra.mxu0 %v1062
    %1536 = vmatprep.subr.bf16.mxu0 %v1067
    %1537 = vmatpush1.bf16.msra.mxu0 %v1066
    %1538 = vmatprep.subr.bf16.mxu0 %v1071
    %1539 = vmatpush1.bf16.msra.mxu0 %v1070
    %1540 = vmatprep.subr.bf16.mxu0 %v1075
    %1541 = vmatpush1.bf16.msra.mxu0 %v1074
    %1542 = vmatprep.subr.bf16.mxu0 %v1079
    %1543 = vmatpush1.bf16.msra.mxu0 %v1078
    %1544 = vmatprep.subr.bf16.mxu0 %v1083
    %1545 = vmatpush1.bf16.msra.mxu0 %v1082
    %1546 = vmatprep.subr.bf16.mxu0 %v1087
    %1547 = vmatpush1.bf16.msra.mxu0 %v1086
    %1548 = vmatprep.subr.bf16.mxu0 %v1091
    %1549 = vmatpush1.bf16.msra.mxu0 %v1090
    %1550 = vmatprep.subr.bf16.mxu0 %v1095
    %1551 = vmatpush1.bf16.msra.mxu0 %v1094
    %1552 = vmatprep.subr.bf16.mxu0 %v1099
    %1553 = vmatpush1.bf16.msra.mxu0 %v1098
    %1554 = vmatprep.subr.bf16.mxu0 %v1103
    %1555 = vmatpush1.bf16.msra.mxu0 %v1102
    %1556 = vmatprep.mubr.bf16.mxu0 %v205
    %1557 = vmatmul.mubr.bf16.gmra.mrb[0].mxu0 %v204
    %v1558 = vpop.f32.mrb[0].mxu0
    %v1559 = vadd.f32 %v1518, %v1558
    %v1560 = vpop.f32.mrb[0].mxu0
    %v1561 = vadd.f32 %v1520, %v1560
    %v1562 = vpop.f32.mrb[0].mxu0
    %v1563 = vpop.f32.mrb[0].mxu0
    %1564 = vdwg.mxu0
    %1565 = vmatprep.subr.bf16.mxu0 %v1107
    %1566 = vmatpush1.bf16.msra.mxu0 %v1106
    %1567 = vmatprep.subr.bf16.mxu0 %v1111
    %1568 = vmatpush1.bf16.msra.mxu0 %v1110
    %1569 = vmatprep.subr.bf16.mxu0 %v1115
    %1570 = vmatpush1.bf16.msra.mxu0 %v1114
    %1571 = vmatprep.subr.bf16.mxu0 %v1119
    %1572 = vmatpush1.bf16.msra.mxu0 %v1118
    %1573 = vmatprep.subr.bf16.mxu0 %v1123
    %1574 = vmatpush1.bf16.msra.mxu0 %v1122
    %1575 = vmatprep.subr.bf16.mxu0 %v1127
    %1576 = vmatpush1.bf16.msra.mxu0 %v1126
    %1577 = vmatprep.subr.bf16.mxu0 %v1131
    %1578 = vmatpush1.bf16.msra.mxu0 %v1130
    %1579 = vmatprep.subr.bf16.mxu0 %v1135
    %1580 = vmatpush1.bf16.msra.mxu0 %v1134
    %1581 = vmatprep.subr.bf16.mxu0 %v1139
    %1582 = vmatpush1.bf16.msra.mxu0 %v1138
    %1583 = vmatprep.subr.bf16.mxu0 %v1143
    %1584 = vmatpush1.bf16.msra.mxu0 %v1142
    %1585 = vmatprep.subr.bf16.mxu0 %v1147
    %1586 = vmatpush1.bf16.msra.mxu0 %v1146
    %1587 = vmatprep.subr.bf16.mxu0 %v1151
    %1588 = vmatpush1.bf16.msra.mxu0 %v1150
    %1589 = vmatprep.subr.bf16.mxu0 %v1155
    %1590 = vmatpush1.bf16.msra.mxu0 %v1154
    %1591 = vmatprep.subr.bf16.mxu0 %v1159
    %1592 = vmatpush1.bf16.msra.mxu0 %v1158
    %1593 = vmatprep.subr.bf16.mxu0 %v1163
    %1594 = vmatpush1.bf16.msra.mxu0 %v1162
    %1595 = vmatprep.subr.bf16.mxu0 %v1167
    %1596 = vmatpush1.bf16.msra.mxu0 %v1166
    %1597 = vmatprep.mubr.bf16.mxu0 %v207
    %1598 = vmatmul.mubr.bf16.gmra.mrb[0].mxu0 %v206
    %v1599 = vpop.f32.mrb[0].mxu0
    %v1600 = vadd.f32 %v1559, %v1599
    %v1601 = vpop.f32.mrb[0].mxu0
    %v1602 = vadd.f32 %v1561, %v1601
    %v1603 = vpop.f32.mrb[0].mxu0
    %v1604 = vpop.f32.mrb[0].mxu0
    %1605 = vdwg.mxu0
    %v1606 = vld [vmem:[#allocation7] sm:$0xf]
    %v1608 = vlaneseq
    %v1609 = vshrl.u32 %v1608, 7
    %v1610 = vsub.s32 0, %v1609
    %v1611 = vrot.slane %v1606, %v1610
    %v1612 = vlaneseq
    %v1613 = vshrl.u32 %v1612, 7
    %v1614 = vsub.s32 1, %v1613
    %v1615 = vrot.slane %v1606, %v1614
    %v1616 = vlaneseq
    %v1617 = vshrl.u32 %v1616, 7
    %v1618 = vsub.s32 2, %v1617
    %v1619 = vrot.slane %v1606, %v1618
    %v1620 = vlaneseq
    %v1621 = vshrl.u32 %v1620, 7
    %v1622 = vsub.s32 3, %v1621
    %v1623 = vrot.slane %v1606, %v1622
    %v1628 = vmul.f32 %v1477, %v1611
    %v1629 = vmul.f32 %v1479, %v1615
    %v1630 = vmul.f32 %v1600, %v1619
    %v1631 = vmul.f32 %v1602, %v1623
    %v1632 = vld [vmem:[#allocation9] sm:$0xf]
    %v1634 = vlaneseq
    %v1635 = vshrl.u32 %v1634, 7
    %v1636 = vsub.s32 0, %v1635
    %v1637 = vrot.slane %v1632, %v1636
    %v1638 = vlaneseq
    %v1639 = vshrl.u32 %v1638, 7
    %v1640 = vsub.s32 1, %v1639
    %v1641 = vrot.slane %v1632, %v1640
    %v1642 = vlaneseq
    %v1643 = vshrl.u32 %v1642, 7
    %v1644 = vsub.s32 2, %v1643
    %v1645 = vrot.slane %v1632, %v1644
    %v1646 = vlaneseq
    %v1647 = vshrl.u32 %v1646, 7
    %v1648 = vsub.s32 3, %v1647
    %v1649 = vrot.slane %v1632, %v1648
    %v1654 = vadd.f32 %v1628, %v1637
    %v1655 = vadd.f32 %v1629, %v1641
    %v1656 = vadd.f32 %v1630, %v1645
    %v1657 = vadd.f32 %v1631, %v1649
    %v1658 = vmax.f32 %v1654, 0.0
    %v1659 = vmax.f32 %v1655, 0.0
    %v1660 = vmax.f32 %v1656, 0.0
    %v1661 = vmax.f32 %v1657, 0.0
    %v1662 = vld [vmem:[%s1] sm:$0xff]
    %v1663 = vld [vmem:[%s1 + $0x8] sm:$0xff]
    %v1664 = vld [vmem:[%s1 + $0x10] sm:$0xff]
    %v1665 = vld [vmem:[%s1 + $0x18] sm:$0xff]
    %v1666 = vld [vmem:[%s1 + $0x20] sm:$0xff]
    %v1667 = vld [vmem:[%s1 + $0x28] sm:$0xff]
    %v1668 = vpack.c.bf16 %v1662, %v1662
    %v1669 = vpack.c.bf16 %v1663, %v1663
    %v1670 = vpack.c.bf16 %v1664, %v1664
    %v1671 = vpack.c.bf16 %v1665, %v1665
    %v1672 = vpack.c.bf16 %v1666, %v1666
    %v1673 = vpack.c.bf16 %v1667, %v1667
    %v1674 = vld [vmem:[#allocation10] sm:$0xff]
    %v1675 = vld [vmem:[#allocation10 + $0x8] sm:$0xff]
    %v1676 = vld [vmem:[#allocation10 + $0x10] sm:$0xff]
    %v1677 = vld [vmem:[#allocation10 + $0x18] sm:$0xff]
    %v1678 = vld [vmem:[#allocation10 + $0x20] sm:$0xff]
    %v1679 = vld [vmem:[#allocation10 + $0x28] sm:$0xff]
    %v1680 = vld [vmem:[#allocation10 + $0x30] sm:$0xff]
    %v1681 = vld [vmem:[#allocation10 + $0x38] sm:$0xff]
    %v1682 = vld [vmem:[#allocation10 + $0x40] sm:$0xff]
    %v1683 = vld [vmem:[#allocation10 + $0x48] sm:$0xff]
    %v1684 = vld [vmem:[#allocation10 + $0x50] sm:$0xff]
    %v1685 = vld [vmem:[#allocation10 + $0x58] sm:$0xff]
    %v1686 = vld [vmem:[#allocation10 + $0x60] sm:$0xff]
    %v1687 = vld [vmem:[#allocation10 + $0x68] sm:$0xff]
    %v1688 = vld [vmem:[#allocation10 + $0x70] sm:$0xff]
    %v1689 = vld [vmem:[#allocation10 + $0x78] sm:$0xff]
    %v1690 = vld [vmem:[#allocation10 + $0x80] sm:$0xff]
    %v1691 = vld [vmem:[#allocation10 + $0x88] sm:$0xff]
    %v1692 = vld [vmem:[#allocation10 + $0x90] sm:$0xff]
    %v1693 = vld [vmem:[#allocation10 + $0x98] sm:$0xff]
    %v1694 = vld [vmem:[#allocation10 + $0xa0] sm:$0xff]
    %v1695 = vld [vmem:[#allocation10 + $0xa8] sm:$0xff]
    %v1696 = vld [vmem:[#allocation10 + $0xb0] sm:$0xff]
    %v1697 = vld [vmem:[#allocation10 + $0xb8] sm:$0xff]
    %v1698 = vld [vmem:[#allocation10 + $0xc0] sm:$0xff]
    %v1699 = vld [vmem:[#allocation10 + $0xc8] sm:$0xff]
    %v1700 = vld [vmem:[#allocation10 + $0xd0] sm:$0xff]
    %v1701 = vld [vmem:[#allocation10 + $0xd8] sm:$0xff]
    %v1702 = vld [vmem:[#allocation10 + $0xe0] sm:$0xff]
    %v1703 = vld [vmem:[#allocation10 + $0xe8] sm:$0xff]
    %v1704 = vld [vmem:[#allocation10 + $0xf0] sm:$0xff]
    %v1705 = vld [vmem:[#allocation10 + $0xf8] sm:$0xff]
    %v1706 = vld [vmem:[#allocation10 + $0x100] sm:$0xff]
    %v1707 = vld [vmem:[#allocation10 + $0x108] sm:$0xff]
    %v1708 = vld [vmem:[#allocation10 + $0x110] sm:$0xff]
    %v1709 = vld [vmem:[#allocation10 + $0x118] sm:$0xff]
    %v1710 = vld [vmem:[#allocation10 + $0x120] sm:$0xff]
    %v1711 = vld [vmem:[#allocation10 + $0x128] sm:$0xff]
    %v1712 = vld [vmem:[#allocation10 + $0x130] sm:$0xff]
    %v1713 = vld [vmem:[#allocation10 + $0x138] sm:$0xff]
    %v1714 = vld [vmem:[#allocation10 + $0x140] sm:$0xff]
    %v1715 = vld [vmem:[#allocation10 + $0x148] sm:$0xff]
    %v1716 = vld [vmem:[#allocation10 + $0x150] sm:$0xff]
    %v1717 = vld [vmem:[#allocation10 + $0x158] sm:$0xff]
    %v1718 = vld [vmem:[#allocation10 + $0x160] sm:$0xff]
    %v1719 = vld [vmem:[#allocation10 + $0x168] sm:$0xff]
    %v1720 = vld [vmem:[#allocation10 + $0x170] sm:$0xff]
    %v1721 = vld [vmem:[#allocation10 + $0x178] sm:$0xff]
    %v1722 = vld [vmem:[#allocation10 + $0x180] sm:$0xff]
    %v1723 = vld [vmem:[#allocation10 + $0x188] sm:$0xff]
    %v1724 = vld [vmem:[#allocation10 + $0x190] sm:$0xff]
    %v1725 = vld [vmem:[#allocation10 + $0x198] sm:$0xff]
    %v1726 = vld [vmem:[#allocation10 + $0x1a0] sm:$0xff]
    %v1727 = vld [vmem:[#allocation10 + $0x1a8] sm:$0xff]
    %v1728 = vld [vmem:[#allocation10 + $0x1b0] sm:$0xff]
    %v1729 = vld [vmem:[#allocation10 + $0x1b8] sm:$0xff]
    %v1730 = vld [vmem:[#allocation10 + $0x1c0] sm:$0xff]
    %v1731 = vld [vmem:[#allocation10 + $0x1c8] sm:$0xff]
    %v1732 = vld [vmem:[#allocation10 + $0x1d0] sm:$0xff]
    %v1733 = vld [vmem:[#allocation10 + $0x1d8] sm:$0xff]
    %v1734 = vld [vmem:[#allocation10 + $0x1e0] sm:$0xff]
    %v1735 = vld [vmem:[#allocation10 + $0x1e8] sm:$0xff]
    %v1736 = vld [vmem:[#allocation10 + $0x1f0] sm:$0xff]
    %v1737 = vld [vmem:[#allocation10 + $0x1f8] sm:$0xff]
    %v1738 = vld [vmem:[#allocation10 + $0x200] sm:$0xff]
    %v1739 = vld [vmem:[#allocation10 + $0x208] sm:$0xff]
    %v1740 = vld [vmem:[#allocation10 + $0x210] sm:$0xff]
    %v1741 = vld [vmem:[#allocation10 + $0x218] sm:$0xff]
    %v1742 = vld [vmem:[#allocation10 + $0x220] sm:$0xff]
    %v1743 = vld [vmem:[#allocation10 + $0x228] sm:$0xff]
    %v1744 = vld [vmem:[#allocation10 + $0x230] sm:$0xff]
    %v1745 = vld [vmem:[#allocation10 + $0x238] sm:$0xff]
    %v1746 = vld [vmem:[#allocation10 + $0x240] sm:$0xff]
    %v1747 = vld [vmem:[#allocation10 + $0x248] sm:$0xff]
    %v1748 = vld [vmem:[#allocation10 + $0x250] sm:$0xff]
    %v1749 = vld [vmem:[#allocation10 + $0x258] sm:$0xff]
    %v1750 = vld [vmem:[#allocation10 + $0x260] sm:$0xff]
    %v1751 = vld [vmem:[#allocation10 + $0x268] sm:$0xff]
    %v1752 = vld [vmem:[#allocation10 + $0x270] sm:$0xff]
    %v1753 = vld [vmem:[#allocation10 + $0x278] sm:$0xff]
    %v1754 = vld [vmem:[#allocation10 + $0x280] sm:$0xff]
    %v1755 = vld [vmem:[#allocation10 + $0x288] sm:$0xff]
    %v1756 = vld [vmem:[#allocation10 + $0x290] sm:$0xff]
    %v1757 = vld [vmem:[#allocation10 + $0x298] sm:$0xff]
    %v1758 = vld [vmem:[#allocation10 + $0x2a0] sm:$0xff]
    %v1759 = vld [vmem:[#allocation10 + $0x2a8] sm:$0xff]
    %v1760 = vld [vmem:[#allocation10 + $0x2b0] sm:$0xff]
    %v1761 = vld [vmem:[#allocation10 + $0x2b8] sm:$0xff]
    %v1762 = vld [vmem:[#allocation10 + $0x2c0] sm:$0xff]
    %v1763 = vld [vmem:[#allocation10 + $0x2c8] sm:$0xff]
    %v1764 = vld [vmem:[#allocation10 + $0x2d0] sm:$0xff]
    %v1765 = vld [vmem:[#allocation10 + $0x2d8] sm:$0xff]
    %v1766 = vld [vmem:[#allocation10 + $0x2e0] sm:$0xff]
    %v1767 = vld [vmem:[#allocation10 + $0x2e8] sm:$0xff]
    %v1768 = vld [vmem:[#allocation10 + $0x2f0] sm:$0xff]
    %v1769 = vld [vmem:[#allocation10 + $0x2f8] sm:$0xff]
    %v1770 = vld [vmem:[#allocation10 + $0x300] sm:$0xff]
    %v1771 = vld [vmem:[#allocation10 + $0x308] sm:$0xff]
    %v1772 = vld [vmem:[#allocation10 + $0x310] sm:$0xff]
    %v1773 = vld [vmem:[#allocation10 + $0x318] sm:$0xff]
    %v1774 = vld [vmem:[#allocation10 + $0x320] sm:$0xff]
    %v1775 = vld [vmem:[#allocation10 + $0x328] sm:$0xff]
    %v1776 = vld [vmem:[#allocation10 + $0x330] sm:$0xff]
    %v1777 = vld [vmem:[#allocation10 + $0x338] sm:$0xff]
    %v1778 = vld [vmem:[#allocation10 + $0x340] sm:$0xff]
    %v1779 = vld [vmem:[#allocation10 + $0x348] sm:$0xff]
    %v1780 = vld [vmem:[#allocation10 + $0x350] sm:$0xff]
    %v1781 = vld [vmem:[#allocation10 + $0x358] sm:$0xff]
    %v1782 = vld [vmem:[#allocation10 + $0x360] sm:$0xff]
    %v1783 = vld [vmem:[#allocation10 + $0x368] sm:$0xff]
    %v1784 = vld [vmem:[#allocation10 + $0x370] sm:$0xff]
    %v1785 = vld [vmem:[#allocation10 + $0x378] sm:$0xff]
    %v1786 = vld [vmem:[#allocation10 + $0x380] sm:$0xff]
    %v1787 = vld [vmem:[#allocation10 + $0x388] sm:$0xff]
    %v1788 = vld [vmem:[#allocation10 + $0x390] sm:$0xff]
    %v1789 = vld [vmem:[#allocation10 + $0x398] sm:$0xff]
    %v1790 = vld [vmem:[#allocation10 + $0x3a0] sm:$0xff]
    %v1791 = vld [vmem:[#allocation10 + $0x3a8] sm:$0xff]
    %v1792 = vld [vmem:[#allocation10 + $0x3b0] sm:$0xff]
    %v1793 = vld [vmem:[#allocation10 + $0x3b8] sm:$0xff]
    %v1794 = vld [vmem:[#allocation10 + $0x3c0] sm:$0xff]
    %v1795 = vld [vmem:[#allocation10 + $0x3c8] sm:$0xff]
    %v1796 = vld [vmem:[#allocation10 + $0x3d0] sm:$0xff]
    %v1797 = vld [vmem:[#allocation10 + $0x3d8] sm:$0xff]
    %v1798 = vld [vmem:[#allocation10 + $0x3e0] sm:$0xff]
    %v1799 = vld [vmem:[#allocation10 + $0x3e8] sm:$0xff]
    %v1800 = vld [vmem:[#allocation10 + $0x3f0] sm:$0xff]
    %v1801 = vld [vmem:[#allocation10 + $0x3f8] sm:$0xff]
    %v1802 = vld [vmem:[#allocation10 + $0x400] sm:$0xff]
    %v1803 = vld [vmem:[#allocation10 + $0x408] sm:$0xff]
    %v1804 = vld [vmem:[#allocation10 + $0x410] sm:$0xff]
    %v1805 = vld [vmem:[#allocation10 + $0x418] sm:$0xff]
    %v1806 = vld [vmem:[#allocation10 + $0x420] sm:$0xff]
    %v1807 = vld [vmem:[#allocation10 + $0x428] sm:$0xff]
    %v1808 = vld [vmem:[#allocation10 + $0x430] sm:$0xff]
    %v1809 = vld [vmem:[#allocation10 + $0x438] sm:$0xff]
    %v1810 = vld [vmem:[#allocation10 + $0x440] sm:$0xff]
    %v1811 = vld [vmem:[#allocation10 + $0x448] sm:$0xff]
    %v1812 = vld [vmem:[#allocation10 + $0x450] sm:$0xff]
    %v1813 = vld [vmem:[#allocation10 + $0x458] sm:$0xff]
    %v1814 = vld [vmem:[#allocation10 + $0x460] sm:$0xff]
    %v1815 = vld [vmem:[#allocation10 + $0x468] sm:$0xff]
    %v1816 = vld [vmem:[#allocation10 + $0x470] sm:$0xff]
    %v1817 = vld [vmem:[#allocation10 + $0x478] sm:$0xff]
    %v1818 = vld [vmem:[#allocation10 + $0x480] sm:$0xff]
    %v1819 = vld [vmem:[#allocation10 + $0x488] sm:$0xff]
    %v1820 = vld [vmem:[#allocation10 + $0x490] sm:$0xff]
    %v1821 = vld [vmem:[#allocation10 + $0x498] sm:$0xff]
    %v1822 = vld [vmem:[#allocation10 + $0x4a0] sm:$0xff]
    %v1823 = vld [vmem:[#allocation10 + $0x4a8] sm:$0xff]
    %v1824 = vld [vmem:[#allocation10 + $0x4b0] sm:$0xff]
    %v1825 = vld [vmem:[#allocation10 + $0x4b8] sm:$0xff]
    %v1826 = vld [vmem:[#allocation10 + $0x4c0] sm:$0xff]
    %v1827 = vld [vmem:[#allocation10 + $0x4c8] sm:$0xff]
    %v1828 = vld [vmem:[#allocation10 + $0x4d0] sm:$0xff]
    %v1829 = vld [vmem:[#allocation10 + $0x4d8] sm:$0xff]
    %v1830 = vld [vmem:[#allocation10 + $0x4e0] sm:$0xff]
    %v1831 = vld [vmem:[#allocation10 + $0x4e8] sm:$0xff]
    %v1832 = vld [vmem:[#allocation10 + $0x4f0] sm:$0xff]
    %v1833 = vld [vmem:[#allocation10 + $0x4f8] sm:$0xff]
    %v1834 = vld [vmem:[#allocation10 + $0x500] sm:$0xff]
    %v1835 = vld [vmem:[#allocation10 + $0x508] sm:$0xff]
    %v1836 = vld [vmem:[#allocation10 + $0x510] sm:$0xff]
    %v1837 = vld [vmem:[#allocation10 + $0x518] sm:$0xff]
    %v1838 = vld [vmem:[#allocation10 + $0x520] sm:$0xff]
    %v1839 = vld [vmem:[#allocation10 + $0x528] sm:$0xff]
    %v1840 = vld [vmem:[#allocation10 + $0x530] sm:$0xff]
    %v1841 = vld [vmem:[#allocation10 + $0x538] sm:$0xff]
    %v1842 = vld [vmem:[#allocation10 + $0x540] sm:$0xff]
    %v1843 = vld [vmem:[#allocation10 + $0x548] sm:$0xff]
    %v1844 = vld [vmem:[#allocation10 + $0x550] sm:$0xff]
    %v1845 = vld [vmem:[#allocation10 + $0x558] sm:$0xff]
    %v1846 = vld [vmem:[#allocation10 + $0x560] sm:$0xff]
    %v1847 = vld [vmem:[#allocation10 + $0x568] sm:$0xff]
    %v1848 = vld [vmem:[#allocation10 + $0x570] sm:$0xff]
    %v1849 = vld [vmem:[#allocation10 + $0x578] sm:$0xff]
    %v1850 = vld [vmem:[#allocation10 + $0x580] sm:$0xff]
    %v1851 = vld [vmem:[#allocation10 + $0x588] sm:$0xff]
    %v1852 = vld [vmem:[#allocation10 + $0x590] sm:$0xff]
    %v1853 = vld [vmem:[#allocation10 + $0x598] sm:$0xff]
    %v1854 = vld [vmem:[#allocation10 + $0x5a0] sm:$0xff]
    %v1855 = vld [vmem:[#allocation10 + $0x5a8] sm:$0xff]
    %v1856 = vld [vmem:[#allocation10 + $0x5b0] sm:$0xff]
    %v1857 = vld [vmem:[#allocation10 + $0x5b8] sm:$0xff]
    %v1858 = vld [vmem:[#allocation10 + $0x5c0] sm:$0xff]
    %v1859 = vld [vmem:[#allocation10 + $0x5c8] sm:$0xff]
    %v1860 = vld [vmem:[#allocation10 + $0x5d0] sm:$0xff]
    %v1861 = vld [vmem:[#allocation10 + $0x5d8] sm:$0xff]
    %v1862 = vld [vmem:[#allocation10 + $0x5e0] sm:$0xff]
    %v1863 = vld [vmem:[#allocation10 + $0x5e8] sm:$0xff]
    %v1864 = vld [vmem:[#allocation10 + $0x5f0] sm:$0xff]
    %v1865 = vld [vmem:[#allocation10 + $0x5f8] sm:$0xff]
    %v2058 = vunpack.c.l.b16 %v1674
    %v2059 = vunpack.c.h.b16 %v1674
    %v2060 = vunpack.c.l.b16 %v1675
    %v2061 = vunpack.c.h.b16 %v1675
    %v2062 = vunpack.c.l.b16 %v1676
    %v2063 = vunpack.c.h.b16 %v1676
    %v2064 = vunpack.c.l.b16 %v1677
    %v2065 = vunpack.c.h.b16 %v1677
    %v2066 = vunpack.c.l.b16 %v1678
    %v2067 = vunpack.c.h.b16 %v1678
    %v2068 = vunpack.c.l.b16 %v1679
    %v2069 = vunpack.c.h.b16 %v1679
    %v2070 = vunpack.c.l.b16 %v1680
    %v2071 = vunpack.c.h.b16 %v1680
    %v2072 = vunpack.c.l.b16 %v1681
    %v2073 = vunpack.c.h.b16 %v1681
    %v2074 = vunpack.c.l.b16 %v1682
    %v2075 = vunpack.c.h.b16 %v1682
    %v2076 = vunpack.c.l.b16 %v1683
    %v2077 = vunpack.c.h.b16 %v1683
    %v2078 = vunpack.c.l.b16 %v1684
    %v2079 = vunpack.c.h.b16 %v1684
    %v2080 = vunpack.c.l.b16 %v1685
    %v2081 = vunpack.c.h.b16 %v1685
    %v2082 = vunpack.c.l.b16 %v1686
    %v2083 = vunpack.c.h.b16 %v1686
    %v2084 = vunpack.c.l.b16 %v1687
    %v2085 = vunpack.c.h.b16 %v1687
    %v2086 = vunpack.c.l.b16 %v1688
    %v2087 = vunpack.c.h.b16 %v1688
    %v2088 = vunpack.c.l.b16 %v1689
    %v2089 = vunpack.c.h.b16 %v1689
    %v2090 = vunpack.c.l.b16 %v1690
    %v2091 = vunpack.c.h.b16 %v1690
    %v2092 = vunpack.c.l.b16 %v1691
    %v2093 = vunpack.c.h.b16 %v1691
    %v2094 = vunpack.c.l.b16 %v1692
    %v2095 = vunpack.c.h.b16 %v1692
    %v2096 = vunpack.c.l.b16 %v1693
    %v2097 = vunpack.c.h.b16 %v1693
    %v2098 = vunpack.c.l.b16 %v1694
    %v2099 = vunpack.c.h.b16 %v1694
    %v2100 = vunpack.c.l.b16 %v1695
    %v2101 = vunpack.c.h.b16 %v1695
    %v2102 = vunpack.c.l.b16 %v1696
    %v2103 = vunpack.c.h.b16 %v1696
    %v2104 = vunpack.c.l.b16 %v1697
    %v2105 = vunpack.c.h.b16 %v1697
    %v2106 = vunpack.c.l.b16 %v1698
    %v2107 = vunpack.c.h.b16 %v1698
    %v2108 = vunpack.c.l.b16 %v1699
    %v2109 = vunpack.c.h.b16 %v1699
    %v2110 = vunpack.c.l.b16 %v1700
    %v2111 = vunpack.c.h.b16 %v1700
    %v2112 = vunpack.c.l.b16 %v1701
    %v2113 = vunpack.c.h.b16 %v1701
    %v2114 = vunpack.c.l.b16 %v1702
    %v2115 = vunpack.c.h.b16 %v1702
    %v2116 = vunpack.c.l.b16 %v1703
    %v2117 = vunpack.c.h.b16 %v1703
    %v2118 = vunpack.c.l.b16 %v1704
    %v2119 = vunpack.c.h.b16 %v1704
    %v2120 = vunpack.c.l.b16 %v1705
    %v2121 = vunpack.c.h.b16 %v1705
    %v2122 = vunpack.c.l.b16 %v1706
    %v2123 = vunpack.c.h.b16 %v1706
    %v2124 = vunpack.c.l.b16 %v1707
    %v2125 = vunpack.c.h.b16 %v1707
    %v2126 = vunpack.c.l.b16 %v1708
    %v2127 = vunpack.c.h.b16 %v1708
    %v2128 = vunpack.c.l.b16 %v1709
    %v2129 = vunpack.c.h.b16 %v1709
    %v2130 = vunpack.c.l.b16 %v1710
    %v2131 = vunpack.c.h.b16 %v1710
    %v2132 = vunpack.c.l.b16 %v1711
    %v2133 = vunpack.c.h.b16 %v1711
    %v2134 = vunpack.c.l.b16 %v1712
    %v2135 = vunpack.c.h.b16 %v1712
    %v2136 = vunpack.c.l.b16 %v1713
    %v2137 = vunpack.c.h.b16 %v1713
    %v2138 = vunpack.c.l.b16 %v1714
    %v2139 = vunpack.c.h.b16 %v1714
    %v2140 = vunpack.c.l.b16 %v1715
    %v2141 = vunpack.c.h.b16 %v1715
    %v2142 = vunpack.c.l.b16 %v1716
    %v2143 = vunpack.c.h.b16 %v1716
    %v2144 = vunpack.c.l.b16 %v1717
    %v2145 = vunpack.c.h.b16 %v1717
    %v2146 = vunpack.c.l.b16 %v1718
    %v2147 = vunpack.c.h.b16 %v1718
    %v2148 = vunpack.c.l.b16 %v1719
    %v2149 = vunpack.c.h.b16 %v1719
    %v2150 = vunpack.c.l.b16 %v1720
    %v2151 = vunpack.c.h.b16 %v1720
    %v2152 = vunpack.c.l.b16 %v1721
    %v2153 = vunpack.c.h.b16 %v1721
    %v2154 = vunpack.c.l.b16 %v1722
    %v2155 = vunpack.c.h.b16 %v1722
    %v2156 = vunpack.c.l.b16 %v1723
    %v2157 = vunpack.c.h.b16 %v1723
    %v2158 = vunpack.c.l.b16 %v1724
    %v2159 = vunpack.c.h.b16 %v1724
    %v2160 = vunpack.c.l.b16 %v1725
    %v2161 = vunpack.c.h.b16 %v1725
    %v2162 = vunpack.c.l.b16 %v1726
    %v2163 = vunpack.c.h.b16 %v1726
    %v2164 = vunpack.c.l.b16 %v1727
    %v2165 = vunpack.c.h.b16 %v1727
    %v2166 = vunpack.c.l.b16 %v1728
    %v2167 = vunpack.c.h.b16 %v1728
    %v2168 = vunpack.c.l.b16 %v1729
    %v2169 = vunpack.c.h.b16 %v1729
    %v2170 = vunpack.c.l.b16 %v1730
    %v2171 = vunpack.c.h.b16 %v1730
    %v2172 = vunpack.c.l.b16 %v1731
    %v2173 = vunpack.c.h.b16 %v1731
    %v2174 = vunpack.c.l.b16 %v1732
    %v2175 = vunpack.c.h.b16 %v1732
    %v2176 = vunpack.c.l.b16 %v1733
    %v2177 = vunpack.c.h.b16 %v1733
    %v2178 = vunpack.c.l.b16 %v1734
    %v2179 = vunpack.c.h.b16 %v1734
    %v2180 = vunpack.c.l.b16 %v1735
    %v2181 = vunpack.c.h.b16 %v1735
    %v2182 = vunpack.c.l.b16 %v1736
    %v2183 = vunpack.c.h.b16 %v1736
    %v2184 = vunpack.c.l.b16 %v1737
    %v2185 = vunpack.c.h.b16 %v1737
    %v2186 = vunpack.c.l.b16 %v1738
    %v2187 = vunpack.c.h.b16 %v1738
    %v2188 = vunpack.c.l.b16 %v1739
    %v2189 = vunpack.c.h.b16 %v1739
    %v2190 = vunpack.c.l.b16 %v1740
    %v2191 = vunpack.c.h.b16 %v1740
    %v2192 = vunpack.c.l.b16 %v1741
    %v2193 = vunpack.c.h.b16 %v1741
    %v2194 = vunpack.c.l.b16 %v1742
    %v2195 = vunpack.c.h.b16 %v1742
    %v2196 = vunpack.c.l.b16 %v1743
    %v2197 = vunpack.c.h.b16 %v1743
    %v2198 = vunpack.c.l.b16 %v1744
    %v2199 = vunpack.c.h.b16 %v1744
    %v2200 = vunpack.c.l.b16 %v1745
    %v2201 = vunpack.c.h.b16 %v1745
    %v2202 = vunpack.c.l.b16 %v1746
    %v2203 = vunpack.c.h.b16 %v1746
    %v2204 = vunpack.c.l.b16 %v1747
    %v2205 = vunpack.c.h.b16 %v1747
    %v2206 = vunpack.c.l.b16 %v1748
    %v2207 = vunpack.c.h.b16 %v1748
    %v2208 = vunpack.c.l.b16 %v1749
    %v2209 = vunpack.c.h.b16 %v1749
    %v2210 = vunpack.c.l.b16 %v1750
    %v2211 = vunpack.c.h.b16 %v1750
    %v2212 = vunpack.c.l.b16 %v1751
    %v2213 = vunpack.c.h.b16 %v1751
    %v2214 = vunpack.c.l.b16 %v1752
    %v2215 = vunpack.c.h.b16 %v1752
    %v2216 = vunpack.c.l.b16 %v1753
    %v2217 = vunpack.c.h.b16 %v1753
    %v2218 = vunpack.c.l.b16 %v1754
    %v2219 = vunpack.c.h.b16 %v1754
    %v2220 = vunpack.c.l.b16 %v1755
    %v2221 = vunpack.c.h.b16 %v1755
    %v2222 = vunpack.c.l.b16 %v1756
    %v2223 = vunpack.c.h.b16 %v1756
    %v2224 = vunpack.c.l.b16 %v1757
    %v2225 = vunpack.c.h.b16 %v1757
    %v2226 = vunpack.c.l.b16 %v1758
    %v2227 = vunpack.c.h.b16 %v1758
    %v2228 = vunpack.c.l.b16 %v1759
    %v2229 = vunpack.c.h.b16 %v1759
    %v2230 = vunpack.c.l.b16 %v1760
    %v2231 = vunpack.c.h.b16 %v1760
    %v2232 = vunpack.c.l.b16 %v1761
    %v2233 = vunpack.c.h.b16 %v1761
    %v2234 = vunpack.c.l.b16 %v1762
    %v2235 = vunpack.c.h.b16 %v1762
    %v2236 = vunpack.c.l.b16 %v1763
    %v2237 = vunpack.c.h.b16 %v1763
    %v2238 = vunpack.c.l.b16 %v1764
    %v2239 = vunpack.c.h.b16 %v1764
    %v2240 = vunpack.c.l.b16 %v1765
    %v2241 = vunpack.c.h.b16 %v1765
    %v2242 = vunpack.c.l.b16 %v1766
    %v2243 = vunpack.c.h.b16 %v1766
    %v2244 = vunpack.c.l.b16 %v1767
    %v2245 = vunpack.c.h.b16 %v1767
    %v2246 = vunpack.c.l.b16 %v1768
    %v2247 = vunpack.c.h.b16 %v1768
    %v2248 = vunpack.c.l.b16 %v1769
    %v2249 = vunpack.c.h.b16 %v1769
    %v2250 = vunpack.c.l.b16 %v1770
    %v2251 = vunpack.c.h.b16 %v1770
    %v2252 = vunpack.c.l.b16 %v1771
    %v2253 = vunpack.c.h.b16 %v1771
    %v2254 = vunpack.c.l.b16 %v1772
    %v2255 = vunpack.c.h.b16 %v1772
    %v2256 = vunpack.c.l.b16 %v1773
    %v2257 = vunpack.c.h.b16 %v1773
    %v2258 = vunpack.c.l.b16 %v1774
    %v2259 = vunpack.c.h.b16 %v1774
    %v2260 = vunpack.c.l.b16 %v1775
    %v2261 = vunpack.c.h.b16 %v1775
    %v2262 = vunpack.c.l.b16 %v1776
    %v2263 = vunpack.c.h.b16 %v1776
    %v2264 = vunpack.c.l.b16 %v1777
    %v2265 = vunpack.c.h.b16 %v1777
    %v2266 = vunpack.c.l.b16 %v1778
    %v2267 = vunpack.c.h.b16 %v1778
    %v2268 = vunpack.c.l.b16 %v1779
    %v2269 = vunpack.c.h.b16 %v1779
    %v2270 = vunpack.c.l.b16 %v1780
    %v2271 = vunpack.c.h.b16 %v1780
    %v2272 = vunpack.c.l.b16 %v1781
    %v2273 = vunpack.c.h.b16 %v1781
    %v2274 = vunpack.c.l.b16 %v1782
    %v2275 = vunpack.c.h.b16 %v1782
    %v2276 = vunpack.c.l.b16 %v1783
    %v2277 = vunpack.c.h.b16 %v1783
    %v2278 = vunpack.c.l.b16 %v1784
    %v2279 = vunpack.c.h.b16 %v1784
    %v2280 = vunpack.c.l.b16 %v1785
    %v2281 = vunpack.c.h.b16 %v1785
    %v2282 = vunpack.c.l.b16 %v1786
    %v2283 = vunpack.c.h.b16 %v1786
    %v2284 = vunpack.c.l.b16 %v1787
    %v2285 = vunpack.c.h.b16 %v1787
    %v2286 = vunpack.c.l.b16 %v1788
    %v2287 = vunpack.c.h.b16 %v1788
    %v2288 = vunpack.c.l.b16 %v1789
    %v2289 = vunpack.c.h.b16 %v1789
    %v2290 = vunpack.c.l.b16 %v1790
    %v2291 = vunpack.c.h.b16 %v1790
    %v2292 = vunpack.c.l.b16 %v1791
    %v2293 = vunpack.c.h.b16 %v1791
    %v2294 = vunpack.c.l.b16 %v1792
    %v2295 = vunpack.c.h.b16 %v1792
    %v2296 = vunpack.c.l.b16 %v1793
    %v2297 = vunpack.c.h.b16 %v1793
    %v2298 = vunpack.c.l.b16 %v1794
    %v2299 = vunpack.c.h.b16 %v1794
    %v2300 = vunpack.c.l.b16 %v1795
    %v2301 = vunpack.c.h.b16 %v1795
    %v2302 = vunpack.c.l.b16 %v1796
    %v2303 = vunpack.c.h.b16 %v1796
    %v2304 = vunpack.c.l.b16 %v1797
    %v2305 = vunpack.c.h.b16 %v1797
    %v2306 = vunpack.c.l.b16 %v1798
    %v2307 = vunpack.c.h.b16 %v1798
    %v2308 = vunpack.c.l.b16 %v1799
    %v2309 = vunpack.c.h.b16 %v1799
    %v2310 = vunpack.c.l.b16 %v1800
    %v2311 = vunpack.c.h.b16 %v1800
    %v2312 = vunpack.c.l.b16 %v1801
    %v2313 = vunpack.c.h.b16 %v1801
    %v2314 = vunpack.c.l.b16 %v1802
    %v2315 = vunpack.c.h.b16 %v1802
    %v2316 = vunpack.c.l.b16 %v1803
    %v2317 = vunpack.c.h.b16 %v1803
    %v2318 = vunpack.c.l.b16 %v1804
    %v2319 = vunpack.c.h.b16 %v1804
    %v2320 = vunpack.c.l.b16 %v1805
    %v2321 = vunpack.c.h.b16 %v1805
    %v2322 = vunpack.c.l.b16 %v1806
    %v2323 = vunpack.c.h.b16 %v1806
    %v2324 = vunpack.c.l.b16 %v1807
    %v2325 = vunpack.c.h.b16 %v1807
    %v2326 = vunpack.c.l.b16 %v1808
    %v2327 = vunpack.c.h.b16 %v1808
    %v2328 = vunpack.c.l.b16 %v1809
    %v2329 = vunpack.c.h.b16 %v1809
    %v2330 = vunpack.c.l.b16 %v1810
    %v2331 = vunpack.c.h.b16 %v1810
    %v2332 = vunpack.c.l.b16 %v1811
    %v2333 = vunpack.c.h.b16 %v1811
    %v2334 = vunpack.c.l.b16 %v1812
    %v2335 = vunpack.c.h.b16 %v1812
    %v2336 = vunpack.c.l.b16 %v1813
    %v2337 = vunpack.c.h.b16 %v1813
    %v2338 = vunpack.c.l.b16 %v1814
    %v2339 = vunpack.c.h.b16 %v1814
    %v2340 = vunpack.c.l.b16 %v1815
    %v2341 = vunpack.c.h.b16 %v1815
    %v2342 = vunpack.c.l.b16 %v1816
    %v2343 = vunpack.c.h.b16 %v1816
    %v2344 = vunpack.c.l.b16 %v1817
    %v2345 = vunpack.c.h.b16 %v1817
    %v2346 = vunpack.c.l.b16 %v1818
    %v2347 = vunpack.c.h.b16 %v1818
    %v2348 = vunpack.c.l.b16 %v1819
    %v2349 = vunpack.c.h.b16 %v1819
    %v2350 = vunpack.c.l.b16 %v1820
    %v2351 = vunpack.c.h.b16 %v1820
    %v2352 = vunpack.c.l.b16 %v1821
    %v2353 = vunpack.c.h.b16 %v1821
    %v2354 = vunpack.c.l.b16 %v1822
    %v2355 = vunpack.c.h.b16 %v1822
    %v2356 = vunpack.c.l.b16 %v1823
    %v2357 = vunpack.c.h.b16 %v1823
    %v2358 = vunpack.c.l.b16 %v1824
    %v2359 = vunpack.c.h.b16 %v1824
    %v2360 = vunpack.c.l.b16 %v1825
    %v2361 = vunpack.c.h.b16 %v1825
    %v2362 = vunpack.c.l.b16 %v1826
    %v2363 = vunpack.c.h.b16 %v1826
    %v2364 = vunpack.c.l.b16 %v1827
    %v2365 = vunpack.c.h.b16 %v1827
    %v2366 = vunpack.c.l.b16 %v1828
    %v2367 = vunpack.c.h.b16 %v1828
    %v2368 = vunpack.c.l.b16 %v1829
    %v2369 = vunpack.c.h.b16 %v1829
    %v2370 = vunpack.c.l.b16 %v1830
    %v2371 = vunpack.c.h.b16 %v1830
    %v2372 = vunpack.c.l.b16 %v1831
    %v2373 = vunpack.c.h.b16 %v1831
    %v2374 = vunpack.c.l.b16 %v1832
    %v2375 = vunpack.c.h.b16 %v1832
    %v2376 = vunpack.c.l.b16 %v1833
    %v2377 = vunpack.c.h.b16 %v1833
    %v2378 = vunpack.c.l.b16 %v1834
    %v2379 = vunpack.c.h.b16 %v1834
    %v2380 = vunpack.c.l.b16 %v1835
    %v2381 = vunpack.c.h.b16 %v1835
    %v2382 = vunpack.c.l.b16 %v1836
    %v2383 = vunpack.c.h.b16 %v1836
    %v2384 = vunpack.c.l.b16 %v1837
    %v2385 = vunpack.c.h.b16 %v1837
    %v2386 = vunpack.c.l.b16 %v1838
    %v2387 = vunpack.c.h.b16 %v1838
    %v2388 = vunpack.c.l.b16 %v1839
    %v2389 = vunpack.c.h.b16 %v1839
    %v2390 = vunpack.c.l.b16 %v1840
    %v2391 = vunpack.c.h.b16 %v1840
    %v2392 = vunpack.c.l.b16 %v1841
    %v2393 = vunpack.c.h.b16 %v1841
    %v2394 = vunpack.c.l.b16 %v1842
    %v2395 = vunpack.c.h.b16 %v1842
    %v2396 = vunpack.c.l.b16 %v1843
    %v2397 = vunpack.c.h.b16 %v1843
    %v2398 = vunpack.c.l.b16 %v1844
    %v2399 = vunpack.c.h.b16 %v1844
    %v2400 = vunpack.c.l.b16 %v1845
    %v2401 = vunpack.c.h.b16 %v1845
    %v2402 = vunpack.c.l.b16 %v1846
    %v2403 = vunpack.c.h.b16 %v1846
    %v2404 = vunpack.c.l.b16 %v1847
    %v2405 = vunpack.c.h.b16 %v1847
    %v2406 = vunpack.c.l.b16 %v1848
    %v2407 = vunpack.c.h.b16 %v1848
    %v2408 = vunpack.c.l.b16 %v1849
    %v2409 = vunpack.c.h.b16 %v1849
    %v2410 = vunpack.c.l.b16 %v1850
    %v2411 = vunpack.c.h.b16 %v1850
    %v2412 = vunpack.c.l.b16 %v1851
    %v2413 = vunpack.c.h.b16 %v1851
    %v2414 = vunpack.c.l.b16 %v1852
    %v2415 = vunpack.c.h.b16 %v1852
    %v2416 = vunpack.c.l.b16 %v1853
    %v2417 = vunpack.c.h.b16 %v1853
    %v2418 = vunpack.c.l.b16 %v1854
    %v2419 = vunpack.c.h.b16 %v1854
    %v2420 = vunpack.c.l.b16 %v1855
    %v2421 = vunpack.c.h.b16 %v1855
    %v2422 = vunpack.c.l.b16 %v1856
    %v2423 = vunpack.c.h.b16 %v1856
    %v2424 = vunpack.c.l.b16 %v1857
    %v2425 = vunpack.c.h.b16 %v1857
    %v2426 = vunpack.c.l.b16 %v1858
    %v2427 = vunpack.c.h.b16 %v1858
    %v2428 = vunpack.c.l.b16 %v1859
    %v2429 = vunpack.c.h.b16 %v1859
    %v2430 = vunpack.c.l.b16 %v1860
    %v2431 = vunpack.c.h.b16 %v1860
    %v2432 = vunpack.c.l.b16 %v1861
    %v2433 = vunpack.c.h.b16 %v1861
    %v2434 = vunpack.c.l.b16 %v1862
    %v2435 = vunpack.c.h.b16 %v1862
    %v2436 = vunpack.c.l.b16 %v1863
    %v2437 = vunpack.c.h.b16 %v1863
    %v2438 = vunpack.c.l.b16 %v1864
    %v2439 = vunpack.c.h.b16 %v1864
    %v2440 = vunpack.c.l.b16 %v1865
    %v2441 = vunpack.c.h.b16 %v1865
    %v2442 = vpack.c.b16 %v2062, %v2058
    %v2443 = vpack.c.b16 %v2063, %v2059
    %v2444 = vpack.c.b16 %v2064, %v2060
    %v2445 = vpack.c.b16 %v2065, %v2061
    %v2446 = vpack.c.b16 %v2070, %v2066
    %v2447 = vpack.c.b16 %v2071, %v2067
    %v2448 = vpack.c.b16 %v2072, %v2068
    %v2449 = vpack.c.b16 %v2073, %v2069
    %v2450 = vpack.c.b16 %v2078, %v2074
    %v2451 = vpack.c.b16 %v2079, %v2075
    %v2452 = vpack.c.b16 %v2080, %v2076
    %v2453 = vpack.c.b16 %v2081, %v2077
    %v2454 = vpack.c.b16 %v2086, %v2082
    %v2455 = vpack.c.b16 %v2087, %v2083
    %v2456 = vpack.c.b16 %v2088, %v2084
    %v2457 = vpack.c.b16 %v2089, %v2085
    %v2458 = vpack.c.b16 %v2094, %v2090
    %v2459 = vpack.c.b16 %v2095, %v2091
    %v2460 = vpack.c.b16 %v2096, %v2092
    %v2461 = vpack.c.b16 %v2097, %v2093
    %v2462 = vpack.c.b16 %v2102, %v2098
    %v2463 = vpack.c.b16 %v2103, %v2099
    %v2464 = vpack.c.b16 %v2104, %v2100
    %v2465 = vpack.c.b16 %v2105, %v2101
    %v2466 = vpack.c.b16 %v2110, %v2106
    %v2467 = vpack.c.b16 %v2111, %v2107
    %v2468 = vpack.c.b16 %v2112, %v2108
    %v2469 = vpack.c.b16 %v2113, %v2109
    %v2470 = vpack.c.b16 %v2118, %v2114
    %v2471 = vpack.c.b16 %v2119, %v2115
    %v2472 = vpack.c.b16 %v2120, %v2116
    %v2473 = vpack.c.b16 %v2121, %v2117
    %v2474 = vpack.c.b16 %v2126, %v2122
    %v2475 = vpack.c.b16 %v2127, %v2123
    %v2476 = vpack.c.b16 %v2128, %v2124
    %v2477 = vpack.c.b16 %v2129, %v2125
    %v2478 = vpack.c.b16 %v2134, %v2130
    %v2479 = vpack.c.b16 %v2135, %v2131
    %v2480 = vpack.c.b16 %v2136, %v2132
    %v2481 = vpack.c.b16 %v2137, %v2133
    %v2482 = vpack.c.b16 %v2142, %v2138
    %v2483 = vpack.c.b16 %v2143, %v2139
    %v2484 = vpack.c.b16 %v2144, %v2140
    %v2485 = vpack.c.b16 %v2145, %v2141
    %v2486 = vpack.c.b16 %v2150, %v2146
    %v2487 = vpack.c.b16 %v2151, %v2147
    %v2488 = vpack.c.b16 %v2152, %v2148
    %v2489 = vpack.c.b16 %v2153, %v2149
    %v2490 = vpack.c.b16 %v2158, %v2154
    %v2491 = vpack.c.b16 %v2159, %v2155
    %v2492 = vpack.c.b16 %v2160, %v2156
    %v2493 = vpack.c.b16 %v2161, %v2157
    %v2494 = vpack.c.b16 %v2166, %v2162
    %v2495 = vpack.c.b16 %v2167, %v2163
    %v2496 = vpack.c.b16 %v2168, %v2164
    %v2497 = vpack.c.b16 %v2169, %v2165
    %v2498 = vpack.c.b16 %v2174, %v2170
    %v2499 = vpack.c.b16 %v2175, %v2171
    %v2500 = vpack.c.b16 %v2176, %v2172
    %v2501 = vpack.c.b16 %v2177, %v2173
    %v2502 = vpack.c.b16 %v2182, %v2178
    %v2503 = vpack.c.b16 %v2183, %v2179
    %v2504 = vpack.c.b16 %v2184, %v2180
    %v2505 = vpack.c.b16 %v2185, %v2181
    %v2506 = vpack.c.b16 %v2190, %v2186
    %v2507 = vpack.c.b16 %v2191, %v2187
    %v2508 = vpack.c.b16 %v2192, %v2188
    %v2509 = vpack.c.b16 %v2193, %v2189
    %v2510 = vpack.c.b16 %v2198, %v2194
    %v2511 = vpack.c.b16 %v2199, %v2195
    %v2512 = vpack.c.b16 %v2200, %v2196
    %v2513 = vpack.c.b16 %v2201, %v2197
    %v2514 = vpack.c.b16 %v2206, %v2202
    %v2515 = vpack.c.b16 %v2207, %v2203
    %v2516 = vpack.c.b16 %v2208, %v2204
    %v2517 = vpack.c.b16 %v2209, %v2205
    %v2518 = vpack.c.b16 %v2214, %v2210
    %v2519 = vpack.c.b16 %v2215, %v2211
    %v2520 = vpack.c.b16 %v2216, %v2212
    %v2521 = vpack.c.b16 %v2217, %v2213
    %v2522 = vpack.c.b16 %v2222, %v2218
    %v2523 = vpack.c.b16 %v2223, %v2219
    %v2524 = vpack.c.b16 %v2224, %v2220
    %v2525 = vpack.c.b16 %v2225, %v2221
    %v2526 = vpack.c.b16 %v2230, %v2226
    %v2527 = vpack.c.b16 %v2231, %v2227
    %v2528 = vpack.c.b16 %v2232, %v2228
    %v2529 = vpack.c.b16 %v2233, %v2229
    %v2530 = vpack.c.b16 %v2238, %v2234
    %v2531 = vpack.c.b16 %v2239, %v2235
    %v2532 = vpack.c.b16 %v2240, %v2236
    %v2533 = vpack.c.b16 %v2241, %v2237
    %v2534 = vpack.c.b16 %v2246, %v2242
    %v2535 = vpack.c.b16 %v2247, %v2243
    %v2536 = vpack.c.b16 %v2248, %v2244
    %v2537 = vpack.c.b16 %v2249, %v2245
    %v2538 = vpack.c.b16 %v2254, %v2250
    %v2539 = vpack.c.b16 %v2255, %v2251
    %v2540 = vpack.c.b16 %v2256, %v2252
    %v2541 = vpack.c.b16 %v2257, %v2253
    %v2542 = vpack.c.b16 %v2262, %v2258
    %v2543 = vpack.c.b16 %v2263, %v2259
    %v2544 = vpack.c.b16 %v2264, %v2260
    %v2545 = vpack.c.b16 %v2265, %v2261
    %v2546 = vpack.c.b16 %v2270, %v2266
    %v2547 = vpack.c.b16 %v2271, %v2267
    %v2548 = vpack.c.b16 %v2272, %v2268
    %v2549 = vpack.c.b16 %v2273, %v2269
    %v2550 = vpack.c.b16 %v2278, %v2274
    %v2551 = vpack.c.b16 %v2279, %v2275
    %v2552 = vpack.c.b16 %v2280, %v2276
    %v2553 = vpack.c.b16 %v2281, %v2277
    %v2554 = vpack.c.b16 %v2286, %v2282
    %v2555 = vpack.c.b16 %v2287, %v2283
    %v2556 = vpack.c.b16 %v2288, %v2284
    %v2557 = vpack.c.b16 %v2289, %v2285
    %v2558 = vpack.c.b16 %v2294, %v2290
    %v2559 = vpack.c.b16 %v2295, %v2291
    %v2560 = vpack.c.b16 %v2296, %v2292
    %v2561 = vpack.c.b16 %v2297, %v2293
    %v2562 = vpack.c.b16 %v2302, %v2298
    %v2563 = vpack.c.b16 %v2303, %v2299
    %v2564 = vpack.c.b16 %v2304, %v2300
    %v2565 = vpack.c.b16 %v2305, %v2301
    %v2566 = vpack.c.b16 %v2310, %v2306
    %v2567 = vpack.c.b16 %v2311, %v2307
    %v2568 = vpack.c.b16 %v2312, %v2308
    %v2569 = vpack.c.b16 %v2313, %v2309
    %v2570 = vpack.c.b16 %v2318, %v2314
    %v2571 = vpack.c.b16 %v2319, %v2315
    %v2572 = vpack.c.b16 %v2320, %v2316
    %v2573 = vpack.c.b16 %v2321, %v2317
    %v2574 = vpack.c.b16 %v2326, %v2322
    %v2575 = vpack.c.b16 %v2327, %v2323
    %v2576 = vpack.c.b16 %v2328, %v2324
    %v2577 = vpack.c.b16 %v2329, %v2325
    %v2578 = vpack.c.b16 %v2334, %v2330
    %v2579 = vpack.c.b16 %v2335, %v2331
    %v2580 = vpack.c.b16 %v2336, %v2332
    %v2581 = vpack.c.b16 %v2337, %v2333
    %v2582 = vpack.c.b16 %v2342, %v2338
    %v2583 = vpack.c.b16 %v2343, %v2339
    %v2584 = vpack.c.b16 %v2344, %v2340
    %v2585 = vpack.c.b16 %v2345, %v2341
    %v2586 = vpack.c.b16 %v2350, %v2346
    %v2587 = vpack.c.b16 %v2351, %v2347
    %v2588 = vpack.c.b16 %v2352, %v2348
    %v2589 = vpack.c.b16 %v2353, %v2349
    %v2590 = vpack.c.b16 %v2358, %v2354
    %v2591 = vpack.c.b16 %v2359, %v2355
    %v2592 = vpack.c.b16 %v2360, %v2356
    %v2593 = vpack.c.b16 %v2361, %v2357
    %v2594 = vpack.c.b16 %v2366, %v2362
    %v2595 = vpack.c.b16 %v2367, %v2363
    %v2596 = vpack.c.b16 %v2368, %v2364
    %v2597 = vpack.c.b16 %v2369, %v2365
    %v2598 = vpack.c.b16 %v2374, %v2370
    %v2599 = vpack.c.b16 %v2375, %v2371
    %v2600 = vpack.c.b16 %v2376, %v2372
    %v2601 = vpack.c.b16 %v2377, %v2373
    %v2602 = vpack.c.b16 %v2382, %v2378
    %v2603 = vpack.c.b16 %v2383, %v2379
    %v2604 = vpack.c.b16 %v2384, %v2380
    %v2605 = vpack.c.b16 %v2385, %v2381
    %v2606 = vpack.c.b16 %v2390, %v2386
    %v2607 = vpack.c.b16 %v2391, %v2387
    %v2608 = vpack.c.b16 %v2392, %v2388
    %v2609 = vpack.c.b16 %v2393, %v2389
    %v2610 = vpack.c.b16 %v2398, %v2394
    %v2611 = vpack.c.b16 %v2399, %v2395
    %v2612 = vpack.c.b16 %v2400, %v2396
    %v2613 = vpack.c.b16 %v2401, %v2397
    %v2614 = vpack.c.b16 %v2406, %v2402
    %v2615 = vpack.c.b16 %v2407, %v2403
    %v2616 = vpack.c.b16 %v2408, %v2404
    %v2617 = vpack.c.b16 %v2409, %v2405
    %v2618 = vpack.c.b16 %v2414, %v2410
    %v2619 = vpack.c.b16 %v2415, %v2411
    %v2620 = vpack.c.b16 %v2416, %v2412
    %v2621 = vpack.c.b16 %v2417, %v2413
    %v2622 = vpack.c.b16 %v2422, %v2418
    %v2623 = vpack.c.b16 %v2423, %v2419
    %v2624 = vpack.c.b16 %v2424, %v2420
    %v2625 = vpack.c.b16 %v2425, %v2421
    %v2626 = vpack.c.b16 %v2430, %v2426
    %v2627 = vpack.c.b16 %v2431, %v2427
    %v2628 = vpack.c.b16 %v2432, %v2428
    %v2629 = vpack.c.b16 %v2433, %v2429
    %v2630 = vpack.c.b16 %v2438, %v2434
    %v2631 = vpack.c.b16 %v2439, %v2435
    %v2632 = vpack.c.b16 %v2440, %v2436
    %v2633 = vpack.c.b16 %v2441, %v2437
    %2826 = vmatprep.subr.bf16.mxu0 %v2443
    %2827 = vmatpush1.bf16.msra.mxu0 %v2442
    %2828 = vmatprep.subr.bf16.mxu0 %v2447
    %2829 = vmatpush1.bf16.msra.mxu0 %v2446
    %2830 = vmatprep.subr.bf16.mxu0 %v2451
    %2831 = vmatpush1.bf16.msra.mxu0 %v2450
    %2832 = vmatprep.subr.bf16.mxu0 %v2455
    %2833 = vmatpush1.bf16.msra.mxu0 %v2454
    %2834 = vmatprep.subr.bf16.mxu0 %v2459
    %2835 = vmatpush1.bf16.msra.mxu0 %v2458
    %2836 = vmatprep.subr.bf16.mxu0 %v2463
    %2837 = vmatpush1.bf16.msra.mxu0 %v2462
    %2838 = vmatprep.subr.bf16.mxu0 %v2467
    %2839 = vmatpush1.bf16.msra.mxu0 %v2466
    %2840 = vmatprep.subr.bf16.mxu0 %v2471
    %2841 = vmatpush1.bf16.msra.mxu0 %v2470
    %2842 = vmatprep.subr.bf16.mxu0 %v2475
    %2843 = vmatpush1.bf16.msra.mxu0 %v2474
    %2844 = vmatprep.subr.bf16.mxu0 %v2479
    %2845 = vmatpush1.bf16.msra.mxu0 %v2478
    %2846 = vmatprep.subr.bf16.mxu0 %v2483
    %2847 = vmatpush1.bf16.msra.mxu0 %v2482
    %2848 = vmatprep.subr.bf16.mxu0 %v2487
    %2849 = vmatpush1.bf16.msra.mxu0 %v2486
    %2850 = vmatprep.subr.bf16.mxu0 %v2491
    %2851 = vmatpush1.bf16.msra.mxu0 %v2490
    %2852 = vmatprep.subr.bf16.mxu0 %v2495
    %2853 = vmatpush1.bf16.msra.mxu0 %v2494
    %2854 = vmatprep.subr.bf16.mxu0 %v2499
    %2855 = vmatpush1.bf16.msra.mxu0 %v2498
    %2856 = vmatprep.subr.bf16.mxu0 %v2503
    %2857 = vmatpush1.bf16.msra.mxu0 %v2502
    %2858 = vmatprep.mubr.bf16.mxu0 %v1669
    %2859 = vmatmul.mubr.bf16.gmra.mrb[0].mxu0 %v1668
    %v2860 = vpop.f32.mrb[0].mxu0
    %v2861 = vadd.f32 0.0, %v2860
    %v2862 = vpop.f32.mrb[0].mxu0
    %v2863 = vadd.f32 0.0, %v2862
    %v2864 = vpop.f32.mrb[0].mxu0
    %v2865 = vpop.f32.mrb[0].mxu0
    %2866 = vdwg.mxu0
    %2867 = vmatprep.subr.bf16.mxu0 %v2507
    %2868 = vmatpush1.bf16.msra.mxu0 %v2506
    %2869 = vmatprep.subr.bf16.mxu0 %v2511
    %2870 = vmatpush1.bf16.msra.mxu0 %v2510
    %2871 = vmatprep.subr.bf16.mxu0 %v2515
    %2872 = vmatpush1.bf16.msra.mxu0 %v2514
    %2873 = vmatprep.subr.bf16.mxu0 %v2519
    %2874 = vmatpush1.bf16.msra.mxu0 %v2518
    %2875 = vmatprep.subr.bf16.mxu0 %v2523
    %2876 = vmatpush1.bf16.msra.mxu0 %v2522
    %2877 = vmatprep.subr.bf16.mxu0 %v2527
    %2878 = vmatpush1.bf16.msra.mxu0 %v2526
    %2879 = vmatprep.subr.bf16.mxu0 %v2531
    %2880 = vmatpush1.bf16.msra.mxu0 %v2530
    %2881 = vmatprep.subr.bf16.mxu0 %v2535
    %2882 = vmatpush1.bf16.msra.mxu0 %v2534
    %2883 = vmatprep.subr.bf16.mxu0 %v2539
    %2884 = vmatpush1.bf16.msra.mxu0 %v2538
    %2885 = vmatprep.subr.bf16.mxu0 %v2543
    %2886 = vmatpush1.bf16.msra.mxu0 %v2542
    %2887 = vmatprep.subr.bf16.mxu0 %v2547
    %2888 = vmatpush1.bf16.msra.mxu0 %v2546
    %2889 = vmatprep.subr.bf16.mxu0 %v2551
    %2890 = vmatpush1.bf16.msra.mxu0 %v2550
    %2891 = vmatprep.subr.bf16.mxu0 %v2555
    %2892 = vmatpush1.bf16.msra.mxu0 %v2554
    %2893 = vmatprep.subr.bf16.mxu0 %v2559
    %2894 = vmatpush1.bf16.msra.mxu0 %v2558
    %2895 = vmatprep.subr.bf16.mxu0 %v2563
    %2896 = vmatpush1.bf16.msra.mxu0 %v2562
    %2897 = vmatprep.subr.bf16.mxu0 %v2567
    %2898 = vmatpush1.bf16.msra.mxu0 %v2566
    %2899 = vmatprep.mubr.bf16.mxu0 %v1671
    %2900 = vmatmul.mubr.bf16.gmra.mrb[0].mxu0 %v1670
    %v2901 = vpop.f32.mrb[0].mxu0
    %v2902 = vadd.f32 %v2861, %v2901
    %v2903 = vpop.f32.mrb[0].mxu0
    %v2904 = vadd.f32 %v2863, %v2903
    %v2905 = vpop.f32.mrb[0].mxu0
    %v2906 = vpop.f32.mrb[0].mxu0
    %2907 = vdwg.mxu0
    %2908 = vmatprep.subr.bf16.mxu0 %v2571
    %2909 = vmatpush1.bf16.msra.mxu0 %v2570
    %2910 = vmatprep.subr.bf16.mxu0 %v2575
    %2911 = vmatpush1.bf16.msra.mxu0 %v2574
    %2912 = vmatprep.subr.bf16.mxu0 %v2579
    %2913 = vmatpush1.bf16.msra.mxu0 %v2578
    %2914 = vmatprep.subr.bf16.mxu0 %v2583
    %2915 = vmatpush1.bf16.msra.mxu0 %v2582
    %2916 = vmatprep.subr.bf16.mxu0 %v2587
    %2917 = vmatpush1.bf16.msra.mxu0 %v2586
    %2918 = vmatprep.subr.bf16.mxu0 %v2591
    %2919 = vmatpush1.bf16.msra.mxu0 %v2590
    %2920 = vmatprep.subr.bf16.mxu0 %v2595
    %2921 = vmatpush1.bf16.msra.mxu0 %v2594
    %2922 = vmatprep.subr.bf16.mxu0 %v2599
    %2923 = vmatpush1.bf16.msra.mxu0 %v2598
    %2924 = vmatprep.subr.bf16.mxu0 %v2603
    %2925 = vmatpush1.bf16.msra.mxu0 %v2602
    %2926 = vmatprep.subr.bf16.mxu0 %v2607
    %2927 = vmatpush1.bf16.msra.mxu0 %v2606
    %2928 = vmatprep.subr.bf16.mxu0 %v2611
    %2929 = vmatpush1.bf16.msra.mxu0 %v2610
    %2930 = vmatprep.subr.bf16.mxu0 %v2615
    %2931 = vmatpush1.bf16.msra.mxu0 %v2614
    %2932 = vmatprep.subr.bf16.mxu0 %v2619
    %2933 = vmatpush1.bf16.msra.mxu0 %v2618
    %2934 = vmatprep.subr.bf16.mxu0 %v2623
    %2935 = vmatpush1.bf16.msra.mxu0 %v2622
    %2936 = vmatprep.subr.bf16.mxu0 %v2627
    %2937 = vmatpush1.bf16.msra.mxu0 %v2626
    %2938 = vmatprep.subr.bf16.mxu0 %v2631
    %2939 = vmatpush1.bf16.msra.mxu0 %v2630
    %2940 = vmatprep.mubr.bf16.mxu0 %v1673
    %2941 = vmatmul.mubr.bf16.gmra.mrb[0].mxu0 %v1672
    %v2942 = vpop.f32.mrb[0].mxu0
    %v2943 = vadd.f32 %v2902, %v2942
    %v2944 = vpop.f32.mrb[0].mxu0
    %v2945 = vadd.f32 %v2904, %v2944
    %v2946 = vpop.f32.mrb[0].mxu0
    %v2947 = vpop.f32.mrb[0].mxu0
    %2948 = vdwg.mxu0
    %2949 = vmatprep.subr.bf16.mxu0 %v2445
    %2950 = vmatpush1.bf16.msra.mxu0 %v2444
    %2951 = vmatprep.subr.bf16.mxu0 %v2449
    %2952 = vmatpush1.bf16.msra.mxu0 %v2448
    %2953 = vmatprep.subr.bf16.mxu0 %v2453
    %2954 = vmatpush1.bf16.msra.mxu0 %v2452
    %2955 = vmatprep.subr.bf16.mxu0 %v2457
    %2956 = vmatpush1.bf16.msra.mxu0 %v2456
    %2957 = vmatprep.subr.bf16.mxu0 %v2461
    %2958 = vmatpush1.bf16.msra.mxu0 %v2460
    %2959 = vmatprep.subr.bf16.mxu0 %v2465
    %2960 = vmatpush1.bf16.msra.mxu0 %v2464
    %2961 = vmatprep.subr.bf16.mxu0 %v2469
    %2962 = vmatpush1.bf16.msra.mxu0 %v2468
    %2963 = vmatprep.subr.bf16.mxu0 %v2473
    %2964 = vmatpush1.bf16.msra.mxu0 %v2472
    %2965 = vmatprep.subr.bf16.mxu0 %v2477
    %2966 = vmatpush1.bf16.msra.mxu0 %v2476
    %2967 = vmatprep.subr.bf16.mxu0 %v2481
    %2968 = vmatpush1.bf16.msra.mxu0 %v2480
    %2969 = vmatprep.subr.bf16.mxu0 %v2485
    %2970 = vmatpush1.bf16.msra.mxu0 %v2484
    %2971 = vmatprep.subr.bf16.mxu0 %v2489
    %2972 = vmatpush1.bf16.msra.mxu0 %v2488
    %2973 = vmatprep.subr.bf16.mxu0 %v2493
    %2974 = vmatpush1.bf16.msra.mxu0 %v2492
    %2975 = vmatprep.subr.bf16.mxu0 %v2497
    %2976 = vmatpush1.bf16.msra.mxu0 %v2496
    %2977 = vmatprep.subr.bf16.mxu0 %v2501
    %2978 = vmatpush1.bf16.msra.mxu0 %v2500
    %2979 = vmatprep.subr.bf16.mxu0 %v2505
    %2980 = vmatpush1.bf16.msra.mxu0 %v2504
    %2981 = vmatprep.mubr.bf16.mxu0 %v1669
    %2982 = vmatmul.mubr.bf16.gmra.mrb[0].mxu0 %v1668
    %v2983 = vpop.f32.mrb[0].mxu0
    %v2984 = vadd.f32 0.0, %v2983
    %v2985 = vpop.f32.mrb[0].mxu0
    %v2986 = vadd.f32 0.0, %v2985
    %v2987 = vpop.f32.mrb[0].mxu0
    %v2988 = vpop.f32.mrb[0].mxu0
    %2989 = vdwg.mxu0
    %2990 = vmatprep.subr.bf16.mxu0 %v2509
    %2991 = vmatpush1.bf16.msra.mxu0 %v2508
    %2992 = vmatprep.subr.bf16.mxu0 %v2513
    %2993 = vmatpush1.bf16.msra.mxu0 %v2512
    %2994 = vmatprep.subr.bf16.mxu0 %v2517
    %2995 = vmatpush1.bf16.msra.mxu0 %v2516
    %2996 = vmatprep.subr.bf16.mxu0 %v2521
    %2997 = vmatpush1.bf16.msra.mxu0 %v2520
    %2998 = vmatprep.subr.bf16.mxu0 %v2525
    %2999 = vmatpush1.bf16.msra.mxu0 %v2524
    %3000 = vmatprep.subr.bf16.mxu0 %v2529
    %3001 = vmatpush1.bf16.msra.mxu0 %v2528
    %3002 = vmatprep.subr.bf16.mxu0 %v2533
    %3003 = vmatpush1.bf16.msra.mxu0 %v2532
    %3004 = vmatprep.subr.bf16.mxu0 %v2537
    %3005 = vmatpush1.bf16.msra.mxu0 %v2536
    %3006 = vmatprep.subr.bf16.mxu0 %v2541
    %3007 = vmatpush1.bf16.msra.mxu0 %v2540
    %3008 = vmatprep.subr.bf16.mxu0 %v2545
    %3009 = vmatpush1.bf16.msra.mxu0 %v2544
    %3010 = vmatprep.subr.bf16.mxu0 %v2549
    %3011 = vmatpush1.bf16.msra.mxu0 %v2548
    %3012 = vmatprep.subr.bf16.mxu0 %v2553
    %3013 = vmatpush1.bf16.msra.mxu0 %v2552
    %3014 = vmatprep.subr.bf16.mxu0 %v2557
    %3015 = vmatpush1.bf16.msra.mxu0 %v2556
    %3016 = vmatprep.subr.bf16.mxu0 %v2561
    %3017 = vmatpush1.bf16.msra.mxu0 %v2560
    %3018 = vmatprep.subr.bf16.mxu0 %v2565
    %3019 = vmatpush1.bf16.msra.mxu0 %v2564
    %3020 = vmatprep.subr.bf16.mxu0 %v2569
    %3021 = vmatpush1.bf16.msra.mxu0 %v2568
    %3022 = vmatprep.mubr.bf16.mxu0 %v1671
    %3023 = vmatmul.mubr.bf16.gmra.mrb[0].mxu0 %v1670
    %v3024 = vpop.f32.mrb[0].mxu0
    %v3025 = vadd.f32 %v2984, %v3024
    %v3026 = vpop.f32.mrb[0].mxu0
    %v3027 = vadd.f32 %v2986, %v3026
    %v3028 = vpop.f32.mrb[0].mxu0
    %v3029 = vpop.f32.mrb[0].mxu0
    %3030 = vdwg.mxu0
    %3031 = vmatprep.subr.bf16.mxu0 %v2573
    %3032 = vmatpush1.bf16.msra.mxu0 %v2572
    %3033 = vmatprep.subr.bf16.mxu0 %v2577
    %3034 = vmatpush1.bf16.msra.mxu0 %v2576
    %3035 = vmatprep.subr.bf16.mxu0 %v2581
    %3036 = vmatpush1.bf16.msra.mxu0 %v2580
    %3037 = vmatprep.subr.bf16.mxu0 %v2585
    %3038 = vmatpush1.bf16.msra.mxu0 %v2584
    %3039 = vmatprep.subr.bf16.mxu0 %v2589
    %3040 = vmatpush1.bf16.msra.mxu0 %v2588
    %3041 = vmatprep.subr.bf16.mxu0 %v2593
    %3042 = vmatpush1.bf16.msra.mxu0 %v2592
    %3043 = vmatprep.subr.bf16.mxu0 %v2597
    %3044 = vmatpush1.bf16.msra.mxu0 %v2596
    %3045 = vmatprep.subr.bf16.mxu0 %v2601
    %3046 = vmatpush1.bf16.msra.mxu0 %v2600
    %3047 = vmatprep.subr.bf16.mxu0 %v2605
    %3048 = vmatpush1.bf16.msra.mxu0 %v2604
    %3049 = vmatprep.subr.bf16.mxu0 %v2609
    %3050 = vmatpush1.bf16.msra.mxu0 %v2608
    %3051 = vmatprep.subr.bf16.mxu0 %v2613
    %3052 = vmatpush1.bf16.msra.mxu0 %v2612
    %3053 = vmatprep.subr.bf16.mxu0 %v2617
    %3054 = vmatpush1.bf16.msra.mxu0 %v2616
    %3055 = vmatprep.subr.bf16.mxu0 %v2621
    %3056 = vmatpush1.bf16.msra.mxu0 %v2620
    %3057 = vmatprep.subr.bf16.mxu0 %v2625
    %3058 = vmatpush1.bf16.msra.mxu0 %v2624
    %3059 = vmatprep.subr.bf16.mxu0 %v2629
    %3060 = vmatpush1.bf16.msra.mxu0 %v2628
    %3061 = vmatprep.subr.bf16.mxu0 %v2633
    %3062 = vmatpush1.bf16.msra.mxu0 %v2632
    %3063 = vmatprep.mubr.bf16.mxu0 %v1673
    %3064 = vmatmul.mubr.bf16.gmra.mrb[0].mxu0 %v1672
    %v3065 = vpop.f32.mrb[0].mxu0
    %v3066 = vadd.f32 %v3025, %v3065
    %v3067 = vpop.f32.mrb[0].mxu0
    %v3068 = vadd.f32 %v3027, %v3067
    %v3069 = vpop.f32.mrb[0].mxu0
    %v3070 = vpop.f32.mrb[0].mxu0
    %3071 = vdwg.mxu0
    %v3072 = vld [vmem:[#allocation12] sm:$0xf]
    %v3074 = vlaneseq
    %v3075 = vshrl.u32 %v3074, 7
    %v3076 = vsub.s32 0, %v3075
    %v3077 = vrot.slane %v3072, %v3076
    %v3078 = vlaneseq
    %v3079 = vshrl.u32 %v3078, 7
    %v3080 = vsub.s32 1, %v3079
    %v3081 = vrot.slane %v3072, %v3080
    %v3082 = vlaneseq
    %v3083 = vshrl.u32 %v3082, 7
    %v3084 = vsub.s32 2, %v3083
    %v3085 = vrot.slane %v3072, %v3084
    %v3086 = vlaneseq
    %v3087 = vshrl.u32 %v3086, 7
    %v3088 = vsub.s32 3, %v3087
    %v3089 = vrot.slane %v3072, %v3088
    %v3094 = vmul.f32 %v2943, %v3077
    %v3095 = vmul.f32 %v2945, %v3081
    %v3096 = vmul.f32 %v3066, %v3085
    %v3097 = vmul.f32 %v3068, %v3089
    %v3098 = vld [vmem:[#allocation13] sm:$0xf]
    %v3100 = vlaneseq
    %v3101 = vshrl.u32 %v3100, 7
    %v3102 = vsub.s32 0, %v3101
    %v3103 = vrot.slane %v3098, %v3102
    %v3104 = vlaneseq
    %v3105 = vshrl.u32 %v3104, 7
    %v3106 = vsub.s32 1, %v3105
    %v3107 = vrot.slane %v3098, %v3106
    %v3108 = vlaneseq
    %v3109 = vshrl.u32 %v3108, 7
    %v3110 = vsub.s32 2, %v3109
    %v3111 = vrot.slane %v3098, %v3110
    %v3112 = vlaneseq
    %v3113 = vshrl.u32 %v3112, 7
    %v3114 = vsub.s32 3, %v3113
    %v3115 = vrot.slane %v3098, %v3114
    %v3120 = vadd.f32 %v3094, %v3103
    %v3121 = vadd.f32 %v3095, %v3107
    %v3122 = vadd.f32 %v3096, %v3111
    %v3123 = vadd.f32 %v3097, %v3115
    %v3124 = vmax.f32 %v3120, 0.0
    %v3125 = vmax.f32 %v3121, 0.0
    %v3126 = vmax.f32 %v3122, 0.0
    %v3127 = vmax.f32 %v3123, 0.0
    %v3128 = vadd.f32 %v1658, %v1659
    %v3129 = vadd.f32 %v3128, %v1660
    %v3130 = vadd.f32 %v3129, %v1661
    %3131 = vadd.xlane.f32.xlu0 %v3130
    %v3132 = vpop.xlane.xlu0 %3131
    %v3133 = vrot.slane %v3132, 4
    %v3134 = vadd.f32 %v3132, %v3133
    %v3135 = vrot.slane %v3134, 2
    %v3136 = vadd.f32 %v3134, %v3135
    %v3137 = vrot.slane %v3136, 1
    %v3138 = vadd.f32 %v3136, %v3137
    %s3139 = vtos %v3138
    %v3140 = vrcp.pop 4096.0
    %s3141 = vtos %v3140
    %s3142 = smul.f32 %s3139, %s3141
    %v3143 = vstv %s3142
    %v3144 = vsub.f32 %v1658, %v3143
    %v3145 = vsub.f32 %v1659, %v3143
    %v3146 = vsub.f32 %v1660, %v3143
    %v3147 = vsub.f32 %v1661, %v3143
    %v3148 = vmul.f32 %v3144, %v3144
    %v3149 = vmul.f32 %v3145, %v3145
    %v3150 = vmul.f32 %v3146, %v3146
    %v3151 = vmul.f32 %v3147, %v3147
    %v3152 = vadd.f32 %v3148, %v3149
    %v3153 = vadd.f32 %v3152, %v3150
    %v3154 = vadd.f32 %v3153, %v3151
    %3155 = vadd.xlane.f32.xlu0 %v3154
    %v3156 = vpop.xlane.xlu0 %3155
    %v3157 = vrot.slane %v3156, 4
    %v3158 = vadd.f32 %v3156, %v3157
    %v3159 = vrot.slane %v3158, 2
    %v3160 = vadd.f32 %v3158, %v3159
    %v3161 = vrot.slane %v3160, 1
    %v3162 = vadd.f32 %v3160, %v3161
    %s3163 = vtos %v3162
    %v3164 = vrcp.pop 4095.0
    %s3165 = vtos %v3164
    %s3166 = smul.f32 %s3163, %s3165
    %v3167 = vstv %s3166
    %v3168 = vrsqrt.pop %v3167
    %v3169 = vmul.f32 %v3167, %v3168
    %vm3170 = vcmp.eq.f32.partialorder %v3167, inf
    %v3171 = vsel %vm3170, %v3167, %v3169
    %vm3172 = vcmp.eq.f32.partialorder %v3167, 0.0
    %v3173 = vand.u32 %v3167, 2147483648
    %v3174 = vsel %vm3172, %v3173, %v3171
    %s3175 = vtos %v3174
    %v3176 = vmul.f32 %v3148, %v3144
    %v3177 = vmul.f32 %v3149, %v3145
    %v3178 = vmul.f32 %v3150, %v3146
    %v3179 = vmul.f32 %v3151, %v3147
    %v3180 = vadd.f32 %v3176, %v3177
    %v3181 = vadd.f32 %v3180, %v3178
    %v3182 = vadd.f32 %v3181, %v3179
    %3183 = vadd.xlane.f32.xlu0 %v3182
    %v3184 = vpop.xlane.xlu0 %3183
    %v3185 = vrot.slane %v3184, 4
    %v3186 = vadd.f32 %v3184, %v3185
    %v3187 = vrot.slane %v3186, 2
    %v3188 = vadd.f32 %v3186, %v3187
    %v3189 = vrot.slane %v3188, 1
    %v3190 = vadd.f32 %v3188, %v3189
    %s3191 = vtos %v3190
    %v3192 = vrcp.pop 4096.0
    %s3193 = vtos %v3192
    %s3194 = smul.f32 %s3191, %s3193
    %s3195 = smul.f32 %s3175, %s3175
    %s3196 = smul.f32 %s3195, %s3175
    %s3197 = sadd.f32 %s3196, 1e-05
    %v3198 = vstv %s3197
    %v3199 = vrcp.pop %v3198
    %s3200 = vtos %v3199
    %s3201 = smul.f32 %s3194, %s3200
    %v3202 = vmin.f32 %v1658, %v1659
    %v3203 = vmin.f32 %v1660, %v1661
    %v3204 = vmin.f32 %v3202, %v3203
    %3205 = vmin.xlane.f32.xlu0 %v3204
    %v3206 = vpop.xlane.xlu0 %3205
    %v3207 = vrot.slane %v3206, 4
    %v3208 = vmin.f32 %v3206, %v3207
    %v3209 = vrot.slane %v3208, 2
    %v3210 = vmin.f32 %v3208, %v3209
    %v3211 = vrot.slane %v3210, 1
    %v3212 = vmin.f32 %v3210, %v3211
    %s3213 = vtos %v3212
    %v3214 = vmax.f32 %v1658, %v1659
    %v3215 = vmax.f32 %v1660, %v1661
    %v3216 = vmax.f32 %v3214, %v3215
    %3217 = vmax.xlane.f32.xlu0 %v3216
    %v3218 = vpop.xlane.xlu0 %3217
    %v3219 = vrot.slane %v3218, 4
    %v3220 = vmax.f32 %v3218, %v3219
    %v3221 = vrot.slane %v3220, 2
    %v3222 = vmax.f32 %v3220, %v3221
    %v3223 = vrot.slane %v3222, 1
    %v3224 = vmax.f32 %v3222, %v3223
    %s3225 = vtos %v3224
    %p3226 = scmp.gt.f32.partialorder %s3201, -0.5
    %p3227 = scmp.lt.f32.partialorder %s3201, 0.5
    %p3228 = pnand %p3226, %p3227
    %p3229 = pneg %p3228
    %p3230 = scmp.ge.f32.partialorder %s3213, 0.0
    %p3231 = pnand %p3229, %p3230
    %p3232 = pneg %p3231
    %p3233 = scmp.lt.f32.partialorder %s3213, %s3225
    %p3234 = pnand %p3232, %p3233
    %p3235 = pneg %p3234
    %p3236 = scmp.le.f32.partialorder %s3225, 1.0
    %p3237 = pnand %p3235, %p3236
    %p3238 = pneg %p3237
    %p3239 = scmp.lt.f32.partialorder %s3201, -0.5
    %p3240 = scmp.gt.f32.partialorder %s3201, 0.5
    %p3241 = por %p3239, %p3240
    %p3242 = scmp.gt.f32.partialorder %s3142, 0.7
    %p3243 = scmp.gt.f32.partialorder %s3225, 1.5
    %p3244 = por %p3242, %p3243
    %p3245 = scmp.lt.f32.partialorder %s3175, 0.1
    %s3246 = scalar_select %p3245, 2, 3
    %s3247 = scalar_select %p3244, 0, 4
    %s3248 = scalar_select %p3241, 1, %s3247
    %s3249 = scalar_select %p3238, %s3246, %s3248
    %v3250 = vrcp.pop 512.0
    %v3251 = vmul.f32 %v3132, %v3250
    %v3252 = vsub.f32 %v1658, %v3251
    %v3253 = vsub.f32 %v1659, %v3251
    %v3254 = vsub.f32 %v1660, %v3251
    %v3255 = vsub.f32 %v1661, %v3251
    %v3256 = vmul.f32 %v3252, %v3252
    %v3257 = vmul.f32 %v3253, %v3253
    %v3258 = vmul.f32 %v3254, %v3254
    %v3259 = vmul.f32 %v3255, %v3255
    %v3260 = vadd.f32 %v3256, %v3257
    %v3261 = vadd.f32 %v3260, %v3258
    %v3262 = vadd.f32 %v3261, %v3259
    %3263 = vadd.xlane.f32.xlu0 %v3262
    %v3264 = vpop.xlane.xlu0 %3263
    %v3265 = vrcp.pop 511.0
    %v3266 = vmul.f32 %v3264, %v3265
    %v3267 = vrsqrt.pop %v3266
    %v3268 = vmul.f32 %v3266, %v3267
    %vm3269 = vcmp.eq.f32.partialorder %v3266, inf
    %v3270 = vsel %vm3269, %v3266, %v3268
    %vm3271 = vcmp.eq.f32.partialorder %v3266, 0.0
    %v3272 = vand.u32 %v3266, 2147483648
    %v3273 = vsel %vm3271, %v3272, %v3270
    %v3274 = vadd.f32 %v3273, 1e-05
    %v3275 = vrcp.pop %v3274
    %v3276 = vmul.f32 %v3252, %v3275
    %v3277 = vmul.f32 %v3253, %v3275
    %v3278 = vmul.f32 %v3254, %v3275
    %v3279 = vmul.f32 %v3255, %v3275
    %p3280 = scmp.eq.s32.totalorder %s3249, 0
    // Predicated region
    $region114: #{forward.1} parent=1 // pred_check
      %p3281 = pneg %p3280
    $region115: #{forward.1} parent=1 // pred_check_branch
      %3283 = sbr.rel (%p3281) target = $region117
    $region116: #{forward.1} parent=1 // pred_region
      %v3284 = vmax.f32 %v3276, -4.0
      %v3285 = vmax.f32 %v3277, -4.0
      %v3286 = vmax.f32 %v3278, -4.0
      %v3287 = vmax.f32 %v3279, -4.0
      %v3288 = vmin.f32 %v3284, 4.0
      %v3289 = vmin.f32 %v3285, 4.0
      %v3290 = vmin.f32 %v3286, 4.0
      %v3291 = vmin.f32 %v3287, 4.0
      %v3292 = vsub.f32 0.0, %v3288
      %v3293 = vsub.f32 0.0, %v3289
      %v3294 = vsub.f32 0.0, %v3290
      %v3295 = vsub.f32 0.0, %v3291
      %v3296 = vmul.f32 %v3292, 1.442695
      %v3297 = vpow.pop %v3296
      %v3298 = vmul.f32 %v3293, 1.442695
      %v3299 = vpow.pop %v3298
      %v3300 = vmul.f32 %v3294, 1.442695
      %v3301 = vpow.pop %v3300
      %v3302 = vmul.f32 %v3295, 1.442695
      %v3303 = vpow.pop %v3302
      %v3304 = vadd.f32 %v3297, 1.0
      %v3305 = vadd.f32 %v3299, 1.0
      %v3306 = vadd.f32 %v3301, 1.0
      %v3307 = vadd.f32 %v3303, 1.0
      %v3308 = vrcp.pop %v3304
      %v3309 = vmul.f32 1.0, %v3308
      %v3310 = vrcp.pop %v3305
      %v3311 = vmul.f32 1.0, %v3310
      %v3312 = vrcp.pop %v3306
      %v3313 = vmul.f32 1.0, %v3312
      %v3314 = vrcp.pop %v3307
      %v3315 = vmul.f32 1.0, %v3314
      %3316 = vst [vmem:[#allocation2] sm:$0xff] %v3309
      %3317 = vst [vmem:[#allocation2 + $0x8] sm:$0xff] %v3311
      %3318 = vst [vmem:[#allocation2 + $0x10] sm:$0xff] %v3313
      %3319 = vst [vmem:[#allocation2 + $0x18] sm:$0xff] %v3315
    $region117: #{forward.1} parent=1 // pred_fallthru
      _
    %p3320 = scmp.eq.s32.totalorder %s3249, 1
    // Predicated region
    $region118: #{forward.1} parent=1 // pred_check
      %p3321 = pneg %p3320
    $region119: #{forward.1} parent=1 // pred_check_branch
      %3323 = sbr.rel (%p3321) target = $region121
    $region120: #{forward.1} parent=1 // pred_region
      %v3324 = vmax.f32 %v3276, -2.0
      %v3325 = vmax.f32 %v3277, -2.0
      %v3326 = vmax.f32 %v3278, -2.0
      %v3327 = vmax.f32 %v3279, -2.0
      %v3328 = vmin.f32 %v3324, 2.0
      %v3329 = vmin.f32 %v3325, 2.0
      %v3330 = vmin.f32 %v3326, 2.0
      %v3331 = vmin.f32 %v3327, 2.0
      %v3332 = vtanh.pop %v3328
      %v3333 = vtanh.pop %v3329
      %v3334 = vtanh.pop %v3330
      %v3335 = vtanh.pop %v3331
      %3336 = vst [vmem:[#allocation2] sm:$0xff] %v3332
      %3337 = vst [vmem:[#allocation2 + $0x8] sm:$0xff] %v3333
      %3338 = vst [vmem:[#allocation2 + $0x10] sm:$0xff] %v3334
      %3339 = vst [vmem:[#allocation2 + $0x18] sm:$0xff] %v3335
    $region121: #{forward.1} parent=1 // pred_fallthru
      _
    %p3340 = scmp.eq.s32.totalorder %s3249, 2
    // Predicated region
    $region122: #{forward.1} parent=1 // pred_check
      %p3341 = pneg %p3340
    $region123: #{forward.1} parent=1 // pred_check_branch
      %3343 = sbr.rel (%p3341) target = $region125
    $region124: #{forward.1} parent=1 // pred_region
      %v3344 = vmax.f32 %v3276, -30.0
      %v3345 = vmax.f32 %v3277, -30.0
      %v3346 = vmax.f32 %v3278, -30.0
      %v3347 = vmax.f32 %v3279, -30.0
      %v3348 = vmin.f32 %v3344, 30.0
      %v3349 = vmin.f32 %v3345, 30.0
      %v3350 = vmin.f32 %v3346, 30.0
      %v3351 = vmin.f32 %v3347, 30.0
      %v3352 = vmul.f32 %v3348, 1.442695
      %v3353 = vpow.pop %v3352
      %v3354 = vmul.f32 %v3349, 1.442695
      %v3355 = vpow.pop %v3354
      %v3356 = vmul.f32 %v3350, 1.442695
      %v3357 = vpow.pop %v3356
      %v3358 = vmul.f32 %v3351, 1.442695
      %v3359 = vpow.pop %v3358
      %v3360 = vadd.f32 %v3353, 1.0
      %v3361 = vadd.f32 %v3355, 1.0
      %v3362 = vadd.f32 %v3357, 1.0
      %v3363 = vadd.f32 %v3359, 1.0
      %v3364 = vlog2.pop %v3360
      %v3365 = vmul.f32 %v3364, 0.6931472
      %v3366 = vlog2.pop %v3361
      %v3367 = vmul.f32 %v3366, 0.6931472
      %v3368 = vlog2.pop %v3362
      %v3369 = vmul.f32 %v3368, 0.6931472
      %v3370 = vlog2.pop %v3363
      %v3371 = vmul.f32 %v3370, 0.6931472
      %v3372 = vmax.f32 %v3365, 0.0
      %v3373 = vmax.f32 %v3367, 0.0
      %v3374 = vmax.f32 %v3369, 0.0
      %v3375 = vmax.f32 %v3371, 0.0
      %v3376 = vmin.f32 %v3372, 1.0
      %v3377 = vmin.f32 %v3373, 1.0
      %v3378 = vmin.f32 %v3374, 1.0
      %v3379 = vmin.f32 %v3375, 1.0
      %3380 = vst [vmem:[#allocation2] sm:$0xff] %v3376
      %3381 = vst [vmem:[#allocation2 + $0x8] sm:$0xff] %v3377
      %3382 = vst [vmem:[#allocation2 + $0x10] sm:$0xff] %v3378
      %3383 = vst [vmem:[#allocation2 + $0x18] sm:$0xff] %v3379
    $region125: #{forward.1} parent=1 // pred_fallthru
      _
    %p3384 = scmp.eq.s32.totalorder %s3249, 3
    // Predicated region
    $region126: #{forward.1} parent=1 // pred_check
      %p3385 = pneg %p3384
    $region127: #{forward.1} parent=1 // pred_check_branch
      %3387 = sbr.rel (%p3385) target = $region129
    $region128: #{forward.1} parent=1 // pred_region
      %v3388 = vmax.f32 %v3276, 0.0
      %v3389 = vmax.f32 %v3277, 0.0
      %v3390 = vmax.f32 %v3278, 0.0
      %v3391 = vmax.f32 %v3279, 0.0
      %v3392 = vmin.f32 %v3388, 1.0
      %v3393 = vmin.f32 %v3389, 1.0
      %v3394 = vmin.f32 %v3390, 1.0
      %v3395 = vmin.f32 %v3391, 1.0
      %v3396 = vsub.f32 %v3392, 0.5
      %v3397 = vsub.f32 %v3393, 0.5
      %v3398 = vsub.f32 %v3394, 0.5
      %v3399 = vsub.f32 %v3395, 0.5
      %v3400 = vmul.f32 %v3396, %v3396
      %v3401 = vmul.f32 %v3397, %v3397
      %v3402 = vmul.f32 %v3398, %v3398
      %v3403 = vmul.f32 %v3399, %v3399
      %v3404 = vsub.f32 0.0, %v3400
      %v3405 = vsub.f32 0.0, %v3401
      %v3406 = vsub.f32 0.0, %v3402
      %v3407 = vsub.f32 0.0, %v3403
      %v3408 = vrcp.pop 0.045
      %v3409 = vmul.f32 %v3404, %v3408
      %v3410 = vmul.f32 %v3405, %v3408
      %v3411 = vmul.f32 %v3406, %v3408
      %v3412 = vmul.f32 %v3407, %v3408
      %v3413 = vmul.f32 %v3409, 1.442695
      %v3414 = vpow.pop %v3413
      %v3415 = vmul.f32 %v3410, 1.442695
      %v3416 = vpow.pop %v3415
      %v3417 = vmul.f32 %v3411, 1.442695
      %v3418 = vpow.pop %v3417
      %v3419 = vmul.f32 %v3412, 1.442695
      %v3420 = vpow.pop %v3419
      %3421 = vst [vmem:[#allocation2] sm:$0xff] %v3414
      %3422 = vst [vmem:[#allocation2 + $0x8] sm:$0xff] %v3416
      %3423 = vst [vmem:[#allocation2 + $0x10] sm:$0xff] %v3418
      %3424 = vst [vmem:[#allocation2 + $0x18] sm:$0xff] %v3420
    $region129: #{forward.1} parent=1 // pred_fallthru
      _
    %p3425 = scmp.eq.s32.totalorder %s3249, 4
    // Predicated region
    $region130: #{forward.1} parent=1 // pred_check
      %p3426 = pneg %p3425
    $region131: #{forward.1} parent=1 // pred_check_branch
      %3428 = sbr.rel (%p3426) target = $region133
    $region132: #{forward.1} parent=1 // pred_region
      %v3429 = vmax.f32 %v3276, 0.0
      %v3430 = vmax.f32 %v3277, 0.0
      %v3431 = vmax.f32 %v3278, 0.0
      %v3432 = vmax.f32 %v3279, 0.0
      %v3433 = vmin.f32 %v3429, 1.0
      %v3434 = vmin.f32 %v3430, 1.0
      %v3435 = vmin.f32 %v3431, 1.0
      %v3436 = vmin.f32 %v3432, 1.0
      %vm3437 = vcmp.lt.f32.partialorder %v3433, 0.3
      %vm3438 = vcmp.lt.f32.partialorder %v3434, 0.3
      %vm3439 = vcmp.lt.f32.partialorder %v3435, 0.3
      %vm3440 = vcmp.lt.f32.partialorder %v3436, 0.3
      %v3441 = vmul.f32 %v3433, 0.2
      %v3442 = vmul.f32 %v3434, 0.2
      %v3443 = vmul.f32 %v3435, 0.2
      %v3444 = vmul.f32 %v3436, 0.2
      %vm3445 = vcmp.lt.f32.partialorder %v3433, 0.7
      %vm3446 = vcmp.lt.f32.partialorder %v3434, 0.7
      %vm3447 = vcmp.lt.f32.partialorder %v3435, 0.7
      %vm3448 = vcmp.lt.f32.partialorder %v3436, 0.7
      %v3449 = vmul.f32 %v3433, 0.5
      %v3450 = vmul.f32 %v3434, 0.5
      %v3451 = vmul.f32 %v3435, 0.5
      %v3452 = vmul.f32 %v3436, 0.5
      %v3453 = vadd.f32 %v3449, 0.5
      %v3454 = vadd.f32 %v3450, 0.5
      %v3455 = vadd.f32 %v3451, 0.5
      %v3456 = vadd.f32 %v3452, 0.5
      %v3457 = vsel %vm3445, %v3453, 0.9
      %v3458 = vsel %vm3446, %v3454, 0.9
      %v3459 = vsel %vm3447, %v3455, 0.9
      %v3460 = vsel %vm3448, %v3456, 0.9
      %v3461 = vsel %vm3437, %v3441, %v3457
      %v3462 = vsel %vm3438, %v3442, %v3458
      %v3463 = vsel %vm3439, %v3443, %v3459
      %v3464 = vsel %vm3440, %v3444, %v3460
      %3465 = vst [vmem:[#allocation2] sm:$0xff] %v3461
      %3466 = vst [vmem:[#allocation2 + $0x8] sm:$0xff] %v3462
      %3467 = vst [vmem:[#allocation2 + $0x10] sm:$0xff] %v3463
      %3468 = vst [vmem:[#allocation2 + $0x18] sm:$0xff] %v3464
    $region133: #{forward.1} parent=1 // pred_fallthru
      _
    %v3469 = vadd.f32 %v3124, %v3125
    %v3470 = vadd.f32 %v3469, %v3126
    %v3471 = vadd.f32 %v3470, %v3127
    %3472 = vadd.xlane.f32.xlu0 %v3471
    %v3473 = vpop.xlane.xlu0 %3472
    %v3474 = vrot.slane %v3473, 4
    %v3475 = vadd.f32 %v3473, %v3474
    %v3476 = vrot.slane %v3475, 2
    %v3477 = vadd.f32 %v3475, %v3476
    %v3478 = vrot.slane %v3477, 1
    %v3479 = vadd.f32 %v3477, %v3478
    %s3480 = vtos %v3479
    %v3481 = vrcp.pop 4096.0
    %s3482 = vtos %v3481
    %s3483 = smul.f32 %s3480, %s3482
    %v3484 = vstv %s3483
    %v3485 = vsub.f32 %v3124, %v3484
    %v3486 = vsub.f32 %v3125, %v3484
    %v3487 = vsub.f32 %v3126, %v3484
    %v3488 = vsub.f32 %v3127, %v3484
    %v3489 = vmul.f32 %v3485, %v3485
    %v3490 = vmul.f32 %v3486, %v3486
    %v3491 = vmul.f32 %v3487, %v3487
    %v3492 = vmul.f32 %v3488, %v3488
    %v3493 = vadd.f32 %v3489, %v3490
    %v3494 = vadd.f32 %v3493, %v3491
    %v3495 = vadd.f32 %v3494, %v3492
    %3496 = vadd.xlane.f32.xlu0 %v3495
    %v3497 = vpop.xlane.xlu0 %3496
    %v3498 = vrot.slane %v3497, 4
    %v3499 = vadd.f32 %v3497, %v3498
    %v3500 = vrot.slane %v3499, 2
    %v3501 = vadd.f32 %v3499, %v3500
    %v3502 = vrot.slane %v3501, 1
    %v3503 = vadd.f32 %v3501, %v3502
    %s3504 = vtos %v3503
    %v3505 = vrcp.pop 4095.0
    %s3506 = vtos %v3505
    %s3507 = smul.f32 %s3504, %s3506
    %v3508 = vstv %s3507
    %v3509 = vrsqrt.pop %v3508
    %v3510 = vmul.f32 %v3508, %v3509
    %vm3511 = vcmp.eq.f32.partialorder %v3508, inf
    %v3512 = vsel %vm3511, %v3508, %v3510
    %vm3513 = vcmp.eq.f32.partialorder %v3508, 0.0
    %v3514 = vand.u32 %v3508, 2147483648
    %v3515 = vsel %vm3513, %v3514, %v3512
    %s3516 = vtos %v3515
    %v3517 = vmul.f32 %v3489, %v3485
    %v3518 = vmul.f32 %v3490, %v3486
    %v3519 = vmul.f32 %v3491, %v3487
    %v3520 = vmul.f32 %v3492, %v3488
    %v3521 = vadd.f32 %v3517, %v3518
    %v3522 = vadd.f32 %v3521, %v3519
    %v3523 = vadd.f32 %v3522, %v3520
    %3524 = vadd.xlane.f32.xlu0 %v3523
    %v3525 = vpop.xlane.xlu0 %3524
    %v3526 = vrot.slane %v3525, 4
    %v3527 = vadd.f32 %v3525, %v3526
    %v3528 = vrot.slane %v3527, 2
    %v3529 = vadd.f32 %v3527, %v3528
    %v3530 = vrot.slane %v3529, 1
    %v3531 = vadd.f32 %v3529, %v3530
    %s3532 = vtos %v3531
    %v3533 = vrcp.pop 4096.0
    %s3534 = vtos %v3533
    %s3535 = smul.f32 %s3532, %s3534
    %s3536 = smul.f32 %s3516, %s3516
    %s3537 = smul.f32 %s3536, %s3516
    %s3538 = sadd.f32 %s3537, 1e-05
    %v3539 = vstv %s3538
    %v3540 = vrcp.pop %v3539
    %s3541 = vtos %v3540
    %s3542 = smul.f32 %s3535, %s3541
    %v3543 = vmin.f32 %v3124, %v3125
    %v3544 = vmin.f32 %v3126, %v3127
    %v3545 = vmin.f32 %v3543, %v3544
    %3546 = vmin.xlane.f32.xlu0 %v3545
    %v3547 = vpop.xlane.xlu0 %3546
    %v3548 = vrot.slane %v3547, 4
    %v3549 = vmin.f32 %v3547, %v3548
    %v3550 = vrot.slane %v3549, 2
    %v3551 = vmin.f32 %v3549, %v3550
    %v3552 = vrot.slane %v3551, 1
    %v3553 = vmin.f32 %v3551, %v3552
    %s3554 = vtos %v3553
    %v3555 = vmax.f32 %v3124, %v3125
    %v3556 = vmax.f32 %v3126, %v3127
    %v3557 = vmax.f32 %v3555, %v3556
    %3558 = vmax.xlane.f32.xlu0 %v3557
    %v3559 = vpop.xlane.xlu0 %3558
    %v3560 = vrot.slane %v3559, 4
    %v3561 = vmax.f32 %v3559, %v3560
    %v3562 = vrot.slane %v3561, 2
    %v3563 = vmax.f32 %v3561, %v3562
    %v3564 = vrot.slane %v3563, 1
    %v3565 = vmax.f32 %v3563, %v3564
    %s3566 = vtos %v3565
    %p3567 = scmp.gt.f32.partialorder %s3542, -0.5
    %p3568 = scmp.lt.f32.partialorder %s3542, 0.5
    %p3569 = pnand %p3567, %p3568
    %p3570 = pneg %p3569
    %p3571 = scmp.ge.f32.partialorder %s3554, 0.0
    %p3572 = pnand %p3570, %p3571
    %p3573 = pneg %p3572
    %p3574 = scmp.lt.f32.partialorder %s3554, %s3566
    %p3575 = pnand %p3573, %p3574
    %p3576 = pneg %p3575
    %p3577 = scmp.le.f32.partialorder %s3566, 1.0
    %p3578 = pnand %p3576, %p3577
    %p3579 = pneg %p3578
    %p3580 = scmp.lt.f32.partialorder %s3542, -0.5
    %p3581 = scmp.gt.f32.partialorder %s3542, 0.5
    %p3582 = por %p3580, %p3581
    %p3583 = scmp.gt.f32.partialorder %s3483, 0.7
    %p3584 = scmp.gt.f32.partialorder %s3566, 1.5
    %p3585 = por %p3583, %p3584
    %p3586 = scmp.lt.f32.partialorder %s3516, 0.1
    %s3587 = scalar_select %p3586, 2, 3
    %s3588 = scalar_select %p3585, 0, 4
    %s3589 = scalar_select %p3582, 1, %s3588
    %s3590 = scalar_select %p3579, %s3587, %s3589
    %v3591 = vmul.f32 %v3473, %v3250
    %v3592 = vsub.f32 %v3124, %v3591
    %v3593 = vsub.f32 %v3125, %v3591
    %v3594 = vsub.f32 %v3126, %v3591
    %v3595 = vsub.f32 %v3127, %v3591
    %v3596 = vmul.f32 %v3592, %v3592
    %v3597 = vmul.f32 %v3593, %v3593
    %v3598 = vmul.f32 %v3594, %v3594
    %v3599 = vmul.f32 %v3595, %v3595
    %v3600 = vadd.f32 %v3596, %v3597
    %v3601 = vadd.f32 %v3600, %v3598
    %v3602 = vadd.f32 %v3601, %v3599
    %3603 = vadd.xlane.f32.xlu0 %v3602
    %v3604 = vpop.xlane.xlu0 %3603
    %v3605 = vmul.f32 %v3604, %v3265
    %v3606 = vrsqrt.pop %v3605
    %v3607 = vmul.f32 %v3605, %v3606
    %vm3608 = vcmp.eq.f32.partialorder %v3605, inf
    %v3609 = vsel %vm3608, %v3605, %v3607
    %vm3610 = vcmp.eq.f32.partialorder %v3605, 0.0
    %v3611 = vand.u32 %v3605, 2147483648
    %v3612 = vsel %vm3610, %v3611, %v3609
    %v3613 = vadd.f32 %v3612, 1e-05
    %v3614 = vrcp.pop %v3613
    %v3615 = vmul.f32 %v3592, %v3614
    %v3616 = vmul.f32 %v3593, %v3614
    %v3617 = vmul.f32 %v3594, %v3614
    %v3618 = vmul.f32 %v3595, %v3614
    %p3619 = scmp.eq.s32.totalorder %s3590, 0
    // Predicated region
    $region134: #{forward.1} parent=1 // pred_check
      %p3620 = pneg %p3619
    $region135: #{forward.1} parent=1 // pred_check_branch
      %3622 = sbr.rel (%p3620) target = $region137
    $region136: #{forward.1} parent=1 // pred_region
      %v3623 = vmax.f32 %v3615, -4.0
      %v3624 = vmax.f32 %v3616, -4.0
      %v3625 = vmax.f32 %v3617, -4.0
      %v3626 = vmax.f32 %v3618, -4.0
      %v3627 = vmin.f32 %v3623, 4.0
      %v3628 = vmin.f32 %v3624, 4.0
      %v3629 = vmin.f32 %v3625, 4.0
      %v3630 = vmin.f32 %v3626, 4.0
      %v3631 = vsub.f32 0.0, %v3627
      %v3632 = vsub.f32 0.0, %v3628
      %v3633 = vsub.f32 0.0, %v3629
      %v3634 = vsub.f32 0.0, %v3630
      %v3635 = vmul.f32 %v3631, 1.442695
      %v3636 = vpow.pop %v3635
      %v3637 = vmul.f32 %v3632, 1.442695
      %v3638 = vpow.pop %v3637
      %v3639 = vmul.f32 %v3633, 1.442695
      %v3640 = vpow.pop %v3639
      %v3641 = vmul.f32 %v3634, 1.442695
      %v3642 = vpow.pop %v3641
      %v3643 = vadd.f32 %v3636, 1.0
      %v3644 = vadd.f32 %v3638, 1.0
      %v3645 = vadd.f32 %v3640, 1.0
      %v3646 = vadd.f32 %v3642, 1.0
      %v3647 = vrcp.pop %v3643
      %v3648 = vmul.f32 1.0, %v3647
      %v3649 = vrcp.pop %v3644
      %v3650 = vmul.f32 1.0, %v3649
      %v3651 = vrcp.pop %v3645
      %v3652 = vmul.f32 1.0, %v3651
      %v3653 = vrcp.pop %v3646
      %v3654 = vmul.f32 1.0, %v3653
      %3655 = vst [vmem:[#allocation3] sm:$0xff] %v3648
      %3656 = vst [vmem:[#allocation3 + $0x8] sm:$0xff] %v3650
      %3657 = vst [vmem:[#allocation3 + $0x10] sm:$0xff] %v3652
      %3658 = vst [vmem:[#allocation3 + $0x18] sm:$0xff] %v3654
    $region137: #{forward.1} parent=1 // pred_fallthru
      _
    %p3659 = scmp.eq.s32.totalorder %s3590, 1
    // Predicated region
    $region138: #{forward.1} parent=1 // pred_check
      %p3660 = pneg %p3659
    $region139: #{forward.1} parent=1 // pred_check_branch
      %3662 = sbr.rel (%p3660) target = $region141
    $region140: #{forward.1} parent=1 // pred_region
      %v3663 = vmax.f32 %v3615, -2.0
      %v3664 = vmax.f32 %v3616, -2.0
      %v3665 = vmax.f32 %v3617, -2.0
      %v3666 = vmax.f32 %v3618, -2.0
      %v3667 = vmin.f32 %v3663, 2.0
      %v3668 = vmin.f32 %v3664, 2.0
      %v3669 = vmin.f32 %v3665, 2.0
      %v3670 = vmin.f32 %v3666, 2.0
      %v3671 = vtanh.pop %v3667
      %v3672 = vtanh.pop %v3668
      %v3673 = vtanh.pop %v3669
      %v3674 = vtanh.pop %v3670
      %3675 = vst [vmem:[#allocation3] sm:$0xff] %v3671
      %3676 = vst [vmem:[#allocation3 + $0x8] sm:$0xff] %v3672
      %3677 = vst [vmem:[#allocation3 + $0x10] sm:$0xff] %v3673
      %3678 = vst [vmem:[#allocation3 + $0x18] sm:$0xff] %v3674
    $region141: #{forward.1} parent=1 // pred_fallthru
      _
    %p3679 = scmp.eq.s32.totalorder %s3590, 2
    // Predicated region
    $region142: #{forward.1} parent=1 // pred_check
      %p3680 = pneg %p3679
    $region143: #{forward.1} parent=1 // pred_check_branch
      %3682 = sbr.rel (%p3680) target = $region145
    $region144: #{forward.1} parent=1 // pred_region
      %v3683 = vmax.f32 %v3615, -30.0
      %v3684 = vmax.f32 %v3616, -30.0
      %v3685 = vmax.f32 %v3617, -30.0
      %v3686 = vmax.f32 %v3618, -30.0
      %v3687 = vmin.f32 %v3683, 30.0
      %v3688 = vmin.f32 %v3684, 30.0
      %v3689 = vmin.f32 %v3685, 30.0
      %v3690 = vmin.f32 %v3686, 30.0
      %v3691 = vmul.f32 %v3687, 1.442695
      %v3692 = vpow.pop %v3691
      %v3693 = vmul.f32 %v3688, 1.442695
      %v3694 = vpow.pop %v3693
      %v3695 = vmul.f32 %v3689, 1.442695
      %v3696 = vpow.pop %v3695
      %v3697 = vmul.f32 %v3690, 1.442695
      %v3698 = vpow.pop %v3697
      %v3699 = vadd.f32 %v3692, 1.0
      %v3700 = vadd.f32 %v3694, 1.0
      %v3701 = vadd.f32 %v3696, 1.0
      %v3702 = vadd.f32 %v3698, 1.0
      %v3703 = vlog2.pop %v3699
      %v3704 = vmul.f32 %v3703, 0.6931472
      %v3705 = vlog2.pop %v3700
      %v3706 = vmul.f32 %v3705, 0.6931472
      %v3707 = vlog2.pop %v3701
      %v3708 = vmul.f32 %v3707, 0.6931472
      %v3709 = vlog2.pop %v3702
      %v3710 = vmul.f32 %v3709, 0.6931472
      %v3711 = vmax.f32 %v3704, 0.0
      %v3712 = vmax.f32 %v3706, 0.0
      %v3713 = vmax.f32 %v3708, 0.0
      %v3714 = vmax.f32 %v3710, 0.0
      %v3715 = vmin.f32 %v3711, 1.0
      %v3716 = vmin.f32 %v3712, 1.0
      %v3717 = vmin.f32 %v3713, 1.0
      %v3718 = vmin.f32 %v3714, 1.0
      %3719 = vst [vmem:[#allocation3] sm:$0xff] %v3715
      %3720 = vst [vmem:[#allocation3 + $0x8] sm:$0xff] %v3716
      %3721 = vst [vmem:[#allocation3 + $0x10] sm:$0xff] %v3717
      %3722 = vst [vmem:[#allocation3 + $0x18] sm:$0xff] %v3718
    $region145: #{forward.1} parent=1 // pred_fallthru
      _
    %p3723 = scmp.eq.s32.totalorder %s3590, 3
    // Predicated region
    $region146: #{forward.1} parent=1 // pred_check
      %p3724 = pneg %p3723
    $region147: #{forward.1} parent=1 // pred_check_branch
      %3726 = sbr.rel (%p3724) target = $region149
    $region148: #{forward.1} parent=1 // pred_region
      %v3727 = vmax.f32 %v3615, 0.0
      %v3728 = vmax.f32 %v3616, 0.0
      %v3729 = vmax.f32 %v3617, 0.0
      %v3730 = vmax.f32 %v3618, 0.0
      %v3731 = vmin.f32 %v3727, 1.0
      %v3732 = vmin.f32 %v3728, 1.0
      %v3733 = vmin.f32 %v3729, 1.0
      %v3734 = vmin.f32 %v3730, 1.0
      %v3735 = vsub.f32 %v3731, 0.5
      %v3736 = vsub.f32 %v3732, 0.5
      %v3737 = vsub.f32 %v3733, 0.5
      %v3738 = vsub.f32 %v3734, 0.5
      %v3739 = vmul.f32 %v3735, %v3735
      %v3740 = vmul.f32 %v3736, %v3736
      %v3741 = vmul.f32 %v3737, %v3737
      %v3742 = vmul.f32 %v3738, %v3738
      %v3743 = vsub.f32 0.0, %v3739
      %v3744 = vsub.f32 0.0, %v3740
      %v3745 = vsub.f32 0.0, %v3741
      %v3746 = vsub.f32 0.0, %v3742
      %v3747 = vrcp.pop 0.045
      %v3748 = vmul.f32 %v3743, %v3747
      %v3749 = vmul.f32 %v3744, %v3747
      %v3750 = vmul.f32 %v3745, %v3747
      %v3751 = vmul.f32 %v3746, %v3747
      %v3752 = vmul.f32 %v3748, 1.442695
      %v3753 = vpow.pop %v3752
      %v3754 = vmul.f32 %v3749, 1.442695
      %v3755 = vpow.pop %v3754
      %v3756 = vmul.f32 %v3750, 1.442695
      %v3757 = vpow.pop %v3756
      %v3758 = vmul.f32 %v3751, 1.442695
      %v3759 = vpow.pop %v3758
      %3760 = vst [vmem:[#allocation3] sm:$0xff] %v3753
      %3761 = vst [vmem:[#allocation3 + $0x8] sm:$0xff] %v3755
      %3762 = vst [vmem:[#allocation3 + $0x10] sm:$0xff] %v3757
      %3763 = vst [vmem:[#allocation3 + $0x18] sm:$0xff] %v3759
    $region149: #{forward.1} parent=1 // pred_fallthru
      _
    %p3764 = scmp.eq.s32.totalorder %s3590, 4
    // Predicated region
    $region150: #{forward.1} parent=1 // pred_check
      %p3765 = pneg %p3764
    $region151: #{forward.1} parent=1 // pred_check_branch
      %3767 = sbr.rel (%p3765) target = $region153
    $region152: #{forward.1} parent=1 // pred_region
      %v3768 = vmax.f32 %v3615, 0.0
      %v3769 = vmax.f32 %v3616, 0.0
      %v3770 = vmax.f32 %v3617, 0.0
      %v3771 = vmax.f32 %v3618, 0.0
      %v3772 = vmin.f32 %v3768, 1.0
      %v3773 = vmin.f32 %v3769, 1.0
      %v3774 = vmin.f32 %v3770, 1.0
      %v3775 = vmin.f32 %v3771, 1.0
      %vm3776 = vcmp.lt.f32.partialorder %v3772, 0.3
      %vm3777 = vcmp.lt.f32.partialorder %v3773, 0.3
      %vm3778 = vcmp.lt.f32.partialorder %v3774, 0.3
      %vm3779 = vcmp.lt.f32.partialorder %v3775, 0.3
      %v3780 = vmul.f32 %v3772, 0.2
      %v3781 = vmul.f32 %v3773, 0.2
      %v3782 = vmul.f32 %v3774, 0.2
      %v3783 = vmul.f32 %v3775, 0.2
      %vm3784 = vcmp.lt.f32.partialorder %v3772, 0.7
      %vm3785 = vcmp.lt.f32.partialorder %v3773, 0.7
      %vm3786 = vcmp.lt.f32.partialorder %v3774, 0.7
      %vm3787 = vcmp.lt.f32.partialorder %v3775, 0.7
      %v3788 = vmul.f32 %v3772, 0.5
      %v3789 = vmul.f32 %v3773, 0.5
      %v3790 = vmul.f32 %v3774, 0.5
      %v3791 = vmul.f32 %v3775, 0.5
      %v3792 = vadd.f32 %v3788, 0.5
      %v3793 = vadd.f32 %v3789, 0.5
      %v3794 = vadd.f32 %v3790, 0.5
      %v3795 = vadd.f32 %v3791, 0.5
      %v3796 = vsel %vm3784, %v3792, 0.9
      %v3797 = vsel %vm3785, %v3793, 0.9
      %v3798 = vsel %vm3786, %v3794, 0.9
      %v3799 = vsel %vm3787, %v3795, 0.9
      %v3800 = vsel %vm3776, %v3780, %v3796
      %v3801 = vsel %vm3777, %v3781, %v3797
      %v3802 = vsel %vm3778, %v3782, %v3798
      %v3803 = vsel %vm3779, %v3783, %v3799
      %3804 = vst [vmem:[#allocation3] sm:$0xff] %v3800
      %3805 = vst [vmem:[#allocation3 + $0x8] sm:$0xff] %v3801
      %3806 = vst [vmem:[#allocation3 + $0x10] sm:$0xff] %v3802
      %3807 = vst [vmem:[#allocation3 + $0x18] sm:$0xff] %v3803
    $region153: #{forward.1} parent=1 // pred_fallthru
      _
    %v3808 = vld [vmem:[#allocation3] sm:$0xff]
    %v3809 = vld [vmem:[#allocation3 + $0x8] sm:$0xff]
    %v3810 = vld [vmem:[#allocation3 + $0x10] sm:$0xff]
    %v3811 = vld [vmem:[#allocation3 + $0x18] sm:$0xff]
    %v3812 = vmul.f32 %v3808, 0.5
    %v3813 = vmul.f32 %v3809, 0.5
    %v3814 = vmul.f32 %v3810, 0.5
    %v3815 = vmul.f32 %v3811, 0.5
    %v3816 = vld [vmem:[#allocation2] sm:$0xff]
    %v3817 = vld [vmem:[#allocation2 + $0x8] sm:$0xff]
    %v3818 = vld [vmem:[#allocation2 + $0x10] sm:$0xff]
    %v3819 = vld [vmem:[#allocation2 + $0x18] sm:$0xff]
    %v3820 = vmul.f32 %v3816, 0.5
    %v3821 = vmul.f32 %v3817, 0.5
    %v3822 = vmul.f32 %v3818, 0.5
    %v3823 = vmul.f32 %v3819, 0.5
    %v3824 = vadd.f32 %v3812, %v3820
    %v3825 = vadd.f32 %v3813, %v3821
    %v3826 = vadd.f32 %v3814, %v3822
    %v3827 = vadd.f32 %v3815, %v3823
    %v3828 = vpack.c.bf16 %v3824, %v3824
    %v3829 = vpack.c.bf16 %v3825, %v3825
    %v3830 = vpack.c.bf16 %v3826, %v3826
    %v3831 = vpack.c.bf16 %v3827, %v3827
    %v3832 = vld [vmem:[#allocation15] sm:$0xff]
    %v3833 = vld [vmem:[#allocation15 + $0x8] sm:$0xff]
    %v3834 = vld [vmem:[#allocation15 + $0x10] sm:$0xff]
    %v3835 = vld [vmem:[#allocation15 + $0x18] sm:$0xff]
    %v3836 = vld [vmem:[#allocation15 + $0x20] sm:$0xff]
    %v3837 = vld [vmem:[#allocation15 + $0x28] sm:$0xff]
    %v3838 = vld [vmem:[#allocation15 + $0x30] sm:$0xff]
    %v3839 = vld [vmem:[#allocation15 + $0x38] sm:$0xff]
    %v3840 = vld [vmem:[#allocation15 + $0x40] sm:$0xff]
    %v3841 = vld [vmem:[#allocation15 + $0x48] sm:$0xff]
    %v3842 = vld [vmem:[#allocation15 + $0x50] sm:$0xff]
    %v3843 = vld [vmem:[#allocation15 + $0x58] sm:$0xff]
    %v3844 = vld [vmem:[#allocation15 + $0x60] sm:$0xff]
    %v3845 = vld [vmem:[#allocation15 + $0x68] sm:$0xff]
    %v3846 = vld [vmem:[#allocation15 + $0x70] sm:$0xff]
    %v3847 = vld [vmem:[#allocation15 + $0x78] sm:$0xff]
    %v3848 = vld [vmem:[#allocation15 + $0x80] sm:$0xff]
    %v3849 = vld [vmem:[#allocation15 + $0x88] sm:$0xff]
    %v3850 = vld [vmem:[#allocation15 + $0x90] sm:$0xff]
    %v3851 = vld [vmem:[#allocation15 + $0x98] sm:$0xff]
    %v3852 = vld [vmem:[#allocation15 + $0xa0] sm:$0xff]
    %v3853 = vld [vmem:[#allocation15 + $0xa8] sm:$0xff]
    %v3854 = vld [vmem:[#allocation15 + $0xb0] sm:$0xff]
    %v3855 = vld [vmem:[#allocation15 + $0xb8] sm:$0xff]
    %v3856 = vld [vmem:[#allocation15 + $0xc0] sm:$0xff]
    %v3857 = vld [vmem:[#allocation15 + $0xc8] sm:$0xff]
    %v3858 = vld [vmem:[#allocation15 + $0xd0] sm:$0xff]
    %v3859 = vld [vmem:[#allocation15 + $0xd8] sm:$0xff]
    %v3860 = vld [vmem:[#allocation15 + $0xe0] sm:$0xff]
    %v3861 = vld [vmem:[#allocation15 + $0xe8] sm:$0xff]
    %v3862 = vld [vmem:[#allocation15 + $0xf0] sm:$0xff]
    %v3863 = vld [vmem:[#allocation15 + $0xf8] sm:$0xff]
    %v3864 = vld [vmem:[#allocation15 + $0x100] sm:$0xff]
    %v3865 = vld [vmem:[#allocation15 + $0x108] sm:$0xff]
    %v3866 = vld [vmem:[#allocation15 + $0x110] sm:$0xff]
    %v3867 = vld [vmem:[#allocation15 + $0x118] sm:$0xff]
    %v3868 = vld [vmem:[#allocation15 + $0x120] sm:$0xff]
    %v3869 = vld [vmem:[#allocation15 + $0x128] sm:$0xff]
    %v3870 = vld [vmem:[#allocation15 + $0x130] sm:$0xff]
    %v3871 = vld [vmem:[#allocation15 + $0x138] sm:$0xff]
    %v3872 = vld [vmem:[#allocation15 + $0x140] sm:$0xff]
    %v3873 = vld [vmem:[#allocation15 + $0x148] sm:$0xff]
    %v3874 = vld [vmem:[#allocation15 + $0x150] sm:$0xff]
    %v3875 = vld [vmem:[#allocation15 + $0x158] sm:$0xff]
    %v3876 = vld [vmem:[#allocation15 + $0x160] sm:$0xff]
    %v3877 = vld [vmem:[#allocation15 + $0x168] sm:$0xff]
    %v3878 = vld [vmem:[#allocation15 + $0x170] sm:$0xff]
    %v3879 = vld [vmem:[#allocation15 + $0x178] sm:$0xff]
    %v3880 = vld [vmem:[#allocation15 + $0x180] sm:$0xff]
    %v3881 = vld [vmem:[#allocation15 + $0x188] sm:$0xff]
    %v3882 = vld [vmem:[#allocation15 + $0x190] sm:$0xff]
    %v3883 = vld [vmem:[#allocation15 + $0x198] sm:$0xff]
    %v3884 = vld [vmem:[#allocation15 + $0x1a0] sm:$0xff]
    %v3885 = vld [vmem:[#allocation15 + $0x1a8] sm:$0xff]
    %v3886 = vld [vmem:[#allocation15 + $0x1b0] sm:$0xff]
    %v3887 = vld [vmem:[#allocation15 + $0x1b8] sm:$0xff]
    %v3888 = vld [vmem:[#allocation15 + $0x1c0] sm:$0xff]
    %v3889 = vld [vmem:[#allocation15 + $0x1c8] sm:$0xff]
    %v3890 = vld [vmem:[#allocation15 + $0x1d0] sm:$0xff]
    %v3891 = vld [vmem:[#allocation15 + $0x1d8] sm:$0xff]
    %v3892 = vld [vmem:[#allocation15 + $0x1e0] sm:$0xff]
    %v3893 = vld [vmem:[#allocation15 + $0x1e8] sm:$0xff]
    %v3894 = vld [vmem:[#allocation15 + $0x1f0] sm:$0xff]
    %v3895 = vld [vmem:[#allocation15 + $0x1f8] sm:$0xff]
    %v3896 = vld [vmem:[#allocation15 + $0x200] sm:$0xff]
    %v3897 = vld [vmem:[#allocation15 + $0x208] sm:$0xff]
    %v3898 = vld [vmem:[#allocation15 + $0x210] sm:$0xff]
    %v3899 = vld [vmem:[#allocation15 + $0x218] sm:$0xff]
    %v3900 = vld [vmem:[#allocation15 + $0x220] sm:$0xff]
    %v3901 = vld [vmem:[#allocation15 + $0x228] sm:$0xff]
    %v3902 = vld [vmem:[#allocation15 + $0x230] sm:$0xff]
    %v3903 = vld [vmem:[#allocation15 + $0x238] sm:$0xff]
    %v3904 = vld [vmem:[#allocation15 + $0x240] sm:$0xff]
    %v3905 = vld [vmem:[#allocation15 + $0x248] sm:$0xff]
    %v3906 = vld [vmem:[#allocation15 + $0x250] sm:$0xff]
    %v3907 = vld [vmem:[#allocation15 + $0x258] sm:$0xff]
    %v3908 = vld [vmem:[#allocation15 + $0x260] sm:$0xff]
    %v3909 = vld [vmem:[#allocation15 + $0x268] sm:$0xff]
    %v3910 = vld [vmem:[#allocation15 + $0x270] sm:$0xff]
    %v3911 = vld [vmem:[#allocation15 + $0x278] sm:$0xff]
    %v3912 = vld [vmem:[#allocation15 + $0x280] sm:$0xff]
    %v3913 = vld [vmem:[#allocation15 + $0x288] sm:$0xff]
    %v3914 = vld [vmem:[#allocation15 + $0x290] sm:$0xff]
    %v3915 = vld [vmem:[#allocation15 + $0x298] sm:$0xff]
    %v3916 = vld [vmem:[#allocation15 + $0x2a0] sm:$0xff]
    %v3917 = vld [vmem:[#allocation15 + $0x2a8] sm:$0xff]
    %v3918 = vld [vmem:[#allocation15 + $0x2b0] sm:$0xff]
    %v3919 = vld [vmem:[#allocation15 + $0x2b8] sm:$0xff]
    %v3920 = vld [vmem:[#allocation15 + $0x2c0] sm:$0xff]
    %v3921 = vld [vmem:[#allocation15 + $0x2c8] sm:$0xff]
    %v3922 = vld [vmem:[#allocation15 + $0x2d0] sm:$0xff]
    %v3923 = vld [vmem:[#allocation15 + $0x2d8] sm:$0xff]
    %v3924 = vld [vmem:[#allocation15 + $0x2e0] sm:$0xff]
    %v3925 = vld [vmem:[#allocation15 + $0x2e8] sm:$0xff]
    %v3926 = vld [vmem:[#allocation15 + $0x2f0] sm:$0xff]
    %v3927 = vld [vmem:[#allocation15 + $0x2f8] sm:$0xff]
    %v3928 = vld [vmem:[#allocation15 + $0x300] sm:$0xff]
    %v3929 = vld [vmem:[#allocation15 + $0x308] sm:$0xff]
    %v3930 = vld [vmem:[#allocation15 + $0x310] sm:$0xff]
    %v3931 = vld [vmem:[#allocation15 + $0x318] sm:$0xff]
    %v3932 = vld [vmem:[#allocation15 + $0x320] sm:$0xff]
    %v3933 = vld [vmem:[#allocation15 + $0x328] sm:$0xff]
    %v3934 = vld [vmem:[#allocation15 + $0x330] sm:$0xff]
    %v3935 = vld [vmem:[#allocation15 + $0x338] sm:$0xff]
    %v3936 = vld [vmem:[#allocation15 + $0x340] sm:$0xff]
    %v3937 = vld [vmem:[#allocation15 + $0x348] sm:$0xff]
    %v3938 = vld [vmem:[#allocation15 + $0x350] sm:$0xff]
    %v3939 = vld [vmem:[#allocation15 + $0x358] sm:$0xff]
    %v3940 = vld [vmem:[#allocation15 + $0x360] sm:$0xff]
    %v3941 = vld [vmem:[#allocation15 + $0x368] sm:$0xff]
    %v3942 = vld [vmem:[#allocation15 + $0x370] sm:$0xff]
    %v3943 = vld [vmem:[#allocation15 + $0x378] sm:$0xff]
    %v3944 = vld [vmem:[#allocation15 + $0x380] sm:$0xff]
    %v3945 = vld [vmem:[#allocation15 + $0x388] sm:$0xff]
    %v3946 = vld [vmem:[#allocation15 + $0x390] sm:$0xff]
    %v3947 = vld [vmem:[#allocation15 + $0x398] sm:$0xff]
    %v3948 = vld [vmem:[#allocation15 + $0x3a0] sm:$0xff]
    %v3949 = vld [vmem:[#allocation15 + $0x3a8] sm:$0xff]
    %v3950 = vld [vmem:[#allocation15 + $0x3b0] sm:$0xff]
    %v3951 = vld [vmem:[#allocation15 + $0x3b8] sm:$0xff]
    %v3952 = vld [vmem:[#allocation15 + $0x3c0] sm:$0xff]
    %v3953 = vld [vmem:[#allocation15 + $0x3c8] sm:$0xff]
    %v3954 = vld [vmem:[#allocation15 + $0x3d0] sm:$0xff]
    %v3955 = vld [vmem:[#allocation15 + $0x3d8] sm:$0xff]
    %v3956 = vld [vmem:[#allocation15 + $0x3e0] sm:$0xff]
    %v3957 = vld [vmem:[#allocation15 + $0x3e8] sm:$0xff]
    %v3958 = vld [vmem:[#allocation15 + $0x3f0] sm:$0xff]
    %v3959 = vld [vmem:[#allocation15 + $0x3f8] sm:$0xff]
    %v3960 = vld [vmem:[#allocation16] sm:$0xf]
    %v3962 = vlaneseq
    %v3963 = vshrl.u32 %v3962, 7
    %v3964 = vsub.s32 0, %v3963
    %v3965 = vrot.slane %v3960, %v3964
    %v3966 = vlaneseq
    %v3967 = vshrl.u32 %v3966, 7
    %v3968 = vsub.s32 1, %v3967
    %v3969 = vrot.slane %v3960, %v3968
    %v3970 = vlaneseq
    %v3971 = vshrl.u32 %v3970, 7
    %v3972 = vsub.s32 2, %v3971
    %v3973 = vrot.slane %v3960, %v3972
    %v3974 = vlaneseq
    %v3975 = vshrl.u32 %v3974, 7
    %v3976 = vsub.s32 3, %v3975
    %v3977 = vrot.slane %v3960, %v3976
    %v4110 = vunpack.c.l.b16 %v3832
    %v4111 = vunpack.c.h.b16 %v3832
    %v4112 = vunpack.c.l.b16 %v3833
    %v4113 = vunpack.c.h.b16 %v3833
    %v4114 = vunpack.c.l.b16 %v3834
    %v4115 = vunpack.c.h.b16 %v3834
    %v4116 = vunpack.c.l.b16 %v3835
    %v4117 = vunpack.c.h.b16 %v3835
    %v4118 = vunpack.c.l.b16 %v3836
    %v4119 = vunpack.c.h.b16 %v3836
    %v4120 = vunpack.c.l.b16 %v3837
    %v4121 = vunpack.c.h.b16 %v3837
    %v4122 = vunpack.c.l.b16 %v3838
    %v4123 = vunpack.c.h.b16 %v3838
    %v4124 = vunpack.c.l.b16 %v3839
    %v4125 = vunpack.c.h.b16 %v3839
    %v4126 = vunpack.c.l.b16 %v3840
    %v4127 = vunpack.c.h.b16 %v3840
    %v4128 = vunpack.c.l.b16 %v3841
    %v4129 = vunpack.c.h.b16 %v3841
    %v4130 = vunpack.c.l.b16 %v3842
    %v4131 = vunpack.c.h.b16 %v3842
    %v4132 = vunpack.c.l.b16 %v3843
    %v4133 = vunpack.c.h.b16 %v3843
    %v4134 = vunpack.c.l.b16 %v3844
    %v4135 = vunpack.c.h.b16 %v3844
    %v4136 = vunpack.c.l.b16 %v3845
    %v4137 = vunpack.c.h.b16 %v3845
    %v4138 = vunpack.c.l.b16 %v3846
    %v4139 = vunpack.c.h.b16 %v3846
    %v4140 = vunpack.c.l.b16 %v3847
    %v4141 = vunpack.c.h.b16 %v3847
    %v4142 = vunpack.c.l.b16 %v3848
    %v4143 = vunpack.c.h.b16 %v3848
    %v4144 = vunpack.c.l.b16 %v3849
    %v4145 = vunpack.c.h.b16 %v3849
    %v4146 = vunpack.c.l.b16 %v3850
    %v4147 = vunpack.c.h.b16 %v3850
    %v4148 = vunpack.c.l.b16 %v3851
    %v4149 = vunpack.c.h.b16 %v3851
    %v4150 = vunpack.c.l.b16 %v3852
    %v4151 = vunpack.c.h.b16 %v3852
    %v4152 = vunpack.c.l.b16 %v3853
    %v4153 = vunpack.c.h.b16 %v3853
    %v4154 = vunpack.c.l.b16 %v3854
    %v4155 = vunpack.c.h.b16 %v3854
    %v4156 = vunpack.c.l.b16 %v3855
    %v4157 = vunpack.c.h.b16 %v3855
    %v4158 = vunpack.c.l.b16 %v3856
    %v4159 = vunpack.c.h.b16 %v3856
    %v4160 = vunpack.c.l.b16 %v3857
    %v4161 = vunpack.c.h.b16 %v3857
    %v4162 = vunpack.c.l.b16 %v3858
    %v4163 = vunpack.c.h.b16 %v3858
    %v4164 = vunpack.c.l.b16 %v3859
    %v4165 = vunpack.c.h.b16 %v3859
    %v4166 = vunpack.c.l.b16 %v3860
    %v4167 = vunpack.c.h.b16 %v3860
    %v4168 = vunpack.c.l.b16 %v3861
    %v4169 = vunpack.c.h.b16 %v3861
    %v4170 = vunpack.c.l.b16 %v3862
    %v4171 = vunpack.c.h.b16 %v3862
    %v4172 = vunpack.c.l.b16 %v3863
    %v4173 = vunpack.c.h.b16 %v3863
    %v4174 = vunpack.c.l.b16 %v3864
    %v4175 = vunpack.c.h.b16 %v3864
    %v4176 = vunpack.c.l.b16 %v3865
    %v4177 = vunpack.c.h.b16 %v3865
    %v4178 = vunpack.c.l.b16 %v3866
    %v4179 = vunpack.c.h.b16 %v3866
    %v4180 = vunpack.c.l.b16 %v3867
    %v4181 = vunpack.c.h.b16 %v3867
    %v4182 = vunpack.c.l.b16 %v3868
    %v4183 = vunpack.c.h.b16 %v3868
    %v4184 = vunpack.c.l.b16 %v3869
    %v4185 = vunpack.c.h.b16 %v3869
    %v4186 = vunpack.c.l.b16 %v3870
    %v4187 = vunpack.c.h.b16 %v3870
    %v4188 = vunpack.c.l.b16 %v3871
    %v4189 = vunpack.c.h.b16 %v3871
    %v4190 = vunpack.c.l.b16 %v3872
    %v4191 = vunpack.c.h.b16 %v3872
    %v4192 = vunpack.c.l.b16 %v3873
    %v4193 = vunpack.c.h.b16 %v3873
    %v4194 = vunpack.c.l.b16 %v3874
    %v4195 = vunpack.c.h.b16 %v3874
    %v4196 = vunpack.c.l.b16 %v3875
    %v4197 = vunpack.c.h.b16 %v3875
    %v4198 = vunpack.c.l.b16 %v3876
    %v4199 = vunpack.c.h.b16 %v3876
    %v4200 = vunpack.c.l.b16 %v3877
    %v4201 = vunpack.c.h.b16 %v3877
    %v4202 = vunpack.c.l.b16 %v3878
    %v4203 = vunpack.c.h.b16 %v3878
    %v4204 = vunpack.c.l.b16 %v3879
    %v4205 = vunpack.c.h.b16 %v3879
    %v4206 = vunpack.c.l.b16 %v3880
    %v4207 = vunpack.c.h.b16 %v3880
    %v4208 = vunpack.c.l.b16 %v3881
    %v4209 = vunpack.c.h.b16 %v3881
    %v4210 = vunpack.c.l.b16 %v3882
    %v4211 = vunpack.c.h.b16 %v3882
    %v4212 = vunpack.c.l.b16 %v3883
    %v4213 = vunpack.c.h.b16 %v3883
    %v4214 = vunpack.c.l.b16 %v3884
    %v4215 = vunpack.c.h.b16 %v3884
    %v4216 = vunpack.c.l.b16 %v3885
    %v4217 = vunpack.c.h.b16 %v3885
    %v4218 = vunpack.c.l.b16 %v3886
    %v4219 = vunpack.c.h.b16 %v3886
    %v4220 = vunpack.c.l.b16 %v3887
    %v4221 = vunpack.c.h.b16 %v3887
    %v4222 = vunpack.c.l.b16 %v3888
    %v4223 = vunpack.c.h.b16 %v3888
    %v4224 = vunpack.c.l.b16 %v3889
    %v4225 = vunpack.c.h.b16 %v3889
    %v4226 = vunpack.c.l.b16 %v3890
    %v4227 = vunpack.c.h.b16 %v3890
    %v4228 = vunpack.c.l.b16 %v3891
    %v4229 = vunpack.c.h.b16 %v3891
    %v4230 = vunpack.c.l.b16 %v3892
    %v4231 = vunpack.c.h.b16 %v3892
    %v4232 = vunpack.c.l.b16 %v3893
    %v4233 = vunpack.c.h.b16 %v3893
    %v4234 = vunpack.c.l.b16 %v3894
    %v4235 = vunpack.c.h.b16 %v3894
    %v4236 = vunpack.c.l.b16 %v3895
    %v4237 = vunpack.c.h.b16 %v3895
    %v4238 = vunpack.c.l.b16 %v3896
    %v4239 = vunpack.c.h.b16 %v3896
    %v4240 = vunpack.c.l.b16 %v3897
    %v4241 = vunpack.c.h.b16 %v3897
    %v4242 = vunpack.c.l.b16 %v3898
    %v4243 = vunpack.c.h.b16 %v3898
    %v4244 = vunpack.c.l.b16 %v3899
    %v4245 = vunpack.c.h.b16 %v3899
    %v4246 = vunpack.c.l.b16 %v3900
    %v4247 = vunpack.c.h.b16 %v3900
    %v4248 = vunpack.c.l.b16 %v3901
    %v4249 = vunpack.c.h.b16 %v3901
    %v4250 = vunpack.c.l.b16 %v3902
    %v4251 = vunpack.c.h.b16 %v3902
    %v4252 = vunpack.c.l.b16 %v3903
    %v4253 = vunpack.c.h.b16 %v3903
    %v4254 = vunpack.c.l.b16 %v3904
    %v4255 = vunpack.c.h.b16 %v3904
    %v4256 = vunpack.c.l.b16 %v3905
    %v4257 = vunpack.c.h.b16 %v3905
    %v4258 = vunpack.c.l.b16 %v3906
    %v4259 = vunpack.c.h.b16 %v3906
    %v4260 = vunpack.c.l.b16 %v3907
    %v4261 = vunpack.c.h.b16 %v3907
    %v4262 = vunpack.c.l.b16 %v3908
    %v4263 = vunpack.c.h.b16 %v3908
    %v4264 = vunpack.c.l.b16 %v3909
    %v4265 = vunpack.c.h.b16 %v3909
    %v4266 = vunpack.c.l.b16 %v3910
    %v4267 = vunpack.c.h.b16 %v3910
    %v4268 = vunpack.c.l.b16 %v3911
    %v4269 = vunpack.c.h.b16 %v3911
    %v4270 = vunpack.c.l.b16 %v3912
    %v4271 = vunpack.c.h.b16 %v3912
    %v4272 = vunpack.c.l.b16 %v3913
    %v4273 = vunpack.c.h.b16 %v3913
    %v4274 = vunpack.c.l.b16 %v3914
    %v4275 = vunpack.c.h.b16 %v3914
    %v4276 = vunpack.c.l.b16 %v3915
    %v4277 = vunpack.c.h.b16 %v3915
    %v4278 = vunpack.c.l.b16 %v3916
    %v4279 = vunpack.c.h.b16 %v3916
    %v4280 = vunpack.c.l.b16 %v3917
    %v4281 = vunpack.c.h.b16 %v3917
    %v4282 = vunpack.c.l.b16 %v3918
    %v4283 = vunpack.c.h.b16 %v3918
    %v4284 = vunpack.c.l.b16 %v3919
    %v4285 = vunpack.c.h.b16 %v3919
    %v4286 = vunpack.c.l.b16 %v3920
    %v4287 = vunpack.c.h.b16 %v3920
    %v4288 = vunpack.c.l.b16 %v3921
    %v4289 = vunpack.c.h.b16 %v3921
    %v4290 = vunpack.c.l.b16 %v3922
    %v4291 = vunpack.c.h.b16 %v3922
    %v4292 = vunpack.c.l.b16 %v3923
    %v4293 = vunpack.c.h.b16 %v3923
    %v4294 = vunpack.c.l.b16 %v3924
    %v4295 = vunpack.c.h.b16 %v3924
    %v4296 = vunpack.c.l.b16 %v3925
    %v4297 = vunpack.c.h.b16 %v3925
    %v4298 = vunpack.c.l.b16 %v3926
    %v4299 = vunpack.c.h.b16 %v3926
    %v4300 = vunpack.c.l.b16 %v3927
    %v4301 = vunpack.c.h.b16 %v3927
    %v4302 = vunpack.c.l.b16 %v3928
    %v4303 = vunpack.c.h.b16 %v3928
    %v4304 = vunpack.c.l.b16 %v3929
    %v4305 = vunpack.c.h.b16 %v3929
    %v4306 = vunpack.c.l.b16 %v3930
    %v4307 = vunpack.c.h.b16 %v3930
    %v4308 = vunpack.c.l.b16 %v3931
    %v4309 = vunpack.c.h.b16 %v3931
    %v4310 = vunpack.c.l.b16 %v3932
    %v4311 = vunpack.c.h.b16 %v3932
    %v4312 = vunpack.c.l.b16 %v3933
    %v4313 = vunpack.c.h.b16 %v3933
    %v4314 = vunpack.c.l.b16 %v3934
    %v4315 = vunpack.c.h.b16 %v3934
    %v4316 = vunpack.c.l.b16 %v3935
    %v4317 = vunpack.c.h.b16 %v3935
    %v4318 = vunpack.c.l.b16 %v3936
    %v4319 = vunpack.c.h.b16 %v3936
    %v4320 = vunpack.c.l.b16 %v3937
    %v4321 = vunpack.c.h.b16 %v3937
    %v4322 = vunpack.c.l.b16 %v3938
    %v4323 = vunpack.c.h.b16 %v3938
    %v4324 = vunpack.c.l.b16 %v3939
    %v4325 = vunpack.c.h.b16 %v3939
    %v4326 = vunpack.c.l.b16 %v3940
    %v4327 = vunpack.c.h.b16 %v3940
    %v4328 = vunpack.c.l.b16 %v3941
    %v4329 = vunpack.c.h.b16 %v3941
    %v4330 = vunpack.c.l.b16 %v3942
    %v4331 = vunpack.c.h.b16 %v3942
    %v4332 = vunpack.c.l.b16 %v3943
    %v4333 = vunpack.c.h.b16 %v3943
    %v4334 = vunpack.c.l.b16 %v3944
    %v4335 = vunpack.c.h.b16 %v3944
    %v4336 = vunpack.c.l.b16 %v3945
    %v4337 = vunpack.c.h.b16 %v3945
    %v4338 = vunpack.c.l.b16 %v3946
    %v4339 = vunpack.c.h.b16 %v3946
    %v4340 = vunpack.c.l.b16 %v3947
    %v4341 = vunpack.c.h.b16 %v3947
    %v4342 = vunpack.c.l.b16 %v3948
    %v4343 = vunpack.c.h.b16 %v3948
    %v4344 = vunpack.c.l.b16 %v3949
    %v4345 = vunpack.c.h.b16 %v3949
    %v4346 = vunpack.c.l.b16 %v3950
    %v4347 = vunpack.c.h.b16 %v3950
    %v4348 = vunpack.c.l.b16 %v3951
    %v4349 = vunpack.c.h.b16 %v3951
    %v4350 = vunpack.c.l.b16 %v3952
    %v4351 = vunpack.c.h.b16 %v3952
    %v4352 = vunpack.c.l.b16 %v3953
    %v4353 = vunpack.c.h.b16 %v3953
    %v4354 = vunpack.c.l.b16 %v3954
    %v4355 = vunpack.c.h.b16 %v3954
    %v4356 = vunpack.c.l.b16 %v3955
    %v4357 = vunpack.c.h.b16 %v3955
    %v4358 = vunpack.c.l.b16 %v3956
    %v4359 = vunpack.c.h.b16 %v3956
    %v4360 = vunpack.c.l.b16 %v3957
    %v4361 = vunpack.c.h.b16 %v3957
    %v4362 = vunpack.c.l.b16 %v3958
    %v4363 = vunpack.c.h.b16 %v3958
    %v4364 = vunpack.c.l.b16 %v3959
    %v4365 = vunpack.c.h.b16 %v3959
    %v4366 = vpack.c.b16 %v4114, %v4110
    %v4367 = vpack.c.b16 %v4115, %v4111
    %v4368 = vpack.c.b16 %v4116, %v4112
    %v4369 = vpack.c.b16 %v4117, %v4113
    %v4370 = vpack.c.b16 %v4122, %v4118
    %v4371 = vpack.c.b16 %v4123, %v4119
    %v4372 = vpack.c.b16 %v4124, %v4120
    %v4373 = vpack.c.b16 %v4125, %v4121
    %v4374 = vpack.c.b16 %v4130, %v4126
    %v4375 = vpack.c.b16 %v4131, %v4127
    %v4376 = vpack.c.b16 %v4132, %v4128
    %v4377 = vpack.c.b16 %v4133, %v4129
    %v4378 = vpack.c.b16 %v4138, %v4134
    %v4379 = vpack.c.b16 %v4139, %v4135
    %v4380 = vpack.c.b16 %v4140, %v4136
    %v4381 = vpack.c.b16 %v4141, %v4137
    %v4382 = vpack.c.b16 %v4146, %v4142
    %v4383 = vpack.c.b16 %v4147, %v4143
    %v4384 = vpack.c.b16 %v4148, %v4144
    %v4385 = vpack.c.b16 %v4149, %v4145
    %v4386 = vpack.c.b16 %v4154, %v4150
    %v4387 = vpack.c.b16 %v4155, %v4151
    %v4388 = vpack.c.b16 %v4156, %v4152
    %v4389 = vpack.c.b16 %v4157, %v4153
    %v4390 = vpack.c.b16 %v4162, %v4158
    %v4391 = vpack.c.b16 %v4163, %v4159
    %v4392 = vpack.c.b16 %v4164, %v4160
    %v4393 = vpack.c.b16 %v4165, %v4161
    %v4394 = vpack.c.b16 %v4170, %v4166
    %v4395 = vpack.c.b16 %v4171, %v4167
    %v4396 = vpack.c.b16 %v4172, %v4168
    %v4397 = vpack.c.b16 %v4173, %v4169
    %v4398 = vpack.c.b16 %v4178, %v4174
    %v4399 = vpack.c.b16 %v4179, %v4175
    %v4400 = vpack.c.b16 %v4180, %v4176
    %v4401 = vpack.c.b16 %v4181, %v4177
    %v4402 = vpack.c.b16 %v4186, %v4182
    %v4403 = vpack.c.b16 %v4187, %v4183
    %v4404 = vpack.c.b16 %v4188, %v4184
    %v4405 = vpack.c.b16 %v4189, %v4185
    %v4406 = vpack.c.b16 %v4194, %v4190
    %v4407 = vpack.c.b16 %v4195, %v4191
    %v4408 = vpack.c.b16 %v4196, %v4192
    %v4409 = vpack.c.b16 %v4197, %v4193
    %v4410 = vpack.c.b16 %v4202, %v4198
    %v4411 = vpack.c.b16 %v4203, %v4199
    %v4412 = vpack.c.b16 %v4204, %v4200
    %v4413 = vpack.c.b16 %v4205, %v4201
    %v4414 = vpack.c.b16 %v4210, %v4206
    %v4415 = vpack.c.b16 %v4211, %v4207
    %v4416 = vpack.c.b16 %v4212, %v4208
    %v4417 = vpack.c.b16 %v4213, %v4209
    %v4418 = vpack.c.b16 %v4218, %v4214
    %v4419 = vpack.c.b16 %v4219, %v4215
    %v4420 = vpack.c.b16 %v4220, %v4216
    %v4421 = vpack.c.b16 %v4221, %v4217
    %v4422 = vpack.c.b16 %v4226, %v4222
    %v4423 = vpack.c.b16 %v4227, %v4223
    %v4424 = vpack.c.b16 %v4228, %v4224
    %v4425 = vpack.c.b16 %v4229, %v4225
    %v4426 = vpack.c.b16 %v4234, %v4230
    %v4427 = vpack.c.b16 %v4235, %v4231
    %v4428 = vpack.c.b16 %v4236, %v4232
    %v4429 = vpack.c.b16 %v4237, %v4233
    %v4430 = vpack.c.b16 %v4242, %v4238
    %v4431 = vpack.c.b16 %v4243, %v4239
    %v4432 = vpack.c.b16 %v4244, %v4240
    %v4433 = vpack.c.b16 %v4245, %v4241
    %v4434 = vpack.c.b16 %v4250, %v4246
    %v4435 = vpack.c.b16 %v4251, %v4247
    %v4436 = vpack.c.b16 %v4252, %v4248
    %v4437 = vpack.c.b16 %v4253, %v4249
    %v4438 = vpack.c.b16 %v4258, %v4254
    %v4439 = vpack.c.b16 %v4259, %v4255
    %v4440 = vpack.c.b16 %v4260, %v4256
    %v4441 = vpack.c.b16 %v4261, %v4257
    %v4442 = vpack.c.b16 %v4266, %v4262
    %v4443 = vpack.c.b16 %v4267, %v4263
    %v4444 = vpack.c.b16 %v4268, %v4264
    %v4445 = vpack.c.b16 %v4269, %v4265
    %v4446 = vpack.c.b16 %v4274, %v4270
    %v4447 = vpack.c.b16 %v4275, %v4271
    %v4448 = vpack.c.b16 %v4276, %v4272
    %v4449 = vpack.c.b16 %v4277, %v4273
    %v4450 = vpack.c.b16 %v4282, %v4278
    %v4451 = vpack.c.b16 %v4283, %v4279
    %v4452 = vpack.c.b16 %v4284, %v4280
    %v4453 = vpack.c.b16 %v4285, %v4281
    %v4454 = vpack.c.b16 %v4290, %v4286
    %v4455 = vpack.c.b16 %v4291, %v4287
    %v4456 = vpack.c.b16 %v4292, %v4288
    %v4457 = vpack.c.b16 %v4293, %v4289
    %v4458 = vpack.c.b16 %v4298, %v4294
    %v4459 = vpack.c.b16 %v4299, %v4295
    %v4460 = vpack.c.b16 %v4300, %v4296
    %v4461 = vpack.c.b16 %v4301, %v4297
    %v4462 = vpack.c.b16 %v4306, %v4302
    %v4463 = vpack.c.b16 %v4307, %v4303
    %v4464 = vpack.c.b16 %v4308, %v4304
    %v4465 = vpack.c.b16 %v4309, %v4305
    %v4466 = vpack.c.b16 %v4314, %v4310
    %v4467 = vpack.c.b16 %v4315, %v4311
    %v4468 = vpack.c.b16 %v4316, %v4312
    %v4469 = vpack.c.b16 %v4317, %v4313
    %v4470 = vpack.c.b16 %v4322, %v4318
    %v4471 = vpack.c.b16 %v4323, %v4319
    %v4472 = vpack.c.b16 %v4324, %v4320
    %v4473 = vpack.c.b16 %v4325, %v4321
    %v4474 = vpack.c.b16 %v4330, %v4326
    %v4475 = vpack.c.b16 %v4331, %v4327
    %v4476 = vpack.c.b16 %v4332, %v4328
    %v4477 = vpack.c.b16 %v4333, %v4329
    %v4478 = vpack.c.b16 %v4338, %v4334
    %v4479 = vpack.c.b16 %v4339, %v4335
    %v4480 = vpack.c.b16 %v4340, %v4336
    %v4481 = vpack.c.b16 %v4341, %v4337
    %v4482 = vpack.c.b16 %v4346, %v4342
    %v4483 = vpack.c.b16 %v4347, %v4343
    %v4484 = vpack.c.b16 %v4348, %v4344
    %v4485 = vpack.c.b16 %v4349, %v4345
    %v4486 = vpack.c.b16 %v4354, %v4350
    %v4487 = vpack.c.b16 %v4355, %v4351
    %v4488 = vpack.c.b16 %v4356, %v4352
    %v4489 = vpack.c.b16 %v4357, %v4353
    %v4490 = vpack.c.b16 %v4362, %v4358
    %v4491 = vpack.c.b16 %v4363, %v4359
    %v4492 = vpack.c.b16 %v4364, %v4360
    %v4493 = vpack.c.b16 %v4365, %v4361
    %4622 = vmatprep.subr.bf16.mxu0 %v4367
    %4623 = vmatpush1.bf16.msra.mxu0 %v4366
    %4624 = vmatprep.subr.bf16.mxu0 %v4371
    %4625 = vmatpush1.bf16.msra.mxu0 %v4370
    %4626 = vmatprep.subr.bf16.mxu0 %v4375
    %4627 = vmatpush1.bf16.msra.mxu0 %v4374
    %4628 = vmatprep.subr.bf16.mxu0 %v4379
    %4629 = vmatpush1.bf16.msra.mxu0 %v4378
    %4630 = vmatprep.subr.bf16.mxu0 %v4383
    %4631 = vmatpush1.bf16.msra.mxu0 %v4382
    %4632 = vmatprep.subr.bf16.mxu0 %v4387
    %4633 = vmatpush1.bf16.msra.mxu0 %v4386
    %4634 = vmatprep.subr.bf16.mxu0 %v4391
    %4635 = vmatpush1.bf16.msra.mxu0 %v4390
    %4636 = vmatprep.subr.bf16.mxu0 %v4395
    %4637 = vmatpush1.bf16.msra.mxu0 %v4394
    %4638 = vmatprep.subr.bf16.mxu0 %v4399
    %4639 = vmatpush1.bf16.msra.mxu0 %v4398
    %4640 = vmatprep.subr.bf16.mxu0 %v4403
    %4641 = vmatpush1.bf16.msra.mxu0 %v4402
    %4642 = vmatprep.subr.bf16.mxu0 %v4407
    %4643 = vmatpush1.bf16.msra.mxu0 %v4406
    %4644 = vmatprep.subr.bf16.mxu0 %v4411
    %4645 = vmatpush1.bf16.msra.mxu0 %v4410
    %4646 = vmatprep.subr.bf16.mxu0 %v4415
    %4647 = vmatpush1.bf16.msra.mxu0 %v4414
    %4648 = vmatprep.subr.bf16.mxu0 %v4419
    %4649 = vmatpush1.bf16.msra.mxu0 %v4418
    %4650 = vmatprep.subr.bf16.mxu0 %v4423
    %4651 = vmatpush1.bf16.msra.mxu0 %v4422
    %4652 = vmatprep.subr.bf16.mxu0 %v4427
    %4653 = vmatpush1.bf16.msra.mxu0 %v4426
    %4654 = vmatprep.mubr.bf16.mxu0 %v3829
    %4655 = vmatmul.mubr.bf16.gmra.mrb[0].mxu0 %v3828
    %v4656 = vpop.f32.mrb[0].mxu0
    %v4657 = vadd.f32 %v3965, %v4656
    %v4658 = vpop.f32.mrb[0].mxu0
    %v4659 = vadd.f32 %v3969, %v4658
    %v4660 = vpop.f32.mrb[0].mxu0
    %v4661 = vpop.f32.mrb[0].mxu0
    %4662 = vdwg.mxu0
    %4663 = vmatprep.subr.bf16.mxu0 %v4431
    %4664 = vmatpush1.bf16.msra.mxu0 %v4430
    %4665 = vmatprep.subr.bf16.mxu0 %v4435
    %4666 = vmatpush1.bf16.msra.mxu0 %v4434
    %4667 = vmatprep.subr.bf16.mxu0 %v4439
    %4668 = vmatpush1.bf16.msra.mxu0 %v4438
    %4669 = vmatprep.subr.bf16.mxu0 %v4443
    %4670 = vmatpush1.bf16.msra.mxu0 %v4442
    %4671 = vmatprep.subr.bf16.mxu0 %v4447
    %4672 = vmatpush1.bf16.msra.mxu0 %v4446
    %4673 = vmatprep.subr.bf16.mxu0 %v4451
    %4674 = vmatpush1.bf16.msra.mxu0 %v4450
    %4675 = vmatprep.subr.bf16.mxu0 %v4455
    %4676 = vmatpush1.bf16.msra.mxu0 %v4454
    %4677 = vmatprep.subr.bf16.mxu0 %v4459
    %4678 = vmatpush1.bf16.msra.mxu0 %v4458
    %4679 = vmatprep.subr.bf16.mxu0 %v4463
    %4680 = vmatpush1.bf16.msra.mxu0 %v4462
    %4681 = vmatprep.subr.bf16.mxu0 %v4467
    %4682 = vmatpush1.bf16.msra.mxu0 %v4466
    %4683 = vmatprep.subr.bf16.mxu0 %v4471
    %4684 = vmatpush1.bf16.msra.mxu0 %v4470
    %4685 = vmatprep.subr.bf16.mxu0 %v4475
    %4686 = vmatpush1.bf16.msra.mxu0 %v4474
    %4687 = vmatprep.subr.bf16.mxu0 %v4479
    %4688 = vmatpush1.bf16.msra.mxu0 %v4478
    %4689 = vmatprep.subr.bf16.mxu0 %v4483
    %4690 = vmatpush1.bf16.msra.mxu0 %v4482
    %4691 = vmatprep.subr.bf16.mxu0 %v4487
    %4692 = vmatpush1.bf16.msra.mxu0 %v4486
    %4693 = vmatprep.subr.bf16.mxu0 %v4491
    %4694 = vmatpush1.bf16.msra.mxu0 %v4490
    %4695 = vmatprep.mubr.bf16.mxu0 %v3831
    %4696 = vmatmul.mubr.bf16.gmra.mrb[0].mxu0 %v3830
    %v4697 = vpop.f32.mrb[0].mxu0
    %v4698 = vadd.f32 %v4657, %v4697
    %v4699 = vpop.f32.mrb[0].mxu0
    %v4700 = vadd.f32 %v4659, %v4699
    %v4701 = vpop.f32.mrb[0].mxu0
    %v4702 = vpop.f32.mrb[0].mxu0
    %4703 = vdwg.mxu0
    %4704 = vmatprep.subr.bf16.mxu0 %v4369
    %4705 = vmatpush1.bf16.msra.mxu0 %v4368
    %4706 = vmatprep.subr.bf16.mxu0 %v4373
    %4707 = vmatpush1.bf16.msra.mxu0 %v4372
    %4708 = vmatprep.subr.bf16.mxu0 %v4377
    %4709 = vmatpush1.bf16.msra.mxu0 %v4376
    %4710 = vmatprep.subr.bf16.mxu0 %v4381
    %4711 = vmatpush1.bf16.msra.mxu0 %v4380
    %4712 = vmatprep.subr.bf16.mxu0 %v4385
    %4713 = vmatpush1.bf16.msra.mxu0 %v4384
    %4714 = vmatprep.subr.bf16.mxu0 %v4389
    %4715 = vmatpush1.bf16.msra.mxu0 %v4388
    %4716 = vmatprep.subr.bf16.mxu0 %v4393
    %4717 = vmatpush1.bf16.msra.mxu0 %v4392
    %4718 = vmatprep.subr.bf16.mxu0 %v4397
    %4719 = vmatpush1.bf16.msra.mxu0 %v4396
    %4720 = vmatprep.subr.bf16.mxu0 %v4401
    %4721 = vmatpush1.bf16.msra.mxu0 %v4400
    %4722 = vmatprep.subr.bf16.mxu0 %v4405
    %4723 = vmatpush1.bf16.msra.mxu0 %v4404
    %4724 = vmatprep.subr.bf16.mxu0 %v4409
    %4725 = vmatpush1.bf16.msra.mxu0 %v4408
    %4726 = vmatprep.subr.bf16.mxu0 %v4413
    %4727 = vmatpush1.bf16.msra.mxu0 %v4412
    %4728 = vmatprep.subr.bf16.mxu0 %v4417
    %4729 = vmatpush1.bf16.msra.mxu0 %v4416
    %4730 = vmatprep.subr.bf16.mxu0 %v4421
    %4731 = vmatpush1.bf16.msra.mxu0 %v4420
    %4732 = vmatprep.subr.bf16.mxu0 %v4425
    %4733 = vmatpush1.bf16.msra.mxu0 %v4424
    %4734 = vmatprep.subr.bf16.mxu0 %v4429
    %4735 = vmatpush1.bf16.msra.mxu0 %v4428
    %4736 = vmatprep.mubr.bf16.mxu0 %v3829
    %4737 = vmatmul.mubr.bf16.gmra.mrb[0].mxu0 %v3828
    %v4738 = vpop.f32.mrb[0].mxu0
    %v4739 = vadd.f32 %v3973, %v4738
    %v4740 = vpop.f32.mrb[0].mxu0
    %v4741 = vadd.f32 %v3977, %v4740
    %v4742 = vpop.f32.mrb[0].mxu0
    %v4743 = vpop.f32.mrb[0].mxu0
    %4744 = vdwg.mxu0
    %4745 = vmatprep.subr.bf16.mxu0 %v4433
    %4746 = vmatpush1.bf16.msra.mxu0 %v4432
    %4747 = vmatprep.subr.bf16.mxu0 %v4437
    %4748 = vmatpush1.bf16.msra.mxu0 %v4436
    %4749 = vmatprep.subr.bf16.mxu0 %v4441
    %4750 = vmatpush1.bf16.msra.mxu0 %v4440
    %4751 = vmatprep.subr.bf16.mxu0 %v4445
    %4752 = vmatpush1.bf16.msra.mxu0 %v4444
    %4753 = vmatprep.subr.bf16.mxu0 %v4449
    %4754 = vmatpush1.bf16.msra.mxu0 %v4448
    %4755 = vmatprep.subr.bf16.mxu0 %v4453
    %4756 = vmatpush1.bf16.msra.mxu0 %v4452
    %4757 = vmatprep.subr.bf16.mxu0 %v4457
    %4758 = vmatpush1.bf16.msra.mxu0 %v4456
    %4759 = vmatprep.subr.bf16.mxu0 %v4461
    %4760 = vmatpush1.bf16.msra.mxu0 %v4460
    %4761 = vmatprep.subr.bf16.mxu0 %v4465
    %4762 = vmatpush1.bf16.msra.mxu0 %v4464
    %4763 = vmatprep.subr.bf16.mxu0 %v4469
    %4764 = vmatpush1.bf16.msra.mxu0 %v4468
    %4765 = vmatprep.subr.bf16.mxu0 %v4473
    %4766 = vmatpush1.bf16.msra.mxu0 %v4472
    %4767 = vmatprep.subr.bf16.mxu0 %v4477
    %4768 = vmatpush1.bf16.msra.mxu0 %v4476
    %4769 = vmatprep.subr.bf16.mxu0 %v4481
    %4770 = vmatpush1.bf16.msra.mxu0 %v4480
    %4771 = vmatprep.subr.bf16.mxu0 %v4485
    %4772 = vmatpush1.bf16.msra.mxu0 %v4484
    %4773 = vmatprep.subr.bf16.mxu0 %v4489
    %4774 = vmatpush1.bf16.msra.mxu0 %v4488
    %4775 = vmatprep.subr.bf16.mxu0 %v4493
    %4776 = vmatpush1.bf16.msra.mxu0 %v4492
    %4777 = vmatprep.mubr.bf16.mxu0 %v3831
    %4778 = vmatmul.mubr.bf16.gmra.mrb[0].mxu0 %v3830
    %v4779 = vpop.f32.mrb[0].mxu0
    %v4780 = vadd.f32 %v4739, %v4779
    %v4781 = vpop.f32.mrb[0].mxu0
    %v4782 = vadd.f32 %v4741, %v4781
    %v4783 = vpop.f32.mrb[0].mxu0
    %v4784 = vpop.f32.mrb[0].mxu0
    %4785 = vdwg.mxu0
    %v4786 = vpack.c.bf16 %v4698, %v4698
    %v4787 = vpack.c.bf16 %v4700, %v4700
    %v4788 = vpack.c.bf16 %v4780, %v4780
    %v4789 = vpack.c.bf16 %v4782, %v4782
    %v4790 = vld [vmem:[#allocation18] sm:$0xf]
    %v4791 = vld [vmem:[#allocation18 + $0x4] sm:$0xf]
    %v4792 = vld [vmem:[#allocation18 + $0x8] sm:$0xf]
    %v4793 = vld [vmem:[#allocation18 + $0xc] sm:$0xf]
    %v4794 = vld [vmem:[#allocation18 + $0x10] sm:$0xf]
    %v4795 = vld [vmem:[#allocation18 + $0x14] sm:$0xf]
    %v4796 = vld [vmem:[#allocation18 + $0x18] sm:$0xf]
    %v4797 = vld [vmem:[#allocation18 + $0x1c] sm:$0xf]
    %v4798 = vld [vmem:[#allocation18 + $0x20] sm:$0xf]
    %v4799 = vld [vmem:[#allocation18 + $0x24] sm:$0xf]
    %v4800 = vld [vmem:[#allocation18 + $0x28] sm:$0xf]
    %v4801 = vld [vmem:[#allocation18 + $0x2c] sm:$0xf]
    %v4802 = vld [vmem:[#allocation18 + $0x30] sm:$0xf]
    %v4803 = vld [vmem:[#allocation18 + $0x34] sm:$0xf]
    %v4804 = vld [vmem:[#allocation18 + $0x38] sm:$0xf]
    %v4805 = vld [vmem:[#allocation18 + $0x3c] sm:$0xf]
    %v4806 = vld [vmem:[#allocation18 + $0x40] sm:$0xf]
    %v4807 = vld [vmem:[#allocation18 + $0x44] sm:$0xf]
    %v4808 = vld [vmem:[#allocation18 + $0x48] sm:$0xf]
    %v4809 = vld [vmem:[#allocation18 + $0x4c] sm:$0xf]
    %v4810 = vld [vmem:[#allocation18 + $0x50] sm:$0xf]
    %v4811 = vld [vmem:[#allocation18 + $0x54] sm:$0xf]
    %v4812 = vld [vmem:[#allocation18 + $0x58] sm:$0xf]
    %v4813 = vld [vmem:[#allocation18 + $0x5c] sm:$0xf]
    %v4814 = vld [vmem:[#allocation18 + $0x60] sm:$0xf]
    %v4815 = vld [vmem:[#allocation18 + $0x64] sm:$0xf]
    %v4816 = vld [vmem:[#allocation18 + $0x68] sm:$0xf]
    %v4817 = vld [vmem:[#allocation18 + $0x6c] sm:$0xf]
    %v4818 = vld [vmem:[#allocation18 + $0x70] sm:$0xf]
    %v4819 = vld [vmem:[#allocation18 + $0x74] sm:$0xf]
    %v4820 = vld [vmem:[#allocation18 + $0x78] sm:$0xf]
    %v4821 = vld [vmem:[#allocation18 + $0x7c] sm:$0xf]
    %v4822 = vld [vmem:[#allocation18 + $0x80] sm:$0xf]
    %v4823 = vld [vmem:[#allocation18 + $0x84] sm:$0xf]
    %v4824 = vld [vmem:[#allocation18 + $0x88] sm:$0xf]
    %v4825 = vld [vmem:[#allocation18 + $0x8c] sm:$0xf]
    %v4826 = vld [vmem:[#allocation18 + $0x90] sm:$0xf]
    %v4827 = vld [vmem:[#allocation18 + $0x94] sm:$0xf]
    %v4828 = vld [vmem:[#allocation18 + $0x98] sm:$0xf]
    %v4829 = vld [vmem:[#allocation18 + $0x9c] sm:$0xf]
    %v4830 = vld [vmem:[#allocation18 + $0xa0] sm:$0xf]
    %v4831 = vld [vmem:[#allocation18 + $0xa4] sm:$0xf]
    %v4832 = vld [vmem:[#allocation18 + $0xa8] sm:$0xf]
    %v4833 = vld [vmem:[#allocation18 + $0xac] sm:$0xf]
    %v4834 = vld [vmem:[#allocation18 + $0xb0] sm:$0xf]
    %v4835 = vld [vmem:[#allocation18 + $0xb4] sm:$0xf]
    %v4836 = vld [vmem:[#allocation18 + $0xb8] sm:$0xf]
    %v4837 = vld [vmem:[#allocation18 + $0xbc] sm:$0xf]
    %v4838 = vld [vmem:[#allocation18 + $0xc0] sm:$0xf]
    %v4839 = vld [vmem:[#allocation18 + $0xc4] sm:$0xf]
    %v4840 = vld [vmem:[#allocation18 + $0xc8] sm:$0xf]
    %v4841 = vld [vmem:[#allocation18 + $0xcc] sm:$0xf]
    %v4842 = vld [vmem:[#allocation18 + $0xd0] sm:$0xf]
    %v4843 = vld [vmem:[#allocation18 + $0xd4] sm:$0xf]
    %v4844 = vld [vmem:[#allocation18 + $0xd8] sm:$0xf]
    %v4845 = vld [vmem:[#allocation18 + $0xdc] sm:$0xf]
    %v4846 = vld [vmem:[#allocation18 + $0xe0] sm:$0xf]
    %v4847 = vld [vmem:[#allocation18 + $0xe4] sm:$0xf]
    %v4848 = vld [vmem:[#allocation18 + $0xe8] sm:$0xf]
    %v4849 = vld [vmem:[#allocation18 + $0xec] sm:$0xf]
    %v4850 = vld [vmem:[#allocation18 + $0xf0] sm:$0xf]
    %v4851 = vld [vmem:[#allocation18 + $0xf4] sm:$0xf]
    %v4852 = vld [vmem:[#allocation18 + $0xf8] sm:$0xf]
    %v4853 = vld [vmem:[#allocation18 + $0xfc] sm:$0xf]
    %v4918 = vunpack.c.l.b16 %v4790
    %v4919 = vunpack.c.l.b16 %v4791
    %v4920 = vunpack.c.l.b16 %v4792
    %v4921 = vunpack.c.l.b16 %v4793
    %v4922 = vunpack.c.l.b16 %v4794
    %v4923 = vunpack.c.l.b16 %v4795
    %v4924 = vunpack.c.l.b16 %v4796
    %v4925 = vunpack.c.l.b16 %v4797
    %v4926 = vunpack.c.l.b16 %v4798
    %v4927 = vunpack.c.l.b16 %v4799
    %v4928 = vunpack.c.l.b16 %v4800
    %v4929 = vunpack.c.l.b16 %v4801
    %v4930 = vunpack.c.l.b16 %v4802
    %v4931 = vunpack.c.l.b16 %v4803
    %v4932 = vunpack.c.l.b16 %v4804
    %v4933 = vunpack.c.l.b16 %v4805
    %v4934 = vunpack.c.l.b16 %v4806
    %v4935 = vunpack.c.l.b16 %v4807
    %v4936 = vunpack.c.l.b16 %v4808
    %v4937 = vunpack.c.l.b16 %v4809
    %v4938 = vunpack.c.l.b16 %v4810
    %v4939 = vunpack.c.l.b16 %v4811
    %v4940 = vunpack.c.l.b16 %v4812
    %v4941 = vunpack.c.l.b16 %v4813
    %v4942 = vunpack.c.l.b16 %v4814
    %v4943 = vunpack.c.l.b16 %v4815
    %v4944 = vunpack.c.l.b16 %v4816
    %v4945 = vunpack.c.l.b16 %v4817
    %v4946 = vunpack.c.l.b16 %v4818
    %v4947 = vunpack.c.l.b16 %v4819
    %v4948 = vunpack.c.l.b16 %v4820
    %v4949 = vunpack.c.l.b16 %v4821
    %v4950 = vunpack.c.l.b16 %v4822
    %v4951 = vunpack.c.l.b16 %v4823
    %v4952 = vunpack.c.l.b16 %v4824
    %v4953 = vunpack.c.l.b16 %v4825
    %v4954 = vunpack.c.l.b16 %v4826
    %v4955 = vunpack.c.l.b16 %v4827
    %v4956 = vunpack.c.l.b16 %v4828
    %v4957 = vunpack.c.l.b16 %v4829
    %v4958 = vunpack.c.l.b16 %v4830
    %v4959 = vunpack.c.l.b16 %v4831
    %v4960 = vunpack.c.l.b16 %v4832
    %v4961 = vunpack.c.l.b16 %v4833
    %v4962 = vunpack.c.l.b16 %v4834
    %v4963 = vunpack.c.l.b16 %v4835
    %v4964 = vunpack.c.l.b16 %v4836
    %v4965 = vunpack.c.l.b16 %v4837
    %v4966 = vunpack.c.l.b16 %v4838
    %v4967 = vunpack.c.l.b16 %v4839
    %v4968 = vunpack.c.l.b16 %v4840
    %v4969 = vunpack.c.l.b16 %v4841
    %v4970 = vunpack.c.l.b16 %v4842
    %v4971 = vunpack.c.l.b16 %v4843
    %v4972 = vunpack.c.l.b16 %v4844
    %v4973 = vunpack.c.l.b16 %v4845
    %v4974 = vunpack.c.l.b16 %v4846
    %v4975 = vunpack.c.l.b16 %v4847
    %v4976 = vunpack.c.l.b16 %v4848
    %v4977 = vunpack.c.l.b16 %v4849
    %v4978 = vunpack.c.l.b16 %v4850
    %v4979 = vunpack.c.l.b16 %v4851
    %v4980 = vunpack.c.l.b16 %v4852
    %v4981 = vunpack.c.l.b16 %v4853
    %v4982 = vpack.c.b16 %v4919, %v4918
    %v4983 = vpack.c.b16 %v4921, %v4920
    %v4984 = vpack.c.b16 %v4923, %v4922
    %v4985 = vpack.c.b16 %v4925, %v4924
    %v4986 = vpack.c.b16 %v4927, %v4926
    %v4987 = vpack.c.b16 %v4929, %v4928
    %v4988 = vpack.c.b16 %v4931, %v4930
    %v4989 = vpack.c.b16 %v4933, %v4932
    %v4990 = vpack.c.b16 %v4935, %v4934
    %v4991 = vpack.c.b16 %v4937, %v4936
    %v4992 = vpack.c.b16 %v4939, %v4938
    %v4993 = vpack.c.b16 %v4941, %v4940
    %v4994 = vpack.c.b16 %v4943, %v4942
    %v4995 = vpack.c.b16 %v4945, %v4944
    %v4996 = vpack.c.b16 %v4947, %v4946
    %v4997 = vpack.c.b16 %v4949, %v4948
    %v4998 = vpack.c.b16 %v4951, %v4950
    %v4999 = vpack.c.b16 %v4953, %v4952
    %v5000 = vpack.c.b16 %v4955, %v4954
    %v5001 = vpack.c.b16 %v4957, %v4956
    %v5002 = vpack.c.b16 %v4959, %v4958
    %v5003 = vpack.c.b16 %v4961, %v4960
    %v5004 = vpack.c.b16 %v4963, %v4962
    %v5005 = vpack.c.b16 %v4965, %v4964
    %v5006 = vpack.c.b16 %v4967, %v4966
    %v5007 = vpack.c.b16 %v4969, %v4968
    %v5008 = vpack.c.b16 %v4971, %v4970
    %v5009 = vpack.c.b16 %v4973, %v4972
    %v5010 = vpack.c.b16 %v4975, %v4974
    %v5011 = vpack.c.b16 %v4977, %v4976
    %v5012 = vpack.c.b16 %v4979, %v4978
    %v5013 = vpack.c.b16 %v4981, %v4980
    %5046 = vmatprep.subr.bf16.mxu0 0
    %5047 = vmatpush1.bf16.msra.mxu0 %v4982
    %5048 = vmatprep.subr.bf16.mxu0 0
    %5049 = vmatpush1.bf16.msra.mxu0 %v4983
    %5050 = vmatprep.subr.bf16.mxu0 0
    %5051 = vmatpush1.bf16.msra.mxu0 %v4984
    %5052 = vmatprep.subr.bf16.mxu0 0
    %5053 = vmatpush1.bf16.msra.mxu0 %v4985
    %5054 = vmatprep.subr.bf16.mxu0 0
    %5055 = vmatpush1.bf16.msra.mxu0 %v4986
    %5056 = vmatprep.subr.bf16.mxu0 0
    %5057 = vmatpush1.bf16.msra.mxu0 %v4987
    %5058 = vmatprep.subr.bf16.mxu0 0
    %5059 = vmatpush1.bf16.msra.mxu0 %v4988
    %5060 = vmatprep.subr.bf16.mxu0 0
    %5061 = vmatpush1.bf16.msra.mxu0 %v4989
    %5062 = vmatprep.subr.bf16.mxu0 0
    %5063 = vmatpush1.bf16.msra.mxu0 %v4990
    %5064 = vmatprep.subr.bf16.mxu0 0
    %5065 = vmatpush1.bf16.msra.mxu0 %v4991
    %5066 = vmatprep.subr.bf16.mxu0 0
    %5067 = vmatpush1.bf16.msra.mxu0 %v4992
    %5068 = vmatprep.subr.bf16.mxu0 0
    %5069 = vmatpush1.bf16.msra.mxu0 %v4993
    %5070 = vmatprep.subr.bf16.mxu0 0
    %5071 = vmatpush1.bf16.msra.mxu0 %v4994
    %5072 = vmatprep.subr.bf16.mxu0 0
    %5073 = vmatpush1.bf16.msra.mxu0 %v4995
    %5074 = vmatprep.subr.bf16.mxu0 0
    %5075 = vmatpush1.bf16.msra.mxu0 %v4996
    %5076 = vmatprep.subr.bf16.mxu0 0
    %5077 = vmatpush1.bf16.msra.mxu0 %v4997
    %5078 = vmatprep.mubr.bf16.mxu0 %v4787
    %5079 = vmatmul.mubr.bf16.gmra.mrb[0].mxu0 %v4786
    %v5080 = vpop.f32.mrb[0].mxu0
    %v5081 = vadd.f32 0.0, %v5080
    %v5082 = vpop.f32.mrb[0].mxu0
    %v5083 = vpop.f32.mrb[0].mxu0
    %v5084 = vpop.f32.mrb[0].mxu0
    %5085 = vdwg.mxu0
    %5086 = vmatprep.subr.bf16.mxu0 0
    %5087 = vmatpush1.bf16.msra.mxu0 %v4998
    %5088 = vmatprep.subr.bf16.mxu0 0
    %5089 = vmatpush1.bf16.msra.mxu0 %v4999
    %5090 = vmatprep.subr.bf16.mxu0 0
    %5091 = vmatpush1.bf16.msra.mxu0 %v5000
    %5092 = vmatprep.subr.bf16.mxu0 0
    %5093 = vmatpush1.bf16.msra.mxu0 %v5001
    %5094 = vmatprep.subr.bf16.mxu0 0
    %5095 = vmatpush1.bf16.msra.mxu0 %v5002
    %5096 = vmatprep.subr.bf16.mxu0 0
    %5097 = vmatpush1.bf16.msra.mxu0 %v5003
    %5098 = vmatprep.subr.bf16.mxu0 0
    %5099 = vmatpush1.bf16.msra.mxu0 %v5004
    %5100 = vmatprep.subr.bf16.mxu0 0
    %5101 = vmatpush1.bf16.msra.mxu0 %v5005
    %5102 = vmatprep.subr.bf16.mxu0 0
    %5103 = vmatpush1.bf16.msra.mxu0 %v5006
    %5104 = vmatprep.subr.bf16.mxu0 0
    %5105 = vmatpush1.bf16.msra.mxu0 %v5007
    %5106 = vmatprep.subr.bf16.mxu0 0
    %5107 = vmatpush1.bf16.msra.mxu0 %v5008
    %5108 = vmatprep.subr.bf16.mxu0 0
    %5109 = vmatpush1.bf16.msra.mxu0 %v5009
    %5110 = vmatprep.subr.bf16.mxu0 0
    %5111 = vmatpush1.bf16.msra.mxu0 %v5010
    %5112 = vmatprep.subr.bf16.mxu0 0
    %5113 = vmatpush1.bf16.msra.mxu0 %v5011
    %5114 = vmatprep.subr.bf16.mxu0 0
    %5115 = vmatpush1.bf16.msra.mxu0 %v5012
    %5116 = vmatprep.subr.bf16.mxu0 0
    %5117 = vmatpush1.bf16.msra.mxu0 %v5013
    %5118 = vmatprep.mubr.bf16.mxu0 %v4789
    %5119 = vmatmul.mubr.bf16.gmra.mrb[0].mxu0 %v4788
    %v5120 = vpop.f32.mrb[0].mxu0
    %v5121 = vadd.f32 %v5081, %v5120
    %v5122 = vpop.f32.mrb[0].mxu0
    %v5123 = vpop.f32.mrb[0].mxu0
    %v5124 = vpop.f32.mrb[0].mxu0
    %5125 = vdwg.mxu0
    %v5126 = vld [vmem:[%s11] sm:$0x1]
    %v5128 = vlaneseq
    %v5129 = vshrl.u32 %v5128, 7
    %v5130 = vsub.s32 0, %v5129
    %v5131 = vrot.slane %v5126, %v5130
    %v5133 = vmul.f32 %v5121, %v5131
    %v5134 = vld [vmem:[%s12] sm:$0x1]
    %v5136 = vlaneseq
    %v5137 = vshrl.u32 %v5136, 7
    %v5138 = vsub.s32 0, %v5137
    %v5139 = vrot.slane %v5134, %v5138
    %v5141 = vadd.f32 %v5133, %v5139
    %v5142 = vmax.f32 %v5141, 0.0
    %v5143 = vpack.c.bf16 %v5142, %v5142
    %v5144 = vld [vmem:[%s13] sm:$0xf]
    %v5145 = vld [vmem:[%s13 + $0x4] sm:$0xf]
    %v5146 = vld [vmem:[%s13 + $0x8] sm:$0xf]
    %v5147 = vld [vmem:[%s13 + $0xc] sm:$0xf]
    %v5148 = vld [vmem:[%s13 + $0x10] sm:$0xf]
    %v5149 = vld [vmem:[%s13 + $0x14] sm:$0xf]
    %v5150 = vld [vmem:[%s13 + $0x18] sm:$0xf]
    %v5151 = vld [vmem:[%s13 + $0x1c] sm:$0xf]
    %v5152 = vld [vmem:[%s13 + $0x20] sm:$0xf]
    %v5153 = vld [vmem:[%s13 + $0x24] sm:$0xf]
    %v5154 = vld [vmem:[%s13 + $0x28] sm:$0xf]
    %v5155 = vld [vmem:[%s13 + $0x2c] sm:$0xf]
    %v5156 = vld [vmem:[%s13 + $0x30] sm:$0xf]
    %v5157 = vld [vmem:[%s13 + $0x34] sm:$0xf]
    %v5158 = vld [vmem:[%s13 + $0x38] sm:$0xf]
    %v5159 = vld [vmem:[%s13 + $0x3c] sm:$0xf]
    %v5160 = vld [vmem:[#allocation19] sm:$0x1]
    %v5162 = vlaneseq
    %v5163 = vshrl.u32 %v5162, 7
    %v5164 = vsub.s32 0, %v5163
    %v5165 = vrot.slane %v5160, %v5164
    %v5183 = vunpack.c.l.b16 %v5144
    %v5184 = vunpack.c.l.b16 %v5145
    %v5185 = vunpack.c.l.b16 %v5146
    %v5186 = vunpack.c.l.b16 %v5147
    %v5187 = vunpack.c.l.b16 %v5148
    %v5188 = vunpack.c.l.b16 %v5149
    %v5189 = vunpack.c.l.b16 %v5150
    %v5190 = vunpack.c.l.b16 %v5151
    %v5191 = vunpack.c.l.b16 %v5152
    %v5192 = vunpack.c.l.b16 %v5153
    %v5193 = vunpack.c.l.b16 %v5154
    %v5194 = vunpack.c.l.b16 %v5155
    %v5195 = vunpack.c.l.b16 %v5156
    %v5196 = vunpack.c.l.b16 %v5157
    %v5197 = vunpack.c.l.b16 %v5158
    %v5198 = vunpack.c.l.b16 %v5159
    %v5199 = vpack.c.b16 %v5184, %v5183
    %v5200 = vpack.c.b16 %v5186, %v5185
    %v5201 = vpack.c.b16 %v5188, %v5187
    %v5202 = vpack.c.b16 %v5190, %v5189
    %v5203 = vpack.c.b16 %v5192, %v5191
    %v5204 = vpack.c.b16 %v5194, %v5193
    %v5205 = vpack.c.b16 %v5196, %v5195
    %v5206 = vpack.c.b16 %v5198, %v5197
    %5215 = vmatprep.subr.bf16.mxu0 0
    %5216 = vmatpush1.bf16.msra.mxu0 %v5199
    %5217 = vmatprep.subr.bf16.mxu0 0
    %5218 = vmatpush1.bf16.msra.mxu0 %v5200
    %5219 = vmatprep.subr.bf16.mxu0 0
    %5220 = vmatpush1.bf16.msra.mxu0 %v5201
    %5221 = vmatprep.subr.bf16.mxu0 0
    %5222 = vmatpush1.bf16.msra.mxu0 %v5202
    %5223 = vmatprep.subr.bf16.mxu0 0
    %5224 = vmatpush1.bf16.msra.mxu0 %v5203
    %5225 = vmatprep.subr.bf16.mxu0 0
    %5226 = vmatpush1.bf16.msra.mxu0 %v5204
    %5227 = vmatprep.subr.bf16.mxu0 0
    %5228 = vmatpush1.bf16.msra.mxu0 %v5205
    %5229 = vmatprep.subr.bf16.mxu0 0
    %5230 = vmatpush1.bf16.msra.mxu0 %v5206
    %5231 = vmatprep.subr.bf16.mxu0 0
    %5232 = vmatpush1.bf16.msra.mxu0 0
    %5233 = vmatprep.subr.bf16.mxu0 0
    %5234 = vmatpush1.bf16.msra.mxu0 0
    %5235 = vmatprep.subr.bf16.mxu0 0
    %5236 = vmatpush1.bf16.msra.mxu0 0
    %5237 = vmatprep.subr.bf16.mxu0 0
    %5238 = vmatpush1.bf16.msra.mxu0 0
    %5239 = vmatprep.subr.bf16.mxu0 0
    %5240 = vmatpush1.bf16.msra.mxu0 0
    %5241 = vmatprep.subr.bf16.mxu0 0
    %5242 = vmatpush1.bf16.msra.mxu0 0
    %5243 = vmatprep.subr.bf16.mxu0 0
    %5244 = vmatpush1.bf16.msra.mxu0 0
    %5245 = vmatprep.subr.bf16.mxu0 0
    %5246 = vmatpush1.bf16.msra.mxu0 0
    %5247 = vmatprep.mubr.bf16.mxu0 0
    %5248 = vmatmul.mubr.bf16.gmra.mrb[0].mxu0 %v5143
    %v5249 = vpop.f32.mrb[0].mxu0
    %v5250 = vadd.f32 %v5165, %v5249
    %v5251 = vpop.f32.mrb[0].mxu0
    %v5252 = vpop.f32.mrb[0].mxu0
    %v5253 = vpop.f32.mrb[0].mxu0
    %5254 = vdwg.mxu0
    %v5255 = vmax.f32 %v5250, 0.0
    %v5256 = vpack.c.bf16 %v5255, %v5255
    %v5257 = vld [vmem:[%s15] sm:$0xf]
    %v5258 = vld [vmem:[%s15 + $0x4] sm:$0xf]
    %v5259 = vld [vmem:[%s15 + $0x8] sm:$0xf]
    %v5260 = vld [vmem:[%s15 + $0xc] sm:$0xf]
    %v5261 = vld [vmem:[%s15 + $0x10] sm:$0xf]
    %v5262 = vld [vmem:[%s15 + $0x14] sm:$0xf]
    %v5263 = vld [vmem:[%s15 + $0x18] sm:$0xf]
    %v5264 = vld [vmem:[%s15 + $0x1c] sm:$0xf]
    %v5265 = vld [vmem:[#allocation21] sm:$0x1]
    %v5267 = vlaneseq
    %v5268 = vshrl.u32 %v5267, 7
    %v5269 = vsub.s32 0, %v5268
    %v5270 = vrot.slane %v5265, %v5269
    %v5280 = vunpack.c.l.b16 %v5257
    %v5281 = vunpack.c.l.b16 %v5258
    %v5282 = vunpack.c.l.b16 %v5259
    %v5283 = vunpack.c.l.b16 %v5260
    %v5284 = vunpack.c.l.b16 %v5261
    %v5285 = vunpack.c.l.b16 %v5262
    %v5286 = vunpack.c.l.b16 %v5263
    %v5287 = vunpack.c.l.b16 %v5264
    %v5288 = vpack.c.b16 %v5281, %v5280
    %v5289 = vpack.c.b16 %v5283, %v5282
    %v5290 = vpack.c.b16 %v5285, %v5284
    %v5291 = vpack.c.b16 %v5287, %v5286
    %vm5296 = vcmask 523264
    %v5298 = vsel %vm5296, %v5256, 0
    %5300 = vmatprep.subr.bf16.mxu0 0
    %5301 = vmatpush1.bf16.msra.mxu0 %v5288
    %5302 = vmatprep.subr.bf16.mxu0 0
    %5303 = vmatpush1.bf16.msra.mxu0 %v5289
    %5304 = vmatprep.subr.bf16.mxu0 0
    %5305 = vmatpush1.bf16.msra.mxu0 %v5290
    %5306 = vmatprep.subr.bf16.mxu0 0
    %5307 = vmatpush1.bf16.msra.mxu0 %v5291
    %5308 = vmatprep.subr.bf16.mxu0 0
    %5309 = vmatpush1.bf16.msra.mxu0 0
    %5310 = vmatprep.subr.bf16.mxu0 0
    %5311 = vmatpush1.bf16.msra.mxu0 0
    %5312 = vmatprep.subr.bf16.mxu0 0
    %5313 = vmatpush1.bf16.msra.mxu0 0
    %5314 = vmatprep.subr.bf16.mxu0 0
    %5315 = vmatpush1.bf16.msra.mxu0 0
    %5316 = vmatprep.subr.bf16.mxu0 0
    %5317 = vmatpush1.bf16.msra.mxu0 0
    %5318 = vmatprep.subr.bf16.mxu0 0
    %5319 = vmatpush1.bf16.msra.mxu0 0
    %5320 = vmatprep.subr.bf16.mxu0 0
    %5321 = vmatpush1.bf16.msra.mxu0 0
    %5322 = vmatprep.subr.bf16.mxu0 0
    %5323 = vmatpush1.bf16.msra.mxu0 0
    %5324 = vmatprep.subr.bf16.mxu0 0
    %5325 = vmatpush1.bf16.msra.mxu0 0
    %5326 = vmatprep.subr.bf16.mxu0 0
    %5327 = vmatpush1.bf16.msra.mxu0 0
    %5328 = vmatprep.subr.bf16.mxu0 0
    %5329 = vmatpush1.bf16.msra.mxu0 0
    %5330 = vmatprep.subr.bf16.mxu0 0
    %5331 = vmatpush1.bf16.msra.mxu0 0
    %5332 = vmatprep.mubr.bf16.mxu0 0
    %5333 = vmatmul.mubr.bf16.gmra.mrb[0].mxu0 %v5298
    %v5334 = vpop.f32.mrb[0].mxu0
    %v5335 = vadd.f32 %v5270, %v5334
    %v5336 = vpop.f32.mrb[0].mxu0
    %v5337 = vpop.f32.mrb[0].mxu0
    %v5338 = vpop.f32.mrb[0].mxu0
    %5339 = vdwg.mxu0
    %5340 = vst [vmem:[#allocation22] sm:$0xff] %v5335
    %v5341 = vlaneseq
    %v5342 = vand.u32 %v5341, 127
    %vm5343 = vcmp.lt.s32.totalorder %v5342, 7
    %v5344 = vsel %vm5343, %v5335, -1e+30
    %5345 = vmax.xlane.f32.xlu0 %v5344
    %v5346 = vpop.xlane.xlu0 %5345
    %v5347 = vsub.f32 %v5335, %v5346
    %v5348 = vmul.f32 %v5347, 1.442695
    %v5349 = vpow.pop %v5348
    %v5350 = vsel %vm5343, %v5349, 0.0
    %5351 = vadd.xlane.f32.xlu0 %v5350
    %v5352 = vpop.xlane.xlu0 %5351
    %v5353 = vrcp.pop %v5352
    %v5354 = vmul.f32 %v5350, %v5353
    %5355 = vst [vmem:[#allocation23] sm:$0xff] %v5354
    // Predicated region
    $region154: #{forward.1} parent=1 // pred_check
      _
    $region155: #{forward.1} parent=1 // pred_check_branch
      %5357 = sbr.rel (0) target = $region157
    $region156: #{forward.1} parent=1 // pred_region
      %s5359 = ssub.s32 128, 128
      %5360 = vsyncadd [#allocation6], %s5359
      %s5362 = sshll.u32 [#allocation22], 4
      %s5363 = int_to_ptr.vmem [resolvable:$true] %s5362
      %5365 = dma.vmem_to_hbm [thread:$0]  %s5363, 128, %s17, [#allocation6]
    $region157: #{forward.1} parent=1 // pred_fallthru
      _
    // Predicated region
    $region158: #{forward.1} parent=1 // pred_check
      _
    $region159: #{forward.1} parent=1 // pred_check_branch
      %5367 = sbr.rel (0) target = $region161
    $region160: #{forward.1} parent=1 // pred_region
      %s5369 = ssub.s32 128, 128
      %5370 = vsyncadd [#allocation24], %s5369
      %s5372 = sshll.u32 [#allocation23], 4
      %s5373 = int_to_ptr.vmem [resolvable:$true] %s5372
      %5375 = dma.vmem_to_hbm [thread:$0]  %s5373, 128, %s18, [#allocation24]
    $region161: #{forward.1} parent=1 // pred_fallthru
      _
    // Predicated region
    $region162: #{forward.1} parent=1 // pred_check
      _
    $region163: #{forward.1} parent=1 // pred_check_branch
      %5377 = sbr.rel (0) target = $region165
    $region164: #{forward.1} parent=1 // pred_region
      %5378 = dma.done [#allocation6], 128
    $region165: #{forward.1} parent=1 // pred_fallthru
      _
    // Predicated region
    $region166: #{forward.1} parent=1 // pred_check
      _
    $region167: #{forward.1} parent=1 // pred_check_branch
      %5380 = sbr.rel (0) target = $region169
    $region168: #{forward.1} parent=1 // pred_region
      %5381 = dma.done [#allocation24], 128
    $region169: #{forward.1} parent=1 // pred_fallthru
      _
    %5382 = vsyncpa [#allocation5], 1
    %5383 = vsyncpa [#allocation8], 1
    %5384 = vsyncpa [#allocation11], 1
    %5385 = vsyncpa [#allocation14], 1
    %5386 = vsyncpa [#allocation17], 1
    %5387 = vsyncpa [#allocation20], 1
    %5388 = vsyncpa [#allocation6], 1
    %5389 = vsyncpa [#allocation24], 1

</llo_original>
